<compile_context>
chip_gen: v7x
topology: tpu7x:2x2x1
jax: 0.10.0
libtpu: 0.0.40
codegen_flags: <defaults>
</compile_context>

<pallas_src>
import functools
import math

import jax
import jax.numpy as jnp
from jax.experimental import pallas as pl
from jax.experimental.pallas import tpu as pltpu

MASOANET_DIM = 128
EXPANSION = 4
HIDDEN = MASOANET_DIM * EXPANSION          # 512
NUM_BLOCKS = 6                              # 6 MasoaBlocks
NUM_LN = NUM_BLOCKS - 1                     # 5 LayerNorms between them
LN_EPS = 1e-5

HIDDEN_CHUNK = 256                          # matches v6e/v7x 256-wide MXU tile (2x128 on v5e)
NUM_HIDDEN_CHUNKS = HIDDEN // HIDDEN_CHUNK  # 2

_INV_SQRT2 = 1.0 / math.sqrt(2.0)


def _round_up(x, m):
    return (x + m - 1) // m * m


def _gelu_f32(x, *, exact):
    if exact:
        # nn.GELU() default: exact erf-based GELU (VALU polynomial path).
        return 0.5 * x * (1.0 + jax.lax.erf(x * _INV_SQRT2))
    # tanh approximation: transcendental lowers to the EUP (separate bundle slot).
    return jax.nn.gelu(x, approximate=True)


def masoa_kernel(x_ref, w1_ref, b1_ref, w2_ref, b2_ref, g_ref, be_ref, o_ref,
                 *, exact_gelu):
    """Processes one (tm, C) tile of tokens through the whole network."""
    h = x_ref[...].astype(jnp.float32)  # (tm, C) f32 hidden state

    for i in range(NUM_BLOCKS):
        # --- MasoaBlock: Linear(C->4C) -> GELU -> Dropout(identity) -> Linear(4C->C) + residual
        h_bf = h.astype(jnp.bfloat16)   # bf16 MXU input, cast once per block

        # matmul1 + GELU in 256-wide hidden chunks: limits the live f32 GELU
        # intermediate to (tm, 256) and hits MXU-friendly N.  GELU outputs are
        # staged into one (tm, 512) bf16 value for a single K=512 matmul2 so the
        # MXU accumulates over K internally.
        y_chunks = []
        for c in range(NUM_HIDDEN_CHUNKS):
            c0, c1 = c * HIDDEN_CHUNK, (c + 1) * HIDDEN_CHUNK
            y = jnp.dot(h_bf, w1_ref[i, :, c0:c1],
                        preferred_element_type=jnp.float32)       # (tm, HC) f32
            y = y + b1_ref[i, :, c0:c1].astype(jnp.float32)
            y = _gelu_f32(y, exact=exact_gelu)
            y_chunks.append(y.astype(jnp.bfloat16))
        y_all = jnp.concatenate(y_chunks, axis=-1)                # (tm, 512) bf16

        z = jnp.dot(y_all, w2_ref[i], preferred_element_type=jnp.float32)  # (tm, C) f32

        # bias + residual, kept in f32 straight into LayerNorm (no bf16 round-trip).
        h = z + b2_ref[i].astype(jnp.float32) + h

        # --- LayerNorm between blocks (not after the last block).
        # Fused stats: var = E[x^2] - mu^2 (one reduction pass).
        if i < NUM_LN:
            mu = jnp.mean(h, axis=-1, keepdims=True)
            ms = jnp.mean(h * h, axis=-1, keepdims=True)
            var = ms - mu * mu
            xhat = (h - mu) * jax.lax.rsqrt(var + LN_EPS)
            h = (xhat * g_ref[i].astype(jnp.float32)
                 + be_ref[i].astype(jnp.float32))

    o_ref[...] = h.astype(o_ref.dtype)


@functools.partial(jax.jit, static_argnames=("tm", "exact_gelu"))
def masoa_net(x, params, *, tm=None, exact_gelu=False):
    """x: (B, S, C) bf16. params: dict of stacked weights (see init_params)."""
    B, S, C = x.shape
    assert C == MASOANET_DIM
    M = B * S
    x2 = x.reshape(M, C)

    # --- token-tile selection: as large as possible (amortizes the ~0.35us
    # per-grid-step overhead) but keeping >=2 grid steps for v7x's 2 TensorCores;
    # rounded to 16 for bf16 (16,128) sublane packing.  Pad M instead of asserting.
    if tm is None:
        tm = min(1024, _round_up(max(pl.cdiv(M, 2), 16), 16))
    tm = min(1024, max(16, _round_up(tm, 16)))
    M_pad = _round_up(max(M, tm), tm)
    if M_pad != M:
        x2 = jnp.pad(x2, ((0, M_pad - M), (0, 0)))

    w1, b1, w2, b2, g, be = (params["w1"], params["b1"], params["w2"],
                             params["b2"], params["ln_g"], params["ln_b"])

    # Constant operands: grid-invariant index maps -> Pallas DMAs them once and
    # keeps them resident in VMEM across all grid steps (~1.6 MiB total).
    full = lambda shape: pl.BlockSpec(shape, lambda i: (0,) * len(shape))

    weight_bytes = sum(int(p.size) * p.dtype.itemsize for p in (w1, b1, w2, b2, g, be))
    cost = pl.CostEstimate(
        flops=4 * M_pad * NUM_BLOCKS * C * HIDDEN,                     # 2 matmuls/block
        transcendentals=M_pad * NUM_BLOCKS * HIDDEN + M_pad * NUM_LN,  # gelu + rsqrt
        bytes_accessed=2 * M_pad * C * 2 + weight_bytes,
    )

    kernel = functools.partial(masoa_kernel, exact_gelu=exact_gelu)

    out = pl.pallas_call(
        kernel,
        out_shape=jax.ShapeDtypeStruct((M_pad, C), jnp.bfloat16),
        grid_spec=pltpu.PrefetchScalarGridSpec(
            num_scalar_prefetch=0,
            grid=(M_pad // tm,),
            in_specs=[
                pl.BlockSpec((tm, C), lambda i: (i, 0)),       # x tile
                full((NUM_BLOCKS, C, HIDDEN)),                  # w1 stack
                full((NUM_BLOCKS, 1, HIDDEN)),                  # b1 stack
                full((NUM_BLOCKS, HIDDEN, C)),                  # w2 stack
                full((NUM_BLOCKS, 1, C)),                       # b2 stack
                full((NUM_LN, 1, C)),                           # LN gamma stack
                full((NUM_LN, 1, C)),                           # LN beta stack
            ],
            out_specs=pl.BlockSpec((tm, C), lambda i: (i, 0)),
        ),
        compiler_params=pltpu.CompilerParams(
            dimension_semantics=("parallel",),
            vmem_limit_bytes=32 * 1024 * 1024,   # per-step use <6 MiB even at tm=1024
        ),
        cost_estimate=cost,
    )(x2, w1, b1, w2, b2, g, be)

    if M_pad != M:
        out = out[:M]
    return out.reshape(B, S, C)


def init_params(key, dim=MASOANET_DIM, expansion=EXPANSION):
    """Deterministic init mimicking nn.Linear default (U(-1/sqrt(fan_in), +)), bf16 weights."""
    hidden = dim * expansion
    keys = jax.random.split(key, 4 * NUM_BLOCKS)

    def lin_init(kw, kb, fan_in, shape_w, shape_b):
        bound = 1.0 / math.sqrt(fan_in)
        w = jax.random.uniform(kw, shape_w, jnp.float32, -bound, bound)
        b = jax.random.uniform(kb, shape_b, jnp.float32, -bound, bound)
        return w.astype(jnp.bfloat16), b.astype(jnp.bfloat16)

    w1s, b1s, w2s, b2s = [], [], [], []
    for i in range(NUM_BLOCKS):
        k0, k1, k2, k3 = keys[4 * i: 4 * i + 4]
        # Stored transposed vs torch: (in, out) so the kernel does x @ W directly.
        w1, b1 = lin_init(k0, k1, dim, (dim, hidden), (1, hidden))
        w2, b2 = lin_init(k2, k3, hidden, (hidden, dim), (1, dim))
        w1s.append(w1); b1s.append(b1); w2s.append(w2); b2s.append(b2)

    params = {
        "w1": jnp.stack(w1s),                      # (6, C, 4C) bf16
        "b1": jnp.stack(b1s),                      # (6, 1, 4C) bf16
        "w2": jnp.stack(w2s),                      # (6, 4C, C) bf16
        "b2": jnp.stack(b2s),                      # (6, 1, C)  bf16
        "ln_g": jnp.ones((NUM_LN, 1, dim), jnp.float32),   # LayerNorm default affine
        "ln_b": jnp.zeros((NUM_LN, 1, dim), jnp.float32),
    }
    return params


if __name__ == "__main__":
    key = jax.random.PRNGKey(0)
    kx, kp = jax.random.split(key)

    B, S, C = 2, 8, MASOANET_DIM
    x = jax.random.normal(kx, (B, S, C), jnp.float32).astype(jnp.bfloat16)
    params = init_params(kp)

    y = masoa_net(x, params)
    jax.block_until_ready(y)
    assert y.shape == (B, S, C) and y.dtype == jnp.bfloat16
    print("KERNEL_OK")
</pallas_src>

<mosaic_0001>
module attributes {stable_mosaic.version = 11 : i64} {
  func.func @masoa_kernel(%arg0: i32, %arg1: memref<16x128xbf16, #tpu.memory_space<vmem>>, %arg2: memref<6x128x512xbf16, #tpu.memory_space<vmem>>, %arg3: memref<6x1x512xbf16, #tpu.memory_space<vmem>>, %arg4: memref<6x512x128xbf16, #tpu.memory_space<vmem>>, %arg5: memref<6x1x128xbf16, #tpu.memory_space<vmem>>, %arg6: memref<5x1x128xf32, #tpu.memory_space<vmem>>, %arg7: memref<5x1x128xf32, #tpu.memory_space<vmem>>, %arg8: memref<16x128xbf16, #tpu.memory_space<vmem>>) attributes {dimension_semantics = [#tpu.dimension_semantics<parallel>], iteration_bounds = array<i64: 1>, scalar_prefetch = 0 : i64, scratch_operands = 0 : i64, tpu.core_type = #tpu.core_type<tc>, window_params = [{transform_indices = @transform_0, window_bounds = array<i64: 16, 128>}, {pipeline_mode = #tpu.pipeline_mode<synchronous>, transform_indices = @transform_1, window_bounds = array<i64: 6, 128, 512>}, {pipeline_mode = #tpu.pipeline_mode<synchronous>, transform_indices = @transform_2, window_bounds = array<i64: 6, 1, 512>}, {pipeline_mode = #tpu.pipeline_mode<synchronous>, transform_indices = @transform_3, window_bounds = array<i64: 6, 512, 128>}, {pipeline_mode = #tpu.pipeline_mode<synchronous>, transform_indices = @transform_4, window_bounds = array<i64: 6, 1, 128>}, {pipeline_mode = #tpu.pipeline_mode<synchronous>, transform_indices = @transform_5, window_bounds = array<i64: 5, 1, 128>}, {pipeline_mode = #tpu.pipeline_mode<synchronous>, transform_indices = @transform_6, window_bounds = array<i64: 5, 1, 128>}, {transform_indices = @transform_7, window_bounds = array<i64: 16, 128>}]} {
    %c0 = arith.constant 0 : index
    %c0_0 = arith.constant 0 : index
    %0 = vector.load %arg1[%c0, %c0_0] : memref<16x128xbf16, #tpu.memory_space<vmem>>, vector<16x128xbf16>
    %1 = arith.extf %0 : vector<16x128xbf16> to vector<16x128xf32>
    %2 = arith.truncf %1 : vector<16x128xf32> to vector<16x128xbf16>
    %c0_1 = arith.constant 0 : index
    %c0_2 = arith.constant 0 : index
    %c0_3 = arith.constant 0 : index
    %3 = vector.load %arg2[%c0_1, %c0_2, %c0_3] : memref<6x128x512xbf16, #tpu.memory_space<vmem>>, vector<1x128x256xbf16>
    %4 = vector.shape_cast %3 : vector<1x128x256xbf16> to vector<128x256xbf16>
    %cst = arith.constant dense<0.000000e+00> : vector<16x256xf32>
    %5 = tpu.matmul %2, %4, %cst {dimension_numbers = #tpu.dot_dimension_numbers<[1], [0], [0], [1], [0, 0, 1, 1], [], []>} : vector<16x128xbf16>, vector<128x256xbf16>, vector<16x256xf32> -> vector<16x256xf32>
    %c0_4 = arith.constant 0 : index
    %c0_5 = arith.constant 0 : index
    %c0_6 = arith.constant 0 : index
    %6 = vector.load %arg3[%c0_4, %c0_5, %c0_6] : memref<6x1x512xbf16, #tpu.memory_space<vmem>>, vector<1x1x256xbf16>
    %7 = vector.shape_cast %6 : vector<1x1x256xbf16> to vector<1x256xbf16>
    %8 = arith.extf %7 : vector<1x256xbf16> to vector<1x256xf32>
    %9 = vector.broadcast %8 : vector<1x256xf32> to vector<16x256xf32>
    %10 = arith.addf %5, %9 : vector<16x256xf32>
    %11 = arith.mulf %10, %10 : vector<16x256xf32>
    %12 = arith.mulf %10, %11 : vector<16x256xf32>
    %cst_7 = arith.constant 4.471500e-02 : f32
    %13 = vector.broadcast %cst_7 : f32 to vector<16x256xf32>
    %14 = arith.mulf %13, %12 : vector<16x256xf32>
    %15 = arith.addf %10, %14 : vector<16x256xf32>
    %cst_8 = arith.constant 0.797884583 : f32
    %16 = vector.broadcast %cst_8 : f32 to vector<16x256xf32>
    %17 = arith.mulf %16, %15 : vector<16x256xf32>
    %18 = math.tanh %17 : vector<16x256xf32>
    %cst_9 = arith.constant 1.000000e+00 : f32
    %19 = vector.broadcast %cst_9 : f32 to vector<16x256xf32>
    %20 = arith.addf %19, %18 : vector<16x256xf32>
    %cst_10 = arith.constant 5.000000e-01 : f32
    %21 = vector.broadcast %cst_10 : f32 to vector<16x256xf32>
    %22 = arith.mulf %21, %20 : vector<16x256xf32>
    %23 = arith.mulf %10, %22 : vector<16x256xf32>
    %24 = arith.truncf %23 : vector<16x256xf32> to vector<16x256xbf16>
    %c0_11 = arith.constant 0 : index
    %c0_12 = arith.constant 0 : index
    %c256 = arith.constant 256 : index
    %25 = vector.load %arg2[%c0_11, %c0_12, %c256] : memref<6x128x512xbf16, #tpu.memory_space<vmem>>, vector<1x128x256xbf16>
    %26 = vector.shape_cast %25 : vector<1x128x256xbf16> to vector<128x256xbf16>
    %cst_13 = arith.constant dense<0.000000e+00> : vector<16x256xf32>
    %27 = tpu.matmul %2, %26, %cst_13 {dimension_numbers = #tpu.dot_dimension_numbers<[1], [0], [0], [1], [0, 0, 1, 1], [], []>} : vector<16x128xbf16>, vector<128x256xbf16>, vector<16x256xf32> -> vector<16x256xf32>
    %c0_14 = arith.constant 0 : index
    %c0_15 = arith.constant 0 : index
    %c256_16 = arith.constant 256 : index
    %28 = vector.load %arg3[%c0_14, %c0_15, %c256_16] : memref<6x1x512xbf16, #tpu.memory_space<vmem>>, vector<1x1x256xbf16>
    %29 = vector.shape_cast %28 : vector<1x1x256xbf16> to vector<1x256xbf16>
    %30 = arith.extf %29 : vector<1x256xbf16> to vector<1x256xf32>
    %31 = vector.broadcast %30 : vector<1x256xf32> to vector<16x256xf32>
    %32 = arith.addf %27, %31 : vector<16x256xf32>
    %33 = arith.mulf %32, %32 : vector<16x256xf32>
    %34 = arith.mulf %32, %33 : vector<16x256xf32>
    %cst_17 = arith.constant 4.471500e-02 : f32
    %35 = vector.broadcast %cst_17 : f32 to vector<16x256xf32>
    %36 = arith.mulf %35, %34 : vector<16x256xf32>
    %37 = arith.addf %32, %36 : vector<16x256xf32>
    %cst_18 = arith.constant 0.797884583 : f32
    %38 = vector.broadcast %cst_18 : f32 to vector<16x256xf32>
    %39 = arith.mulf %38, %37 : vector<16x256xf32>
    %40 = math.tanh %39 : vector<16x256xf32>
    %cst_19 = arith.constant 1.000000e+00 : f32
    %41 = vector.broadcast %cst_19 : f32 to vector<16x256xf32>
    %42 = arith.addf %41, %40 : vector<16x256xf32>
    %cst_20 = arith.constant 5.000000e-01 : f32
    %43 = vector.broadcast %cst_20 : f32 to vector<16x256xf32>
    %44 = arith.mulf %43, %42 : vector<16x256xf32>
    %45 = arith.mulf %32, %44 : vector<16x256xf32>
    %46 = arith.truncf %45 : vector<16x256xf32> to vector<16x256xbf16>
    %47 = tpu.concatenate %24, %46 in 1 : vector<16x256xbf16>, vector<16x256xbf16> -> vector<16x512xbf16>
    %c0_21 = arith.constant 0 : index
    %c0_22 = arith.constant 0 : index
    %c0_23 = arith.constant 0 : index
    %48 = vector.load %arg4[%c0_21, %c0_22, %c0_23] : memref<6x512x128xbf16, #tpu.memory_space<vmem>>, vector<1x512x128xbf16>
    %49 = vector.shape_cast %48 : vector<1x512x128xbf16> to vector<512x128xbf16>
    %cst_24 = arith.constant dense<0.000000e+00> : vector<16x128xf32>
    %50 = tpu.matmul %47, %49, %cst_24 {dimension_numbers = #tpu.dot_dimension_numbers<[1], [0], [0], [1], [0, 0, 1, 1], [], []>} : vector<16x512xbf16>, vector<512x128xbf16>, vector<16x128xf32> -> vector<16x128xf32>
    %c0_25 = arith.constant 0 : index
    %c0_26 = arith.constant 0 : index
    %c0_27 = arith.constant 0 : index
    %51 = vector.load %arg5[%c0_25, %c0_26, %c0_27] : memref<6x1x128xbf16, #tpu.memory_space<vmem>>, vector<1x1x128xbf16>
    %52 = vector.shape_cast %51 : vector<1x1x128xbf16> to vector<1x128xbf16>
    %53 = arith.extf %52 : vector<1x128xbf16> to vector<1x128xf32>
    %54 = vector.broadcast %53 : vector<1x128xf32> to vector<16x128xf32>
    %55 = arith.addf %50, %54 : vector<16x128xf32>
    %56 = arith.addf %55, %1 : vector<16x128xf32>
    %cst_28 = arith.constant dense<0.000000e+00> : vector<16xf32>
    %57 = vector.multi_reduction <add>, %56, %cst_28 [1] : vector<16x128xf32> to vector<16xf32>
    %58 = vector.shape_cast %57 : vector<16xf32> to vector<16x1xf32>
    %cst_29 = arith.constant 1.280000e+02 : f32
    %59 = vector.broadcast %cst_29 : f32 to vector<16x1xf32>
    %60 = arith.divf %58, %59 : vector<16x1xf32>
    %61 = arith.mulf %56, %56 : vector<16x128xf32>
    %cst_30 = arith.constant dense<0.000000e+00> : vector<16xf32>
    %62 = vector.multi_reduction <add>, %61, %cst_30 [1] : vector<16x128xf32> to vector<16xf32>
    %63 = vector.shape_cast %62 : vector<16xf32> to vector<16x1xf32>
    %cst_31 = arith.constant 1.280000e+02 : f32
    %64 = vector.broadcast %cst_31 : f32 to vector<16x1xf32>
    %65 = arith.divf %63, %64 : vector<16x1xf32>
    %66 = arith.mulf %60, %60 : vector<16x1xf32>
    %67 = arith.subf %65, %66 : vector<16x1xf32>
    %68 = vector.broadcast %60 : vector<16x1xf32> to vector<16x128xf32>
    %69 = arith.subf %56, %68 : vector<16x128xf32>
    %cst_32 = arith.constant 9.99999974E-6 : f32
    %70 = vector.broadcast %cst_32 : f32 to vector<16x1xf32>
    %71 = arith.addf %67, %70 : vector<16x1xf32>
    %72 = math.rsqrt %71 : vector<16x1xf32>
    %73 = vector.broadcast %72 : vector<16x1xf32> to vector<16x128xf32>
    %74 = arith.mulf %69, %73 : vector<16x128xf32>
    %c0_33 = arith.constant 0 : index
    %c0_34 = arith.constant 0 : index
    %c0_35 = arith.constant 0 : index
    %75 = vector.load %arg6[%c0_33, %c0_34, %c0_35] : memref<5x1x128xf32, #tpu.memory_space<vmem>>, vector<1x1x128xf32>
    %76 = vector.shape_cast %75 : vector<1x1x128xf32> to vector<1x128xf32>
    %77 = vector.broadcast %76 : vector<1x128xf32> to vector<16x128xf32>
    %78 = arith.mulf %74, %77 : vector<16x128xf32>
    %c0_36 = arith.constant 0 : index
    %c0_37 = arith.constant 0 : index
    %c0_38 = arith.constant 0 : index
    %79 = vector.load %arg7[%c0_36, %c0_37, %c0_38] : memref<5x1x128xf32, #tpu.memory_space<vmem>>, vector<1x1x128xf32>
    %80 = vector.shape_cast %79 : vector<1x1x128xf32> to vector<1x128xf32>
    %81 = vector.broadcast %80 : vector<1x128xf32> to vector<16x128xf32>
    %82 = arith.addf %78, %81 : vector<16x128xf32>
    %83 = arith.truncf %82 : vector<16x128xf32> to vector<16x128xbf16>
    %c1 = arith.constant 1 : index
    %c0_39 = arith.constant 0 : index
    %c0_40 = arith.constant 0 : index
    %84 = vector.load %arg2[%c1, %c0_39, %c0_40] : memref<6x128x512xbf16, #tpu.memory_space<vmem>>, vector<1x128x256xbf16>
    %85 = vector.shape_cast %84 : vector<1x128x256xbf16> to vector<128x256xbf16>
    %cst_41 = arith.constant dense<0.000000e+00> : vector<16x256xf32>
    %86 = tpu.matmul %83, %85, %cst_41 {dimension_numbers = #tpu.dot_dimension_numbers<[1], [0], [0], [1], [0, 0, 1, 1], [], []>} : vector<16x128xbf16>, vector<128x256xbf16>, vector<16x256xf32> -> vector<16x256xf32>
    %c1_42 = arith.constant 1 : index
    %c0_43 = arith.constant 0 : index
    %c0_44 = arith.constant 0 : index
    %87 = vector.load %arg3[%c1_42, %c0_43, %c0_44] : memref<6x1x512xbf16, #tpu.memory_space<vmem>>, vector<1x1x256xbf16>
    %88 = vector.shape_cast %87 : vector<1x1x256xbf16> to vector<1x256xbf16>
    %89 = arith.extf %88 : vector<1x256xbf16> to vector<1x256xf32>
    %90 = vector.broadcast %89 : vector<1x256xf32> to vector<16x256xf32>
    %91 = arith.addf %86, %90 : vector<16x256xf32>
    %92 = arith.mulf %91, %91 : vector<16x256xf32>
    %93 = arith.mulf %91, %92 : vector<16x256xf32>
    %cst_45 = arith.constant 4.471500e-02 : f32
    %94 = vector.broadcast %cst_45 : f32 to vector<16x256xf32>
    %95 = arith.mulf %94, %93 : vector<16x256xf32>
    %96 = arith.addf %91, %95 : vector<16x256xf32>
    %cst_46 = arith.constant 0.797884583 : f32
    %97 = vector.broadcast %cst_46 : f32 to vector<16x256xf32>
    %98 = arith.mulf %97, %96 : vector<16x256xf32>
    %99 = math.tanh %98 : vector<16x256xf32>
    %cst_47 = arith.constant 1.000000e+00 : f32
    %100 = vector.broadcast %cst_47 : f32 to vector<16x256xf32>
    %101 = arith.addf %100, %99 : vector<16x256xf32>
    %cst_48 = arith.constant 5.000000e-01 : f32
    %102 = vector.broadcast %cst_48 : f32 to vector<16x256xf32>
    %103 = arith.mulf %102, %101 : vector<16x256xf32>
    %104 = arith.mulf %91, %103 : vector<16x256xf32>
    %105 = arith.truncf %104 : vector<16x256xf32> to vector<16x256xbf16>
    %c1_49 = arith.constant 1 : index
    %c0_50 = arith.constant 0 : index
    %c256_51 = arith.constant 256 : index
    %106 = vector.load %arg2[%c1_49, %c0_50, %c256_51] : memref<6x128x512xbf16, #tpu.memory_space<vmem>>, vector<1x128x256xbf16>
    %107 = vector.shape_cast %106 : vector<1x128x256xbf16> to vector<128x256xbf16>
    %cst_52 = arith.constant dense<0.000000e+00> : vector<16x256xf32>
    %108 = tpu.matmul %83, %107, %cst_52 {dimension_numbers = #tpu.dot_dimension_numbers<[1], [0], [0], [1], [0, 0, 1, 1], [], []>} : vector<16x128xbf16>, vector<128x256xbf16>, vector<16x256xf32> -> vector<16x256xf32>
    %c1_53 = arith.constant 1 : index
    %c0_54 = arith.constant 0 : index
    %c256_55 = arith.constant 256 : index
    %109 = vector.load %arg3[%c1_53, %c0_54, %c256_55] : memref<6x1x512xbf16, #tpu.memory_space<vmem>>, vector<1x1x256xbf16>
    %110 = vector.shape_cast %109 : vector<1x1x256xbf16> to vector<1x256xbf16>
    %111 = arith.extf %110 : vector<1x256xbf16> to vector<1x256xf32>
    %112 = vector.broadcast %111 : vector<1x256xf32> to vector<16x256xf32>
    %113 = arith.addf %108, %112 : vector<16x256xf32>
    %114 = arith.mulf %113, %113 : vector<16x256xf32>
    %115 = arith.mulf %113, %114 : vector<16x256xf32>
    %cst_56 = arith.constant 4.471500e-02 : f32
    %116 = vector.broadcast %cst_56 : f32 to vector<16x256xf32>
    %117 = arith.mulf %116, %115 : vector<16x256xf32>
    %118 = arith.addf %113, %117 : vector<16x256xf32>
    %cst_57 = arith.constant 0.797884583 : f32
    %119 = vector.broadcast %cst_57 : f32 to vector<16x256xf32>
    %120 = arith.mulf %119, %118 : vector<16x256xf32>
    %121 = math.tanh %120 : vector<16x256xf32>
    %cst_58 = arith.constant 1.000000e+00 : f32
    %122 = vector.broadcast %cst_58 : f32 to vector<16x256xf32>
    %123 = arith.addf %122, %121 : vector<16x256xf32>
    %cst_59 = arith.constant 5.000000e-01 : f32
    %124 = vector.broadcast %cst_59 : f32 to vector<16x256xf32>
    %125 = arith.mulf %124, %123 : vector<16x256xf32>
    %126 = arith.mulf %113, %125 : vector<16x256xf32>
    %127 = arith.truncf %126 : vector<16x256xf32> to vector<16x256xbf16>
    %128 = tpu.concatenate %105, %127 in 1 : vector<16x256xbf16>, vector<16x256xbf16> -> vector<16x512xbf16>
    %c1_60 = arith.constant 1 : index
    %c0_61 = arith.constant 0 : index
    %c0_62 = arith.constant 0 : index
    %129 = vector.load %arg4[%c1_60, %c0_61, %c0_62] : memref<6x512x128xbf16, #tpu.memory_space<vmem>>, vector<1x512x128xbf16>
    %130 = vector.shape_cast %129 : vector<1x512x128xbf16> to vector<512x128xbf16>
    %cst_63 = arith.constant dense<0.000000e+00> : vector<16x128xf32>
    %131 = tpu.matmul %128, %130, %cst_63 {dimension_numbers = #tpu.dot_dimension_numbers<[1], [0], [0], [1], [0, 0, 1, 1], [], []>} : vector<16x512xbf16>, vector<512x128xbf16>, vector<16x128xf32> -> vector<16x128xf32>
    %c1_64 = arith.constant 1 : index
    %c0_65 = arith.constant 0 : index
    %c0_66 = arith.constant 0 : index
    %132 = vector.load %arg5[%c1_64, %c0_65, %c0_66] : memref<6x1x128xbf16, #tpu.memory_space<vmem>>, vector<1x1x128xbf16>
    %133 = vector.shape_cast %132 : vector<1x1x128xbf16> to vector<1x128xbf16>
    %134 = arith.extf %133 : vector<1x128xbf16> to vector<1x128xf32>
    %135 = vector.broadcast %134 : vector<1x128xf32> to vector<16x128xf32>
    %136 = arith.addf %131, %135 : vector<16x128xf32>
    %137 = arith.addf %136, %82 : vector<16x128xf32>
    %cst_67 = arith.constant dense<0.000000e+00> : vector<16xf32>
    %138 = vector.multi_reduction <add>, %137, %cst_67 [1] : vector<16x128xf32> to vector<16xf32>
    %139 = vector.shape_cast %138 : vector<16xf32> to vector<16x1xf32>
    %cst_68 = arith.constant 1.280000e+02 : f32
    %140 = vector.broadcast %cst_68 : f32 to vector<16x1xf32>
    %141 = arith.divf %139, %140 : vector<16x1xf32>
    %142 = arith.mulf %137, %137 : vector<16x128xf32>
    %cst_69 = arith.constant dense<0.000000e+00> : vector<16xf32>
    %143 = vector.multi_reduction <add>, %142, %cst_69 [1] : vector<16x128xf32> to vector<16xf32>
    %144 = vector.shape_cast %143 : vector<16xf32> to vector<16x1xf32>
    %cst_70 = arith.constant 1.280000e+02 : f32
    %145 = vector.broadcast %cst_70 : f32 to vector<16x1xf32>
    %146 = arith.divf %144, %145 : vector<16x1xf32>
    %147 = arith.mulf %141, %141 : vector<16x1xf32>
    %148 = arith.subf %146, %147 : vector<16x1xf32>
    %149 = vector.broadcast %141 : vector<16x1xf32> to vector<16x128xf32>
    %150 = arith.subf %137, %149 : vector<16x128xf32>
    %cst_71 = arith.constant 9.99999974E-6 : f32
    %151 = vector.broadcast %cst_71 : f32 to vector<16x1xf32>
    %152 = arith.addf %148, %151 : vector<16x1xf32>
    %153 = math.rsqrt %152 : vector<16x1xf32>
    %154 = vector.broadcast %153 : vector<16x1xf32> to vector<16x128xf32>
    %155 = arith.mulf %150, %154 : vector<16x128xf32>
    %c1_72 = arith.constant 1 : index
    %c0_73 = arith.constant 0 : index
    %c0_74 = arith.constant 0 : index
    %156 = vector.load %arg6[%c1_72, %c0_73, %c0_74] : memref<5x1x128xf32, #tpu.memory_space<vmem>>, vector<1x1x128xf32>
    %157 = vector.shape_cast %156 : vector<1x1x128xf32> to vector<1x128xf32>
    %158 = vector.broadcast %157 : vector<1x128xf32> to vector<16x128xf32>
    %159 = arith.mulf %155, %158 : vector<16x128xf32>
    %c1_75 = arith.constant 1 : index
    %c0_76 = arith.constant 0 : index
    %c0_77 = arith.constant 0 : index
    %160 = vector.load %arg7[%c1_75, %c0_76, %c0_77] : memref<5x1x128xf32, #tpu.memory_space<vmem>>, vector<1x1x128xf32>
    %161 = vector.shape_cast %160 : vector<1x1x128xf32> to vector<1x128xf32>
    %162 = vector.broadcast %161 : vector<1x128xf32> to vector<16x128xf32>
    %163 = arith.addf %159, %162 : vector<16x128xf32>
    %164 = arith.truncf %163 : vector<16x128xf32> to vector<16x128xbf16>
    %c2 = arith.constant 2 : index
    %c0_78 = arith.constant 0 : index
    %c0_79 = arith.constant 0 : index
    %165 = vector.load %arg2[%c2, %c0_78, %c0_79] : memref<6x128x512xbf16, #tpu.memory_space<vmem>>, vector<1x128x256xbf16>
    %166 = vector.shape_cast %165 : vector<1x128x256xbf16> to vector<128x256xbf16>
    %cst_80 = arith.constant dense<0.000000e+00> : vector<16x256xf32>
    %167 = tpu.matmul %164, %166, %cst_80 {dimension_numbers = #tpu.dot_dimension_numbers<[1], [0], [0], [1], [0, 0, 1, 1], [], []>} : vector<16x128xbf16>, vector<128x256xbf16>, vector<16x256xf32> -> vector<16x256xf32>
    %c2_81 = arith.constant 2 : index
    %c0_82 = arith.constant 0 : index
    %c0_83 = arith.constant 0 : index
    %168 = vector.load %arg3[%c2_81, %c0_82, %c0_83] : memref<6x1x512xbf16, #tpu.memory_space<vmem>>, vector<1x1x256xbf16>
    %169 = vector.shape_cast %168 : vector<1x1x256xbf16> to vector<1x256xbf16>
    %170 = arith.extf %169 : vector<1x256xbf16> to vector<1x256xf32>
    %171 = vector.broadcast %170 : vector<1x256xf32> to vector<16x256xf32>
    %172 = arith.addf %167, %171 : vector<16x256xf32>
    %173 = arith.mulf %172, %172 : vector<16x256xf32>
    %174 = arith.mulf %172, %173 : vector<16x256xf32>
    %cst_84 = arith.constant 4.471500e-02 : f32
    %175 = vector.broadcast %cst_84 : f32 to vector<16x256xf32>
    %176 = arith.mulf %175, %174 : vector<16x256xf32>
    %177 = arith.addf %172, %176 : vector<16x256xf32>
    %cst_85 = arith.constant 0.797884583 : f32
    %178 = vector.broadcast %cst_85 : f32 to vector<16x256xf32>
    %179 = arith.mulf %178, %177 : vector<16x256xf32>
    %180 = math.tanh %179 : vector<16x256xf32>
    %cst_86 = arith.constant 1.000000e+00 : f32
    %181 = vector.broadcast %cst_86 : f32 to vector<16x256xf32>
    %182 = arith.addf %181, %180 : vector<16x256xf32>
    %cst_87 = arith.constant 5.000000e-01 : f32
    %183 = vector.broadcast %cst_87 : f32 to vector<16x256xf32>
    %184 = arith.mulf %183, %182 : vector<16x256xf32>
    %185 = arith.mulf %172, %184 : vector<16x256xf32>
    %186 = arith.truncf %185 : vector<16x256xf32> to vector<16x256xbf16>
    %c2_88 = arith.constant 2 : index
    %c0_89 = arith.constant 0 : index
    %c256_90 = arith.constant 256 : index
    %187 = vector.load %arg2[%c2_88, %c0_89, %c256_90] : memref<6x128x512xbf16, #tpu.memory_space<vmem>>, vector<1x128x256xbf16>
    %188 = vector.shape_cast %187 : vector<1x128x256xbf16> to vector<128x256xbf16>
    %cst_91 = arith.constant dense<0.000000e+00> : vector<16x256xf32>
    %189 = tpu.matmul %164, %188, %cst_91 {dimension_numbers = #tpu.dot_dimension_numbers<[1], [0], [0], [1], [0, 0, 1, 1], [], []>} : vector<16x128xbf16>, vector<128x256xbf16>, vector<16x256xf32> -> vector<16x256xf32>
    %c2_92 = arith.constant 2 : index
    %c0_93 = arith.constant 0 : index
    %c256_94 = arith.constant 256 : index
    %190 = vector.load %arg3[%c2_92, %c0_93, %c256_94] : memref<6x1x512xbf16, #tpu.memory_space<vmem>>, vector<1x1x256xbf16>
    %191 = vector.shape_cast %190 : vector<1x1x256xbf16> to vector<1x256xbf16>
    %192 = arith.extf %191 : vector<1x256xbf16> to vector<1x256xf32>
    %193 = vector.broadcast %192 : vector<1x256xf32> to vector<16x256xf32>
    %194 = arith.addf %189, %193 : vector<16x256xf32>
    %195 = arith.mulf %194, %194 : vector<16x256xf32>
    %196 = arith.mulf %194, %195 : vector<16x256xf32>
    %cst_95 = arith.constant 4.471500e-02 : f32
    %197 = vector.broadcast %cst_95 : f32 to vector<16x256xf32>
    %198 = arith.mulf %197, %196 : vector<16x256xf32>
    %199 = arith.addf %194, %198 : vector<16x256xf32>
    %cst_96 = arith.constant 0.797884583 : f32
    %200 = vector.broadcast %cst_96 : f32 to vector<16x256xf32>
    %201 = arith.mulf %200, %199 : vector<16x256xf32>
    %202 = math.tanh %201 : vector<16x256xf32>
    %cst_97 = arith.constant 1.000000e+00 : f32
    %203 = vector.broadcast %cst_97 : f32 to vector<16x256xf32>
    %204 = arith.addf %203, %202 : vector<16x256xf32>
    %cst_98 = arith.constant 5.000000e-01 : f32
    %205 = vector.broadcast %cst_98 : f32 to vector<16x256xf32>
    %206 = arith.mulf %205, %204 : vector<16x256xf32>
    %207 = arith.mulf %194, %206 : vector<16x256xf32>
    %208 = arith.truncf %207 : vector<16x256xf32> to vector<16x256xbf16>
    %209 = tpu.concatenate %186, %208 in 1 : vector<16x256xbf16>, vector<16x256xbf16> -> vector<16x512xbf16>
    %c2_99 = arith.constant 2 : index
    %c0_100 = arith.constant 0 : index
    %c0_101 = arith.constant 0 : index
    %210 = vector.load %arg4[%c2_99, %c0_100, %c0_101] : memref<6x512x128xbf16, #tpu.memory_space<vmem>>, vector<1x512x128xbf16>
    %211 = vector.shape_cast %210 : vector<1x512x128xbf16> to vector<512x128xbf16>
    %cst_102 = arith.constant dense<0.000000e+00> : vector<16x128xf32>
    %212 = tpu.matmul %209, %211, %cst_102 {dimension_numbers = #tpu.dot_dimension_numbers<[1], [0], [0], [1], [0, 0, 1, 1], [], []>} : vector<16x512xbf16>, vector<512x128xbf16>, vector<16x128xf32> -> vector<16x128xf32>
    %c2_103 = arith.constant 2 : index
    %c0_104 = arith.constant 0 : index
    %c0_105 = arith.constant 0 : index
    %213 = vector.load %arg5[%c2_103, %c0_104, %c0_105] : memref<6x1x128xbf16, #tpu.memory_space<vmem>>, vector<1x1x128xbf16>
    %214 = vector.shape_cast %213 : vector<1x1x128xbf16> to vector<1x128xbf16>
    %215 = arith.extf %214 : vector<1x128xbf16> to vector<1x128xf32>
    %216 = vector.broadcast %215 : vector<1x128xf32> to vector<16x128xf32>
    %217 = arith.addf %212, %216 : vector<16x128xf32>
    %218 = arith.addf %217, %163 : vector<16x128xf32>
    %cst_106 = arith.constant dense<0.000000e+00> : vector<16xf32>
    %219 = vector.multi_reduction <add>, %218, %cst_106 [1] : vector<16x128xf32> to vector<16xf32>
    %220 = vector.shape_cast %219 : vector<16xf32> to vector<16x1xf32>
    %cst_107 = arith.constant 1.280000e+02 : f32
    %221 = vector.broadcast %cst_107 : f32 to vector<16x1xf32>
    %222 = arith.divf %220, %221 : vector<16x1xf32>
    %223 = arith.mulf %218, %218 : vector<16x128xf32>
    %cst_108 = arith.constant dense<0.000000e+00> : vector<16xf32>
    %224 = vector.multi_reduction <add>, %223, %cst_108 [1] : vector<16x128xf32> to vector<16xf32>
    %225 = vector.shape_cast %224 : vector<16xf32> to vector<16x1xf32>
    %cst_109 = arith.constant 1.280000e+02 : f32
    %226 = vector.broadcast %cst_109 : f32 to vector<16x1xf32>
    %227 = arith.divf %225, %226 : vector<16x1xf32>
    %228 = arith.mulf %222, %222 : vector<16x1xf32>
    %229 = arith.subf %227, %228 : vector<16x1xf32>
    %230 = vector.broadcast %222 : vector<16x1xf32> to vector<16x128xf32>
    %231 = arith.subf %218, %230 : vector<16x128xf32>
    %cst_110 = arith.constant 9.99999974E-6 : f32
    %232 = vector.broadcast %cst_110 : f32 to vector<16x1xf32>
    %233 = arith.addf %229, %232 : vector<16x1xf32>
    %234 = math.rsqrt %233 : vector<16x1xf32>
    %235 = vector.broadcast %234 : vector<16x1xf32> to vector<16x128xf32>
    %236 = arith.mulf %231, %235 : vector<16x128xf32>
    %c2_111 = arith.constant 2 : index
    %c0_112 = arith.constant 0 : index
    %c0_113 = arith.constant 0 : index
    %237 = vector.load %arg6[%c2_111, %c0_112, %c0_113] : memref<5x1x128xf32, #tpu.memory_space<vmem>>, vector<1x1x128xf32>
    %238 = vector.shape_cast %237 : vector<1x1x128xf32> to vector<1x128xf32>
    %239 = vector.broadcast %238 : vector<1x128xf32> to vector<16x128xf32>
    %240 = arith.mulf %236, %239 : vector<16x128xf32>
    %c2_114 = arith.constant 2 : index
    %c0_115 = arith.constant 0 : index
    %c0_116 = arith.constant 0 : index
    %241 = vector.load %arg7[%c2_114, %c0_115, %c0_116] : memref<5x1x128xf32, #tpu.memory_space<vmem>>, vector<1x1x128xf32>
    %242 = vector.shape_cast %241 : vector<1x1x128xf32> to vector<1x128xf32>
    %243 = vector.broadcast %242 : vector<1x128xf32> to vector<16x128xf32>
    %244 = arith.addf %240, %243 : vector<16x128xf32>
    %245 = arith.truncf %244 : vector<16x128xf32> to vector<16x128xbf16>
    %c3 = arith.constant 3 : index
    %c0_117 = arith.constant 0 : index
    %c0_118 = arith.constant 0 : index
    %246 = vector.load %arg2[%c3, %c0_117, %c0_118] : memref<6x128x512xbf16, #tpu.memory_space<vmem>>, vector<1x128x256xbf16>
    %247 = vector.shape_cast %246 : vector<1x128x256xbf16> to vector<128x256xbf16>
    %cst_119 = arith.constant dense<0.000000e+00> : vector<16x256xf32>
    %248 = tpu.matmul %245, %247, %cst_119 {dimension_numbers = #tpu.dot_dimension_numbers<[1], [0], [0], [1], [0, 0, 1, 1], [], []>} : vector<16x128xbf16>, vector<128x256xbf16>, vector<16x256xf32> -> vector<16x256xf32>
    %c3_120 = arith.constant 3 : index
    %c0_121 = arith.constant 0 : index
    %c0_122 = arith.constant 0 : index
    %249 = vector.load %arg3[%c3_120, %c0_121, %c0_122] : memref<6x1x512xbf16, #tpu.memory_space<vmem>>, vector<1x1x256xbf16>
    %250 = vector.shape_cast %249 : vector<1x1x256xbf16> to vector<1x256xbf16>
    %251 = arith.extf %250 : vector<1x256xbf16> to vector<1x256xf32>
    %252 = vector.broadcast %251 : vector<1x256xf32> to vector<16x256xf32>
    %253 = arith.addf %248, %252 : vector<16x256xf32>
    %254 = arith.mulf %253, %253 : vector<16x256xf32>
    %255 = arith.mulf %253, %254 : vector<16x256xf32>
    %cst_123 = arith.constant 4.471500e-02 : f32
    %256 = vector.broadcast %cst_123 : f32 to vector<16x256xf32>
    %257 = arith.mulf %256, %255 : vector<16x256xf32>
    %258 = arith.addf %253, %257 : vector<16x256xf32>
    %cst_124 = arith.constant 0.797884583 : f32
    %259 = vector.broadcast %cst_124 : f32 to vector<16x256xf32>
    %260 = arith.mulf %259, %258 : vector<16x256xf32>
    %261 = math.tanh %260 : vector<16x256xf32>
    %cst_125 = arith.constant 1.000000e+00 : f32
    %262 = vector.broadcast %cst_125 : f32 to vector<16x256xf32>
    %263 = arith.addf %262, %261 : vector<16x256xf32>
    %cst_126 = arith.constant 5.000000e-01 : f32
    %264 = vector.broadcast %cst_126 : f32 to vector<16x256xf32>
    %265 = arith.mulf %264, %263 : vector<16x256xf32>
    %266 = arith.mulf %253, %265 : vector<16x256xf32>
    %267 = arith.truncf %266 : vector<16x256xf32> to vector<16x256xbf16>
    %c3_127 = arith.constant 3 : index
    %c0_128 = arith.constant 0 : index
    %c256_129 = arith.constant 256 : index
    %268 = vector.load %arg2[%c3_127, %c0_128, %c256_129] : memref<6x128x512xbf16, #tpu.memory_space<vmem>>, vector<1x128x256xbf16>
    %269 = vector.shape_cast %268 : vector<1x128x256xbf16> to vector<128x256xbf16>
    %cst_130 = arith.constant dense<0.000000e+00> : vector<16x256xf32>
    %270 = tpu.matmul %245, %269, %cst_130 {dimension_numbers = #tpu.dot_dimension_numbers<[1], [0], [0], [1], [0, 0, 1, 1], [], []>} : vector<16x128xbf16>, vector<128x256xbf16>, vector<16x256xf32> -> vector<16x256xf32>
    %c3_131 = arith.constant 3 : index
    %c0_132 = arith.constant 0 : index
    %c256_133 = arith.constant 256 : index
    %271 = vector.load %arg3[%c3_131, %c0_132, %c256_133] : memref<6x1x512xbf16, #tpu.memory_space<vmem>>, vector<1x1x256xbf16>
    %272 = vector.shape_cast %271 : vector<1x1x256xbf16> to vector<1x256xbf16>
    %273 = arith.extf %272 : vector<1x256xbf16> to vector<1x256xf32>
    %274 = vector.broadcast %273 : vector<1x256xf32> to vector<16x256xf32>
    %275 = arith.addf %270, %274 : vector<16x256xf32>
    %276 = arith.mulf %275, %275 : vector<16x256xf32>
    %277 = arith.mulf %275, %276 : vector<16x256xf32>
    %cst_134 = arith.constant 4.471500e-02 : f32
    %278 = vector.broadcast %cst_134 : f32 to vector<16x256xf32>
    %279 = arith.mulf %278, %277 : vector<16x256xf32>
    %280 = arith.addf %275, %279 : vector<16x256xf32>
    %cst_135 = arith.constant 0.797884583 : f32
    %281 = vector.broadcast %cst_135 : f32 to vector<16x256xf32>
    %282 = arith.mulf %281, %280 : vector<16x256xf32>
    %283 = math.tanh %282 : vector<16x256xf32>
    %cst_136 = arith.constant 1.000000e+00 : f32
    %284 = vector.broadcast %cst_136 : f32 to vector<16x256xf32>
    %285 = arith.addf %284, %283 : vector<16x256xf32>
    %cst_137 = arith.constant 5.000000e-01 : f32
    %286 = vector.broadcast %cst_137 : f32 to vector<16x256xf32>
    %287 = arith.mulf %286, %285 : vector<16x256xf32>
    %288 = arith.mulf %275, %287 : vector<16x256xf32>
    %289 = arith.truncf %288 : vector<16x256xf32> to vector<16x256xbf16>
    %290 = tpu.concatenate %267, %289 in 1 : vector<16x256xbf16>, vector<16x256xbf16> -> vector<16x512xbf16>
    %c3_138 = arith.constant 3 : index
    %c0_139 = arith.constant 0 : index
    %c0_140 = arith.constant 0 : index
    %291 = vector.load %arg4[%c3_138, %c0_139, %c0_140] : memref<6x512x128xbf16, #tpu.memory_space<vmem>>, vector<1x512x128xbf16>
    %292 = vector.shape_cast %291 : vector<1x512x128xbf16> to vector<512x128xbf16>
    %cst_141 = arith.constant dense<0.000000e+00> : vector<16x128xf32>
    %293 = tpu.matmul %290, %292, %cst_141 {dimension_numbers = #tpu.dot_dimension_numbers<[1], [0], [0], [1], [0, 0, 1, 1], [], []>} : vector<16x512xbf16>, vector<512x128xbf16>, vector<16x128xf32> -> vector<16x128xf32>
    %c3_142 = arith.constant 3 : index
    %c0_143 = arith.constant 0 : index
    %c0_144 = arith.constant 0 : index
    %294 = vector.load %arg5[%c3_142, %c0_143, %c0_144] : memref<6x1x128xbf16, #tpu.memory_space<vmem>>, vector<1x1x128xbf16>
    %295 = vector.shape_cast %294 : vector<1x1x128xbf16> to vector<1x128xbf16>
    %296 = arith.extf %295 : vector<1x128xbf16> to vector<1x128xf32>
    %297 = vector.broadcast %296 : vector<1x128xf32> to vector<16x128xf32>
    %298 = arith.addf %293, %297 : vector<16x128xf32>
    %299 = arith.addf %298, %244 : vector<16x128xf32>
    %cst_145 = arith.constant dense<0.000000e+00> : vector<16xf32>
    %300 = vector.multi_reduction <add>, %299, %cst_145 [1] : vector<16x128xf32> to vector<16xf32>
    %301 = vector.shape_cast %300 : vector<16xf32> to vector<16x1xf32>
    %cst_146 = arith.constant 1.280000e+02 : f32
    %302 = vector.broadcast %cst_146 : f32 to vector<16x1xf32>
    %303 = arith.divf %301, %302 : vector<16x1xf32>
    %304 = arith.mulf %299, %299 : vector<16x128xf32>
    %cst_147 = arith.constant dense<0.000000e+00> : vector<16xf32>
    %305 = vector.multi_reduction <add>, %304, %cst_147 [1] : vector<16x128xf32> to vector<16xf32>
    %306 = vector.shape_cast %305 : vector<16xf32> to vector<16x1xf32>
    %cst_148 = arith.constant 1.280000e+02 : f32
    %307 = vector.broadcast %cst_148 : f32 to vector<16x1xf32>
    %308 = arith.divf %306, %307 : vector<16x1xf32>
    %309 = arith.mulf %303, %303 : vector<16x1xf32>
    %310 = arith.subf %308, %309 : vector<16x1xf32>
    %311 = vector.broadcast %303 : vector<16x1xf32> to vector<16x128xf32>
    %312 = arith.subf %299, %311 : vector<16x128xf32>
    %cst_149 = arith.constant 9.99999974E-6 : f32
    %313 = vector.broadcast %cst_149 : f32 to vector<16x1xf32>
    %314 = arith.addf %310, %313 : vector<16x1xf32>
    %315 = math.rsqrt %314 : vector<16x1xf32>
    %316 = vector.broadcast %315 : vector<16x1xf32> to vector<16x128xf32>
    %317 = arith.mulf %312, %316 : vector<16x128xf32>
    %c3_150 = arith.constant 3 : index
    %c0_151 = arith.constant 0 : index
    %c0_152 = arith.constant 0 : index
    %318 = vector.load %arg6[%c3_150, %c0_151, %c0_152] : memref<5x1x128xf32, #tpu.memory_space<vmem>>, vector<1x1x128xf32>
    %319 = vector.shape_cast %318 : vector<1x1x128xf32> to vector<1x128xf32>
    %320 = vector.broadcast %319 : vector<1x128xf32> to vector<16x128xf32>
    %321 = arith.mulf %317, %320 : vector<16x128xf32>
    %c3_153 = arith.constant 3 : index
    %c0_154 = arith.constant 0 : index
    %c0_155 = arith.constant 0 : index
    %322 = vector.load %arg7[%c3_153, %c0_154, %c0_155] : memref<5x1x128xf32, #tpu.memory_space<vmem>>, vector<1x1x128xf32>
    %323 = vector.shape_cast %322 : vector<1x1x128xf32> to vector<1x128xf32>
    %324 = vector.broadcast %323 : vector<1x128xf32> to vector<16x128xf32>
    %325 = arith.addf %321, %324 : vector<16x128xf32>
    %326 = arith.truncf %325 : vector<16x128xf32> to vector<16x128xbf16>
    %c4 = arith.constant 4 : index
    %c0_156 = arith.constant 0 : index
    %c0_157 = arith.constant 0 : index
    %327 = vector.load %arg2[%c4, %c0_156, %c0_157] : memref<6x128x512xbf16, #tpu.memory_space<vmem>>, vector<1x128x256xbf16>
    %328 = vector.shape_cast %327 : vector<1x128x256xbf16> to vector<128x256xbf16>
    %cst_158 = arith.constant dense<0.000000e+00> : vector<16x256xf32>
    %329 = tpu.matmul %326, %328, %cst_158 {dimension_numbers = #tpu.dot_dimension_numbers<[1], [0], [0], [1], [0, 0, 1, 1], [], []>} : vector<16x128xbf16>, vector<128x256xbf16>, vector<16x256xf32> -> vector<16x256xf32>
    %c4_159 = arith.constant 4 : index
    %c0_160 = arith.constant 0 : index
    %c0_161 = arith.constant 0 : index
    %330 = vector.load %arg3[%c4_159, %c0_160, %c0_161] : memref<6x1x512xbf16, #tpu.memory_space<vmem>>, vector<1x1x256xbf16>
    %331 = vector.shape_cast %330 : vector<1x1x256xbf16> to vector<1x256xbf16>
    %332 = arith.extf %331 : vector<1x256xbf16> to vector<1x256xf32>
    %333 = vector.broadcast %332 : vector<1x256xf32> to vector<16x256xf32>
    %334 = arith.addf %329, %333 : vector<16x256xf32>
    %335 = arith.mulf %334, %334 : vector<16x256xf32>
    %336 = arith.mulf %334, %335 : vector<16x256xf32>
    %cst_162 = arith.constant 4.471500e-02 : f32
    %337 = vector.broadcast %cst_162 : f32 to vector<16x256xf32>
    %338 = arith.mulf %337, %336 : vector<16x256xf32>
    %339 = arith.addf %334, %338 : vector<16x256xf32>
    %cst_163 = arith.constant 0.797884583 : f32
    %340 = vector.broadcast %cst_163 : f32 to vector<16x256xf32>
    %341 = arith.mulf %340, %339 : vector<16x256xf32>
    %342 = math.tanh %341 : vector<16x256xf32>
    %cst_164 = arith.constant 1.000000e+00 : f32
    %343 = vector.broadcast %cst_164 : f32 to vector<16x256xf32>
    %344 = arith.addf %343, %342 : vector<16x256xf32>
    %cst_165 = arith.constant 5.000000e-01 : f32
    %345 = vector.broadcast %cst_165 : f32 to vector<16x256xf32>
    %346 = arith.mulf %345, %344 : vector<16x256xf32>
    %347 = arith.mulf %334, %346 : vector<16x256xf32>
    %348 = arith.truncf %347 : vector<16x256xf32> to vector<16x256xbf16>
    %c4_166 = arith.constant 4 : index
    %c0_167 = arith.constant 0 : index
    %c256_168 = arith.constant 256 : index
    %349 = vector.load %arg2[%c4_166, %c0_167, %c256_168] : memref<6x128x512xbf16, #tpu.memory_space<vmem>>, vector<1x128x256xbf16>
    %350 = vector.shape_cast %349 : vector<1x128x256xbf16> to vector<128x256xbf16>
    %cst_169 = arith.constant dense<0.000000e+00> : vector<16x256xf32>
    %351 = tpu.matmul %326, %350, %cst_169 {dimension_numbers = #tpu.dot_dimension_numbers<[1], [0], [0], [1], [0, 0, 1, 1], [], []>} : vector<16x128xbf16>, vector<128x256xbf16>, vector<16x256xf32> -> vector<16x256xf32>
    %c4_170 = arith.constant 4 : index
    %c0_171 = arith.constant 0 : index
    %c256_172 = arith.constant 256 : index
    %352 = vector.load %arg3[%c4_170, %c0_171, %c256_172] : memref<6x1x512xbf16, #tpu.memory_space<vmem>>, vector<1x1x256xbf16>
    %353 = vector.shape_cast %352 : vector<1x1x256xbf16> to vector<1x256xbf16>
    %354 = arith.extf %353 : vector<1x256xbf16> to vector<1x256xf32>
    %355 = vector.broadcast %354 : vector<1x256xf32> to vector<16x256xf32>
    %356 = arith.addf %351, %355 : vector<16x256xf32>
    %357 = arith.mulf %356, %356 : vector<16x256xf32>
    %358 = arith.mulf %356, %357 : vector<16x256xf32>
    %cst_173 = arith.constant 4.471500e-02 : f32
    %359 = vector.broadcast %cst_173 : f32 to vector<16x256xf32>
    %360 = arith.mulf %359, %358 : vector<16x256xf32>
    %361 = arith.addf %356, %360 : vector<16x256xf32>
    %cst_174 = arith.constant 0.797884583 : f32
    %362 = vector.broadcast %cst_174 : f32 to vector<16x256xf32>
    %363 = arith.mulf %362, %361 : vector<16x256xf32>
    %364 = math.tanh %363 : vector<16x256xf32>
    %cst_175 = arith.constant 1.000000e+00 : f32
    %365 = vector.broadcast %cst_175 : f32 to vector<16x256xf32>
    %366 = arith.addf %365, %364 : vector<16x256xf32>
    %cst_176 = arith.constant 5.000000e-01 : f32
    %367 = vector.broadcast %cst_176 : f32 to vector<16x256xf32>
    %368 = arith.mulf %367, %366 : vector<16x256xf32>
    %369 = arith.mulf %356, %368 : vector<16x256xf32>
    %370 = arith.truncf %369 : vector<16x256xf32> to vector<16x256xbf16>
    %371 = tpu.concatenate %348, %370 in 1 : vector<16x256xbf16>, vector<16x256xbf16> -> vector<16x512xbf16>
    %c4_177 = arith.constant 4 : index
    %c0_178 = arith.constant 0 : index
    %c0_179 = arith.constant 0 : index
    %372 = vector.load %arg4[%c4_177, %c0_178, %c0_179] : memref<6x512x128xbf16, #tpu.memory_space<vmem>>, vector<1x512x128xbf16>
    %373 = vector.shape_cast %372 : vector<1x512x128xbf16> to vector<512x128xbf16>
    %cst_180 = arith.constant dense<0.000000e+00> : vector<16x128xf32>
    %374 = tpu.matmul %371, %373, %cst_180 {dimension_numbers = #tpu.dot_dimension_numbers<[1], [0], [0], [1], [0, 0, 1, 1], [], []>} : vector<16x512xbf16>, vector<512x128xbf16>, vector<16x128xf32> -> vector<16x128xf32>
    %c4_181 = arith.constant 4 : index
    %c0_182 = arith.constant 0 : index
    %c0_183 = arith.constant 0 : index
    %375 = vector.load %arg5[%c4_181, %c0_182, %c0_183] : memref<6x1x128xbf16, #tpu.memory_space<vmem>>, vector<1x1x128xbf16>
    %376 = vector.shape_cast %375 : vector<1x1x128xbf16> to vector<1x128xbf16>
    %377 = arith.extf %376 : vector<1x128xbf16> to vector<1x128xf32>
    %378 = vector.broadcast %377 : vector<1x128xf32> to vector<16x128xf32>
    %379 = arith.addf %374, %378 : vector<16x128xf32>
    %380 = arith.addf %379, %325 : vector<16x128xf32>
    %cst_184 = arith.constant dense<0.000000e+00> : vector<16xf32>
    %381 = vector.multi_reduction <add>, %380, %cst_184 [1] : vector<16x128xf32> to vector<16xf32>
    %382 = vector.shape_cast %381 : vector<16xf32> to vector<16x1xf32>
    %cst_185 = arith.constant 1.280000e+02 : f32
    %383 = vector.broadcast %cst_185 : f32 to vector<16x1xf32>
    %384 = arith.divf %382, %383 : vector<16x1xf32>
    %385 = arith.mulf %380, %380 : vector<16x128xf32>
    %cst_186 = arith.constant dense<0.000000e+00> : vector<16xf32>
    %386 = vector.multi_reduction <add>, %385, %cst_186 [1] : vector<16x128xf32> to vector<16xf32>
    %387 = vector.shape_cast %386 : vector<16xf32> to vector<16x1xf32>
    %cst_187 = arith.constant 1.280000e+02 : f32
    %388 = vector.broadcast %cst_187 : f32 to vector<16x1xf32>
    %389 = arith.divf %387, %388 : vector<16x1xf32>
    %390 = arith.mulf %384, %384 : vector<16x1xf32>
    %391 = arith.subf %389, %390 : vector<16x1xf32>
    %392 = vector.broadcast %384 : vector<16x1xf32> to vector<16x128xf32>
    %393 = arith.subf %380, %392 : vector<16x128xf32>
    %cst_188 = arith.constant 9.99999974E-6 : f32
    %394 = vector.broadcast %cst_188 : f32 to vector<16x1xf32>
    %395 = arith.addf %391, %394 : vector<16x1xf32>
    %396 = math.rsqrt %395 : vector<16x1xf32>
    %397 = vector.broadcast %396 : vector<16x1xf32> to vector<16x128xf32>
    %398 = arith.mulf %393, %397 : vector<16x128xf32>
    %c4_189 = arith.constant 4 : index
    %c0_190 = arith.constant 0 : index
    %c0_191 = arith.constant 0 : index
    %399 = vector.load %arg6[%c4_189, %c0_190, %c0_191] : memref<5x1x128xf32, #tpu.memory_space<vmem>>, vector<1x1x128xf32>
    %400 = vector.shape_cast %399 : vector<1x1x128xf32> to vector<1x128xf32>
    %401 = vector.broadcast %400 : vector<1x128xf32> to vector<16x128xf32>
    %402 = arith.mulf %398, %401 : vector<16x128xf32>
    %c4_192 = arith.constant 4 : index
    %c0_193 = arith.constant 0 : index
    %c0_194 = arith.constant 0 : index
    %403 = vector.load %arg7[%c4_192, %c0_193, %c0_194] : memref<5x1x128xf32, #tpu.memory_space<vmem>>, vector<1x1x128xf32>
    %404 = vector.shape_cast %403 : vector<1x1x128xf32> to vector<1x128xf32>
    %405 = vector.broadcast %404 : vector<1x128xf32> to vector<16x128xf32>
    %406 = arith.addf %402, %405 : vector<16x128xf32>
    %407 = arith.truncf %406 : vector<16x128xf32> to vector<16x128xbf16>
    %c5 = arith.constant 5 : index
    %c0_195 = arith.constant 0 : index
    %c0_196 = arith.constant 0 : index
    %408 = vector.load %arg2[%c5, %c0_195, %c0_196] : memref<6x128x512xbf16, #tpu.memory_space<vmem>>, vector<1x128x256xbf16>
    %409 = vector.shape_cast %408 : vector<1x128x256xbf16> to vector<128x256xbf16>
    %cst_197 = arith.constant dense<0.000000e+00> : vector<16x256xf32>
    %410 = tpu.matmul %407, %409, %cst_197 {dimension_numbers = #tpu.dot_dimension_numbers<[1], [0], [0], [1], [0, 0, 1, 1], [], []>} : vector<16x128xbf16>, vector<128x256xbf16>, vector<16x256xf32> -> vector<16x256xf32>
    %c5_198 = arith.constant 5 : index
    %c0_199 = arith.constant 0 : index
    %c0_200 = arith.constant 0 : index
    %411 = vector.load %arg3[%c5_198, %c0_199, %c0_200] : memref<6x1x512xbf16, #tpu.memory_space<vmem>>, vector<1x1x256xbf16>
    %412 = vector.shape_cast %411 : vector<1x1x256xbf16> to vector<1x256xbf16>
    %413 = arith.extf %412 : vector<1x256xbf16> to vector<1x256xf32>
    %414 = vector.broadcast %413 : vector<1x256xf32> to vector<16x256xf32>
    %415 = arith.addf %410, %414 : vector<16x256xf32>
    %416 = arith.mulf %415, %415 : vector<16x256xf32>
    %417 = arith.mulf %415, %416 : vector<16x256xf32>
    %cst_201 = arith.constant 4.471500e-02 : f32
    %418 = vector.broadcast %cst_201 : f32 to vector<16x256xf32>
    %419 = arith.mulf %418, %417 : vector<16x256xf32>
    %420 = arith.addf %415, %419 : vector<16x256xf32>
    %cst_202 = arith.constant 0.797884583 : f32
    %421 = vector.broadcast %cst_202 : f32 to vector<16x256xf32>
    %422 = arith.mulf %421, %420 : vector<16x256xf32>
    %423 = math.tanh %422 : vector<16x256xf32>
    %cst_203 = arith.constant 1.000000e+00 : f32
    %424 = vector.broadcast %cst_203 : f32 to vector<16x256xf32>
    %425 = arith.addf %424, %423 : vector<16x256xf32>
    %cst_204 = arith.constant 5.000000e-01 : f32
    %426 = vector.broadcast %cst_204 : f32 to vector<16x256xf32>
    %427 = arith.mulf %426, %425 : vector<16x256xf32>
    %428 = arith.mulf %415, %427 : vector<16x256xf32>
    %429 = arith.truncf %428 : vector<16x256xf32> to vector<16x256xbf16>
    %c5_205 = arith.constant 5 : index
    %c0_206 = arith.constant 0 : index
    %c256_207 = arith.constant 256 : index
    %430 = vector.load %arg2[%c5_205, %c0_206, %c256_207] : memref<6x128x512xbf16, #tpu.memory_space<vmem>>, vector<1x128x256xbf16>
    %431 = vector.shape_cast %430 : vector<1x128x256xbf16> to vector<128x256xbf16>
    %cst_208 = arith.constant dense<0.000000e+00> : vector<16x256xf32>
    %432 = tpu.matmul %407, %431, %cst_208 {dimension_numbers = #tpu.dot_dimension_numbers<[1], [0], [0], [1], [0, 0, 1, 1], [], []>} : vector<16x128xbf16>, vector<128x256xbf16>, vector<16x256xf32> -> vector<16x256xf32>
    %c5_209 = arith.constant 5 : index
    %c0_210 = arith.constant 0 : index
    %c256_211 = arith.constant 256 : index
    %433 = vector.load %arg3[%c5_209, %c0_210, %c256_211] : memref<6x1x512xbf16, #tpu.memory_space<vmem>>, vector<1x1x256xbf16>
    %434 = vector.shape_cast %433 : vector<1x1x256xbf16> to vector<1x256xbf16>
    %435 = arith.extf %434 : vector<1x256xbf16> to vector<1x256xf32>
    %436 = vector.broadcast %435 : vector<1x256xf32> to vector<16x256xf32>
    %437 = arith.addf %432, %436 : vector<16x256xf32>
    %438 = arith.mulf %437, %437 : vector<16x256xf32>
    %439 = arith.mulf %437, %438 : vector<16x256xf32>
    %cst_212 = arith.constant 4.471500e-02 : f32
    %440 = vector.broadcast %cst_212 : f32 to vector<16x256xf32>
    %441 = arith.mulf %440, %439 : vector<16x256xf32>
    %442 = arith.addf %437, %441 : vector<16x256xf32>
    %cst_213 = arith.constant 0.797884583 : f32
    %443 = vector.broadcast %cst_213 : f32 to vector<16x256xf32>
    %444 = arith.mulf %443, %442 : vector<16x256xf32>
    %445 = math.tanh %444 : vector<16x256xf32>
    %cst_214 = arith.constant 1.000000e+00 : f32
    %446 = vector.broadcast %cst_214 : f32 to vector<16x256xf32>
    %447 = arith.addf %446, %445 : vector<16x256xf32>
    %cst_215 = arith.constant 5.000000e-01 : f32
    %448 = vector.broadcast %cst_215 : f32 to vector<16x256xf32>
    %449 = arith.mulf %448, %447 : vector<16x256xf32>
    %450 = arith.mulf %437, %449 : vector<16x256xf32>
    %451 = arith.truncf %450 : vector<16x256xf32> to vector<16x256xbf16>
    %452 = tpu.concatenate %429, %451 in 1 : vector<16x256xbf16>, vector<16x256xbf16> -> vector<16x512xbf16>
    %c5_216 = arith.constant 5 : index
    %c0_217 = arith.constant 0 : index
    %c0_218 = arith.constant 0 : index
    %453 = vector.load %arg4[%c5_216, %c0_217, %c0_218] : memref<6x512x128xbf16, #tpu.memory_space<vmem>>, vector<1x512x128xbf16>
    %454 = vector.shape_cast %453 : vector<1x512x128xbf16> to vector<512x128xbf16>
    %cst_219 = arith.constant dense<0.000000e+00> : vector<16x128xf32>
    %455 = tpu.matmul %452, %454, %cst_219 {dimension_numbers = #tpu.dot_dimension_numbers<[1], [0], [0], [1], [0, 0, 1, 1], [], []>} : vector<16x512xbf16>, vector<512x128xbf16>, vector<16x128xf32> -> vector<16x128xf32>
    %c5_220 = arith.constant 5 : index
    %c0_221 = arith.constant 0 : index
    %c0_222 = arith.constant 0 : index
    %456 = vector.load %arg5[%c5_220, %c0_221, %c0_222] : memref<6x1x128xbf16, #tpu.memory_space<vmem>>, vector<1x1x128xbf16>
    %457 = vector.shape_cast %456 : vector<1x1x128xbf16> to vector<1x128xbf16>
    %458 = arith.extf %457 : vector<1x128xbf16> to vector<1x128xf32>
    %459 = vector.broadcast %458 : vector<1x128xf32> to vector<16x128xf32>
    %460 = arith.addf %455, %459 : vector<16x128xf32>
    %461 = arith.addf %460, %406 : vector<16x128xf32>
    %462 = arith.truncf %461 : vector<16x128xf32> to vector<16x128xbf16>
    %c0_223 = arith.constant 0 : index
    %c0_224 = arith.constant 0 : index
    %463 = vector.load %arg8[%c0_223, %c0_224] : memref<16x128xbf16, #tpu.memory_space<vmem>>, vector<16x128xbf16>
    tpu.vector_store %arg8[%c0_223, %c0_224], %462 {strides = array<i32>} : memref<16x128xbf16, #tpu.memory_space<vmem>>, vector<16x128xbf16>,
    return
  }
  func.func @transform_0(%arg0: i32) -> (i32, i32) {
    %c0_i32 = arith.constant 0 : i32
    %c0_i32_0 = arith.constant 0 : i32
    return %arg0, %c0_i32 : i32, i32
  }
  func.func @transform_1(%arg0: i32) -> (i32, i32, i32) {
    %c0_i32 = arith.constant 0 : i32
    %c0_i32_0 = arith.constant 0 : i32
    %c0_i32_1 = arith.constant 0 : i32
    %c0_i32_2 = arith.constant 0 : i32
    return %c0_i32, %c0_i32_0, %c0_i32_1 : i32, i32, i32
  }
  func.func @transform_2(%arg0: i32) -> (i32, i32, i32) {
    %c0_i32 = arith.constant 0 : i32
    %c0_i32_0 = arith.constant 0 : i32
    %c0_i32_1 = arith.constant 0 : i32
    %c0_i32_2 = arith.constant 0 : i32
    return %c0_i32, %c0_i32_0, %c0_i32_1 : i32, i32, i32
  }
  func.func @transform_3(%arg0: i32) -> (i32, i32, i32) {
    %c0_i32 = arith.constant 0 : i32
    %c0_i32_0 = arith.constant 0 : i32
    %c0_i32_1 = arith.constant 0 : i32
    %c0_i32_2 = arith.constant 0 : i32
    return %c0_i32, %c0_i32_0, %c0_i32_1 : i32, i32, i32
  }
  func.func @transform_4(%arg0: i32) -> (i32, i32, i32) {
    %c0_i32 = arith.constant 0 : i32
    %c0_i32_0 = arith.constant 0 : i32
    %c0_i32_1 = arith.constant 0 : i32
    %c0_i32_2 = arith.constant 0 : i32
    return %c0_i32, %c0_i32_0, %c0_i32_1 : i32, i32, i32
  }
  func.func @transform_5(%arg0: i32) -> (i32, i32, i32) {
    %c0_i32 = arith.constant 0 : i32
    %c0_i32_0 = arith.constant 0 : i32
    %c0_i32_1 = arith.constant 0 : i32
    %c0_i32_2 = arith.constant 0 : i32
    return %c0_i32, %c0_i32_0, %c0_i32_1 : i32, i32, i32
  }
  func.func @transform_6(%arg0: i32) -> (i32, i32, i32) {
    %c0_i32 = arith.constant 0 : i32
    %c0_i32_0 = arith.constant 0 : i32
    %c0_i32_1 = arith.constant 0 : i32
    %c0_i32_2 = arith.constant 0 : i32
    return %c0_i32, %c0_i32_0, %c0_i32_1 : i32, i32, i32
  }
  func.func @transform_7(%arg0: i32) -> (i32, i32) {
    %c0_i32 = arith.constant 0 : i32
    %c0_i32_0 = arith.constant 0 : i32
    return %arg0, %c0_i32 : i32, i32
  }
}

</mosaic_0001>

<llo_original>
// kernel: masoa_net.1
$region0: #{masoa_net.1}
  #allocation0 [shape = 'u32[]', space=smem, size = 0x4, offset = 0x4, fixed_abs, tag = 'smem constant byte address 0x4 - core index']
  #allocation1 [shape = 'u32[144,128]{1,0:T(1,128)}', space=vmem, size = 0x12000, scoped, tag = 'internal scratch']
  %s0 = inlined_call_operand.vmem [shape: bf16[16,128], index: 0, kind: input, shape index: {}]
  %s1 = inlined_call_operand.hbm [shape: bf16[6,128,512], index: 1, kind: input, shape index: {}]
  %s2 = inlined_call_operand.vmem [shape: bf16[6,1,512], index: 2, kind: input, shape index: {}]
  %s3 = inlined_call_operand.hbm [shape: bf16[6,512,128], index: 3, kind: input, shape index: {}]
  %s4 = inlined_call_operand.vmem [shape: bf16[6,1,128], index: 4, kind: input, shape index: {}]
  %s5 = inlined_call_operand.vmem [shape: f32[5,1,128], index: 5, kind: input, shape index: {}]
  %s6 = inlined_call_operand.vmem [shape: f32[5,1,128], index: 6, kind: input, shape index: {}]
  %s7 = inlined_call_operand.hbm [shape: bf16[16,128], index: 7, kind: output, shape index: {}]
  %s8 = sld [smem:[#allocation0]]
  $region46: #{masoa_net.1} parent=0
    _
  %s10 = ssub.s32 1, %s8
  %s11 = scalar_select 0, %s10, %s8
  $region1: #{masoa_net.1} parent=0
    #allocation2 [shape = 'u8[786432]{0}', space=vmem, size = 0xc0000, scoped, tag = 'input window, operand 1, single buffered']
    #allocation3 [shape = 's32[1]{0}', space=sflag, size = 0x4, scoped, tag = 'scoped memory for masoa_net.1']
    #allocation4 [shape = 's32[1]{0}', space=sflag, size = 0x4, scoped, tag = 'scoped memory for masoa_net.1']
    #allocation5 [shape = 'u8[786432]{0}', space=vmem, size = 0xc0000, scoped, tag = 'input window, operand 3, single buffered']
    #allocation6 [shape = 's32[1]{0}', space=sflag, size = 0x4, scoped, tag = 'scoped memory for masoa_net.1']
    #allocation7 [shape = 'u8[4096]{0}', space=vmem, size = 0x1000, scoped, tag = 'output window, operand 0, single buffered']
    %12 = vsyncpa [#allocation3], 0
    %13 = vsyncpa [#allocation6], 0
    %14 = vsyncpa [#allocation4], 0
    // Predicated region
    $region2: #{masoa_net.1} parent=1 // pred_check
      _
    $region3: #{masoa_net.1} parent=1 // pred_check_branch
      %16 = sbr.rel (0) target = $region5
    $region4: #{masoa_net.1} parent=1 // pred_region
      _
    $region5: #{masoa_net.1} parent=1 // pred_fallthru
      _
    // Predicated region
    $region6: #{masoa_net.1} parent=1 // pred_check
      _
    $region7: #{masoa_net.1} parent=1 // pred_check_branch
      %18 = sbr.rel (0) target = $region9
    $region8: #{masoa_net.1} parent=1 // pred_region
      %s20 = ssub.s32 24576, 24576
      %21 = vsyncadd [#allocation3], %s20
      %s22 = sshll.u32 [#allocation2], 4
      %s23 = int_to_ptr.vmem [resolvable:$true] %s22
      %28 = dma.hbm_to_vmem [thread:$0]  %s1, 24576, %s23, [#allocation3], 256, 256, 16
    $region9: #{masoa_net.1} parent=1 // pred_fallthru
      _
    // Predicated region
    $region10: #{masoa_net.1} parent=1 // pred_check
      _
    $region11: #{masoa_net.1} parent=1 // pred_check_branch
      %30 = sbr.rel (0) target = $region13
    $region12: #{masoa_net.1} parent=1 // pred_region
      _
    $region13: #{masoa_net.1} parent=1 // pred_fallthru
      _
    // Predicated region
    $region14: #{masoa_net.1} parent=1 // pred_check
      _
    $region15: #{masoa_net.1} parent=1 // pred_check_branch
      %32 = sbr.rel (0) target = $region17
    $region16: #{masoa_net.1} parent=1 // pred_region
      %s34 = ssub.s32 24576, 24576
      %35 = vsyncadd [#allocation6], %s34
      %s36 = sshll.u32 [#allocation5], 4
      %s37 = int_to_ptr.vmem [resolvable:$true] %s36
      %42 = dma.hbm_to_vmem [thread:$0]  %s3, 24576, %s37, [#allocation6], 64, 64, 4
    $region17: #{masoa_net.1} parent=1 // pred_fallthru
      _
    // Predicated region
    $region18: #{masoa_net.1} parent=1 // pred_check
      _
    $region19: #{masoa_net.1} parent=1 // pred_check_branch
      %44 = sbr.rel (0) target = $region21
    $region20: #{masoa_net.1} parent=1 // pred_region
      _
    $region21: #{masoa_net.1} parent=1 // pred_fallthru
      _
    // Predicated region
    $region22: #{masoa_net.1} parent=1 // pred_check
      _
    $region23: #{masoa_net.1} parent=1 // pred_check_branch
      %46 = sbr.rel (0) target = $region25
    $region24: #{masoa_net.1} parent=1 // pred_region
      _
    $region25: #{masoa_net.1} parent=1 // pred_fallthru
      _
    // Predicated region
    $region26: #{masoa_net.1} parent=1 // pred_check
      _
    $region27: #{masoa_net.1} parent=1 // pred_check_branch
      %48 = sbr.rel (0) target = $region29
    $region28: #{masoa_net.1} parent=1 // pred_region
      _
    $region29: #{masoa_net.1} parent=1 // pred_fallthru
      _
    // Predicated region
    $region30: #{masoa_net.1} parent=1 // pred_check
      _
    $region31: #{masoa_net.1} parent=1 // pred_check_branch
      %50 = sbr.rel (0) target = $region33
    $region32: #{masoa_net.1} parent=1 // pred_region
      %51 = dma.done [#allocation3], 24576
    $region33: #{masoa_net.1} parent=1 // pred_fallthru
      _
    // Predicated region
    $region34: #{masoa_net.1} parent=1 // pred_check
      _
    $region35: #{masoa_net.1} parent=1 // pred_check_branch
      %53 = sbr.rel (0) target = $region37
    $region36: #{masoa_net.1} parent=1 // pred_region
      %54 = dma.done [#allocation6], 24576
    $region37: #{masoa_net.1} parent=1 // pred_fallthru
      _
    %v56 = vld [vmem:[%s0] sm:$0xf]
    %v57 = vld [vmem:[%s0 + $0x4] sm:$0xf]
    %v58 = vunpack.c.l.bf16 %v56
    %v59 = vunpack.c.l.bf16 %v57
    %v60 = vld [vmem:[#allocation2] sm:$0xff]
    %v61 = vld [vmem:[#allocation2 + $0x10] sm:$0xff]
    %v62 = vld [vmem:[#allocation2 + $0x20] sm:$0xff]
    %v63 = vld [vmem:[#allocation2 + $0x30] sm:$0xff]
    %v64 = vld [vmem:[#allocation2 + $0x40] sm:$0xff]
    %v65 = vld [vmem:[#allocation2 + $0x50] sm:$0xff]
    %v66 = vld [vmem:[#allocation2 + $0x60] sm:$0xff]
    %v67 = vld [vmem:[#allocation2 + $0x70] sm:$0xff]
    %v68 = vld [vmem:[#allocation2 + $0x80] sm:$0xff]
    %v69 = vld [vmem:[#allocation2 + $0x90] sm:$0xff]
    %v70 = vld [vmem:[#allocation2 + $0xa0] sm:$0xff]
    %v71 = vld [vmem:[#allocation2 + $0xb0] sm:$0xff]
    %v72 = vld [vmem:[#allocation2 + $0xc0] sm:$0xff]
    %v73 = vld [vmem:[#allocation2 + $0xd0] sm:$0xff]
    %v74 = vld [vmem:[#allocation2 + $0xe0] sm:$0xff]
    %v75 = vld [vmem:[#allocation2 + $0xf0] sm:$0xff]
    %v76 = vld [vmem:[%s2] sm:$0x3]
    %v77 = vunpack.c.l.bf16 %v76
    %v79 = vlaneseq
    %v80 = vshrl.u32 %v79, 7
    %v81 = vsub.s32 0, %v80
    %v82 = vrot.slane %v77, %v81
    %v83 = vlaneseq
    %v84 = vshrl.u32 %v83, 7
    %v85 = vsub.s32 2, %v84
    %v86 = vrot.slane %v77, %v85
    %v89 = vlaneseq
    %v90 = vshrl.u32 %v89, 7
    %v91 = vsub.s32 0, %v90
    %v92 = vrot.slane %v82, %v91
    %v93 = vlaneseq
    %v94 = vshrl.u32 %v93, 7
    %v95 = vsub.s32 0, %v94
    %v96 = vrot.slane %v86, %v95
    %v99 = vunpack.c.l.b16 %v56
    %v100 = vunpack.c.l.b16 %v57
    %v101 = vpack.c.b16 %v100, %v99
    %v119 = vunpack.c.l.b16 %v60
    %v120 = vunpack.c.h.b16 %v60
    %v121 = vunpack.c.l.b16 %v61
    %v122 = vunpack.c.h.b16 %v61
    %v123 = vunpack.c.l.b16 %v62
    %v124 = vunpack.c.h.b16 %v62
    %v125 = vunpack.c.l.b16 %v63
    %v126 = vunpack.c.h.b16 %v63
    %v127 = vunpack.c.l.b16 %v64
    %v128 = vunpack.c.h.b16 %v64
    %v129 = vunpack.c.l.b16 %v65
    %v130 = vunpack.c.h.b16 %v65
    %v131 = vunpack.c.l.b16 %v66
    %v132 = vunpack.c.h.b16 %v66
    %v133 = vunpack.c.l.b16 %v67
    %v134 = vunpack.c.h.b16 %v67
    %v135 = vunpack.c.l.b16 %v68
    %v136 = vunpack.c.h.b16 %v68
    %v137 = vunpack.c.l.b16 %v69
    %v138 = vunpack.c.h.b16 %v69
    %v139 = vunpack.c.l.b16 %v70
    %v140 = vunpack.c.h.b16 %v70
    %v141 = vunpack.c.l.b16 %v71
    %v142 = vunpack.c.h.b16 %v71
    %v143 = vunpack.c.l.b16 %v72
    %v144 = vunpack.c.h.b16 %v72
    %v145 = vunpack.c.l.b16 %v73
    %v146 = vunpack.c.h.b16 %v73
    %v147 = vunpack.c.l.b16 %v74
    %v148 = vunpack.c.h.b16 %v74
    %v149 = vunpack.c.l.b16 %v75
    %v150 = vunpack.c.h.b16 %v75
    %v151 = vpack.c.b16 %v121, %v119
    %v152 = vpack.c.b16 %v122, %v120
    %v153 = vpack.c.b16 %v125, %v123
    %v154 = vpack.c.b16 %v126, %v124
    %v155 = vpack.c.b16 %v129, %v127
    %v156 = vpack.c.b16 %v130, %v128
    %v157 = vpack.c.b16 %v133, %v131
    %v158 = vpack.c.b16 %v134, %v132
    %v159 = vpack.c.b16 %v137, %v135
    %v160 = vpack.c.b16 %v138, %v136
    %v161 = vpack.c.b16 %v141, %v139
    %v162 = vpack.c.b16 %v142, %v140
    %v163 = vpack.c.b16 %v145, %v143
    %v164 = vpack.c.b16 %v146, %v144
    %v165 = vpack.c.b16 %v149, %v147
    %v166 = vpack.c.b16 %v150, %v148
    %183 = vmatprep.subr.bf16.mxu0 %v152
    %184 = vmatpush1.bf16.msra.mxu0 %v151
    %185 = vmatprep.subr.bf16.mxu0 %v154
    %186 = vmatpush1.bf16.msra.mxu0 %v153
    %187 = vmatprep.subr.bf16.mxu0 %v156
    %188 = vmatpush1.bf16.msra.mxu0 %v155
    %189 = vmatprep.subr.bf16.mxu0 %v158
    %190 = vmatpush1.bf16.msra.mxu0 %v157
    %191 = vmatprep.subr.bf16.mxu0 %v160
    %192 = vmatpush1.bf16.msra.mxu0 %v159
    %193 = vmatprep.subr.bf16.mxu0 %v162
    %194 = vmatpush1.bf16.msra.mxu0 %v161
    %195 = vmatprep.subr.bf16.mxu0 %v164
    %196 = vmatpush1.bf16.msra.mxu0 %v163
    %197 = vmatprep.subr.bf16.mxu0 %v166
    %198 = vmatpush1.bf16.msra.mxu0 %v165
    %199 = vmatprep.subr.bf16.mxu0 0
    %200 = vmatpush1.bf16.msra.mxu0 0
    %201 = vmatprep.subr.bf16.mxu0 0
    %202 = vmatpush1.bf16.msra.mxu0 0
    %203 = vmatprep.subr.bf16.mxu0 0
    %204 = vmatpush1.bf16.msra.mxu0 0
    %205 = vmatprep.subr.bf16.mxu0 0
    %206 = vmatpush1.bf16.msra.mxu0 0
    %207 = vmatprep.subr.bf16.mxu0 0
    %208 = vmatpush1.bf16.msra.mxu0 0
    %209 = vmatprep.subr.bf16.mxu0 0
    %210 = vmatpush1.bf16.msra.mxu0 0
    %211 = vmatprep.subr.bf16.mxu0 0
    %212 = vmatpush1.bf16.msra.mxu0 0
    %213 = vmatprep.subr.bf16.mxu0 0
    %214 = vmatpush1.bf16.msra.mxu0 0
    %215 = vmatprep.mubr.bf16.mxu0 0
    %216 = vmatmul.mubr.bf16.gmra.mrb[0].mxu0 %v101
    %v217 = vpop.f32.mrb[0].mxu0
    %v218 = vadd.f32 %v92, %v217
    %v219 = vpop.f32.mrb[0].mxu0
    %v220 = vadd.f32 %v96, %v219
    %v221 = vpop.f32.mrb[0].mxu0
    %v222 = vadd.f32 %v92, %v221
    %v223 = vpop.f32.mrb[0].mxu0
    %v224 = vadd.f32 %v96, %v223
    %225 = vdwg.mxu0
    %v226 = vmul.f32 %v218, %v218
    %v227 = vmul.f32 %v220, %v220
    %v228 = vmul.f32 %v222, %v222
    %v229 = vmul.f32 %v224, %v224
    %v230 = vmul.f32 %v218, %v226
    %v231 = vmul.f32 %v220, %v227
    %v232 = vmul.f32 %v222, %v228
    %v233 = vmul.f32 %v224, %v229
    %v234 = vmul.f32 %v230, 0.044715
    %v235 = vmul.f32 %v231, 0.044715
    %v236 = vmul.f32 %v232, 0.044715
    %v237 = vmul.f32 %v233, 0.044715
    %v238 = vadd.f32 %v218, %v234
    %v239 = vadd.f32 %v220, %v235
    %v240 = vadd.f32 %v222, %v236
    %v241 = vadd.f32 %v224, %v237
    %v242 = vmul.f32 %v238, 0.7978846
    %v243 = vmul.f32 %v239, 0.7978846
    %v244 = vmul.f32 %v240, 0.7978846
    %v245 = vmul.f32 %v241, 0.7978846
    %v246 = vtanh.pop %v242
    %v247 = vtanh.pop %v243
    %v248 = vtanh.pop %v244
    %v249 = vtanh.pop %v245
    %v250 = vadd.f32 %v246, 1.0
    %v251 = vadd.f32 %v247, 1.0
    %v252 = vadd.f32 %v248, 1.0
    %v253 = vadd.f32 %v249, 1.0
    %v254 = vmul.f32 %v250, 0.5
    %v255 = vmul.f32 %v251, 0.5
    %v256 = vmul.f32 %v252, 0.5
    %v257 = vmul.f32 %v253, 0.5
    %v258 = vmul.f32 %v218, %v254
    %v259 = vmul.f32 %v220, %v255
    %v260 = vmul.f32 %v222, %v256
    %v261 = vmul.f32 %v224, %v257
    %v262 = vpack.c.bf16 %v260, %v258
    %v263 = vpack.c.bf16 %v261, %v259
    %v264 = vld [vmem:[#allocation2 + $0x8] sm:$0xff]
    %v265 = vld [vmem:[#allocation2 + $0x18] sm:$0xff]
    %v266 = vld [vmem:[#allocation2 + $0x28] sm:$0xff]
    %v267 = vld [vmem:[#allocation2 + $0x38] sm:$0xff]
    %v268 = vld [vmem:[#allocation2 + $0x48] sm:$0xff]
    %v269 = vld [vmem:[#allocation2 + $0x58] sm:$0xff]
    %v270 = vld [vmem:[#allocation2 + $0x68] sm:$0xff]
    %v271 = vld [vmem:[#allocation2 + $0x78] sm:$0xff]
    %v272 = vld [vmem:[#allocation2 + $0x88] sm:$0xff]
    %v273 = vld [vmem:[#allocation2 + $0x98] sm:$0xff]
    %v274 = vld [vmem:[#allocation2 + $0xa8] sm:$0xff]
    %v275 = vld [vmem:[#allocation2 + $0xb8] sm:$0xff]
    %v276 = vld [vmem:[#allocation2 + $0xc8] sm:$0xff]
    %v277 = vld [vmem:[#allocation2 + $0xd8] sm:$0xff]
    %v278 = vld [vmem:[#allocation2 + $0xe8] sm:$0xff]
    %v279 = vld [vmem:[#allocation2 + $0xf8] sm:$0xff]
    %v280 = vld [vmem:[%s2 + $0x2] sm:$0x3]
    %v281 = vunpack.c.l.bf16 %v280
    %v283 = vlaneseq
    %v284 = vshrl.u32 %v283, 7
    %v285 = vsub.s32 0, %v284
    %v286 = vrot.slane %v281, %v285
    %v287 = vlaneseq
    %v288 = vshrl.u32 %v287, 7
    %v289 = vsub.s32 2, %v288
    %v290 = vrot.slane %v281, %v289
    %v293 = vlaneseq
    %v294 = vshrl.u32 %v293, 7
    %v295 = vsub.s32 0, %v294
    %v296 = vrot.slane %v286, %v295
    %v297 = vlaneseq
    %v298 = vshrl.u32 %v297, 7
    %v299 = vsub.s32 0, %v298
    %v300 = vrot.slane %v290, %v299
    %v317 = vunpack.c.l.b16 %v264
    %v318 = vunpack.c.h.b16 %v264
    %v319 = vunpack.c.l.b16 %v265
    %v320 = vunpack.c.h.b16 %v265
    %v321 = vunpack.c.l.b16 %v266
    %v322 = vunpack.c.h.b16 %v266
    %v323 = vunpack.c.l.b16 %v267
    %v324 = vunpack.c.h.b16 %v267
    %v325 = vunpack.c.l.b16 %v268
    %v326 = vunpack.c.h.b16 %v268
    %v327 = vunpack.c.l.b16 %v269
    %v328 = vunpack.c.h.b16 %v269
    %v329 = vunpack.c.l.b16 %v270
    %v330 = vunpack.c.h.b16 %v270
    %v331 = vunpack.c.l.b16 %v271
    %v332 = vunpack.c.h.b16 %v271
    %v333 = vunpack.c.l.b16 %v272
    %v334 = vunpack.c.h.b16 %v272
    %v335 = vunpack.c.l.b16 %v273
    %v336 = vunpack.c.h.b16 %v273
    %v337 = vunpack.c.l.b16 %v274
    %v338 = vunpack.c.h.b16 %v274
    %v339 = vunpack.c.l.b16 %v275
    %v340 = vunpack.c.h.b16 %v275
    %v341 = vunpack.c.l.b16 %v276
    %v342 = vunpack.c.h.b16 %v276
    %v343 = vunpack.c.l.b16 %v277
    %v344 = vunpack.c.h.b16 %v277
    %v345 = vunpack.c.l.b16 %v278
    %v346 = vunpack.c.h.b16 %v278
    %v347 = vunpack.c.l.b16 %v279
    %v348 = vunpack.c.h.b16 %v279
    %v349 = vpack.c.b16 %v319, %v317
    %v350 = vpack.c.b16 %v320, %v318
    %v351 = vpack.c.b16 %v323, %v321
    %v352 = vpack.c.b16 %v324, %v322
    %v353 = vpack.c.b16 %v327, %v325
    %v354 = vpack.c.b16 %v328, %v326
    %v355 = vpack.c.b16 %v331, %v329
    %v356 = vpack.c.b16 %v332, %v330
    %v357 = vpack.c.b16 %v335, %v333
    %v358 = vpack.c.b16 %v336, %v334
    %v359 = vpack.c.b16 %v339, %v337
    %v360 = vpack.c.b16 %v340, %v338
    %v361 = vpack.c.b16 %v343, %v341
    %v362 = vpack.c.b16 %v344, %v342
    %v363 = vpack.c.b16 %v347, %v345
    %v364 = vpack.c.b16 %v348, %v346
    %381 = vmatprep.subr.bf16.mxu0 %v350
    %382 = vmatpush1.bf16.msra.mxu0 %v349
    %383 = vmatprep.subr.bf16.mxu0 %v352
    %384 = vmatpush1.bf16.msra.mxu0 %v351
    %385 = vmatprep.subr.bf16.mxu0 %v354
    %386 = vmatpush1.bf16.msra.mxu0 %v353
    %387 = vmatprep.subr.bf16.mxu0 %v356
    %388 = vmatpush1.bf16.msra.mxu0 %v355
    %389 = vmatprep.subr.bf16.mxu0 %v358
    %390 = vmatpush1.bf16.msra.mxu0 %v357
    %391 = vmatprep.subr.bf16.mxu0 %v360
    %392 = vmatpush1.bf16.msra.mxu0 %v359
    %393 = vmatprep.subr.bf16.mxu0 %v362
    %394 = vmatpush1.bf16.msra.mxu0 %v361
    %395 = vmatprep.subr.bf16.mxu0 %v364
    %396 = vmatpush1.bf16.msra.mxu0 %v363
    %397 = vmatprep.subr.bf16.mxu0 0
    %398 = vmatpush1.bf16.msra.mxu0 0
    %399 = vmatprep.subr.bf16.mxu0 0
    %400 = vmatpush1.bf16.msra.mxu0 0
    %401 = vmatprep.subr.bf16.mxu0 0
    %402 = vmatpush1.bf16.msra.mxu0 0
    %403 = vmatprep.subr.bf16.mxu0 0
    %404 = vmatpush1.bf16.msra.mxu0 0
    %405 = vmatprep.subr.bf16.mxu0 0
    %406 = vmatpush1.bf16.msra.mxu0 0
    %407 = vmatprep.subr.bf16.mxu0 0
    %408 = vmatpush1.bf16.msra.mxu0 0
    %409 = vmatprep.subr.bf16.mxu0 0
    %410 = vmatpush1.bf16.msra.mxu0 0
    %411 = vmatprep.subr.bf16.mxu0 0
    %412 = vmatpush1.bf16.msra.mxu0 0
    %413 = vmatprep.mubr.bf16.mxu0 0
    %414 = vmatmul.mubr.bf16.gmra.mrb[0].mxu0 %v101
    %v415 = vpop.f32.mrb[0].mxu0
    %v416 = vadd.f32 %v296, %v415
    %v417 = vpop.f32.mrb[0].mxu0
    %v418 = vadd.f32 %v300, %v417
    %v419 = vpop.f32.mrb[0].mxu0
    %v420 = vadd.f32 %v296, %v419
    %v421 = vpop.f32.mrb[0].mxu0
    %v422 = vadd.f32 %v300, %v421
    %423 = vdwg.mxu0
    %v424 = vmul.f32 %v416, %v416
    %v425 = vmul.f32 %v418, %v418
    %v426 = vmul.f32 %v420, %v420
    %v427 = vmul.f32 %v422, %v422
    %v428 = vmul.f32 %v416, %v424
    %v429 = vmul.f32 %v418, %v425
    %v430 = vmul.f32 %v420, %v426
    %v431 = vmul.f32 %v422, %v427
    %v432 = vmul.f32 %v428, 0.044715
    %v433 = vmul.f32 %v429, 0.044715
    %v434 = vmul.f32 %v430, 0.044715
    %v435 = vmul.f32 %v431, 0.044715
    %v436 = vadd.f32 %v416, %v432
    %v437 = vadd.f32 %v418, %v433
    %v438 = vadd.f32 %v420, %v434
    %v439 = vadd.f32 %v422, %v435
    %v440 = vmul.f32 %v436, 0.7978846
    %v441 = vmul.f32 %v437, 0.7978846
    %v442 = vmul.f32 %v438, 0.7978846
    %v443 = vmul.f32 %v439, 0.7978846
    %v444 = vtanh.pop %v440
    %v445 = vtanh.pop %v441
    %v446 = vtanh.pop %v442
    %v447 = vtanh.pop %v443
    %v448 = vadd.f32 %v444, 1.0
    %v449 = vadd.f32 %v445, 1.0
    %v450 = vadd.f32 %v446, 1.0
    %v451 = vadd.f32 %v447, 1.0
    %v452 = vmul.f32 %v448, 0.5
    %v453 = vmul.f32 %v449, 0.5
    %v454 = vmul.f32 %v450, 0.5
    %v455 = vmul.f32 %v451, 0.5
    %v456 = vmul.f32 %v416, %v452
    %v457 = vmul.f32 %v418, %v453
    %v458 = vmul.f32 %v420, %v454
    %v459 = vmul.f32 %v422, %v455
    %v460 = vpack.c.bf16 %v458, %v456
    %v461 = vpack.c.bf16 %v459, %v457
    %v462 = vld [vmem:[#allocation5] sm:$0xf]
    %v463 = vld [vmem:[#allocation5 + $0x4] sm:$0xf]
    %v464 = vld [vmem:[#allocation5 + $0x8] sm:$0xf]
    %v465 = vld [vmem:[#allocation5 + $0xc] sm:$0xf]
    %v466 = vld [vmem:[#allocation5 + $0x10] sm:$0xf]
    %v467 = vld [vmem:[#allocation5 + $0x14] sm:$0xf]
    %v468 = vld [vmem:[#allocation5 + $0x18] sm:$0xf]
    %v469 = vld [vmem:[#allocation5 + $0x1c] sm:$0xf]
    %v470 = vld [vmem:[#allocation5 + $0x20] sm:$0xf]
    %v471 = vld [vmem:[#allocation5 + $0x24] sm:$0xf]
    %v472 = vld [vmem:[#allocation5 + $0x28] sm:$0xf]
    %v473 = vld [vmem:[#allocation5 + $0x2c] sm:$0xf]
    %v474 = vld [vmem:[#allocation5 + $0x30] sm:$0xf]
    %v475 = vld [vmem:[#allocation5 + $0x34] sm:$0xf]
    %v476 = vld [vmem:[#allocation5 + $0x38] sm:$0xf]
    %v477 = vld [vmem:[#allocation5 + $0x3c] sm:$0xf]
    %v478 = vld [vmem:[#allocation5 + $0x40] sm:$0xf]
    %v479 = vld [vmem:[#allocation5 + $0x44] sm:$0xf]
    %v480 = vld [vmem:[#allocation5 + $0x48] sm:$0xf]
    %v481 = vld [vmem:[#allocation5 + $0x4c] sm:$0xf]
    %v482 = vld [vmem:[#allocation5 + $0x50] sm:$0xf]
    %v483 = vld [vmem:[#allocation5 + $0x54] sm:$0xf]
    %v484 = vld [vmem:[#allocation5 + $0x58] sm:$0xf]
    %v485 = vld [vmem:[#allocation5 + $0x5c] sm:$0xf]
    %v486 = vld [vmem:[#allocation5 + $0x60] sm:$0xf]
    %v487 = vld [vmem:[#allocation5 + $0x64] sm:$0xf]
    %v488 = vld [vmem:[#allocation5 + $0x68] sm:$0xf]
    %v489 = vld [vmem:[#allocation5 + $0x6c] sm:$0xf]
    %v490 = vld [vmem:[#allocation5 + $0x70] sm:$0xf]
    %v491 = vld [vmem:[#allocation5 + $0x74] sm:$0xf]
    %v492 = vld [vmem:[#allocation5 + $0x78] sm:$0xf]
    %v493 = vld [vmem:[#allocation5 + $0x7c] sm:$0xf]
    %v494 = vld [vmem:[#allocation5 + $0x80] sm:$0xf]
    %v495 = vld [vmem:[#allocation5 + $0x84] sm:$0xf]
    %v496 = vld [vmem:[#allocation5 + $0x88] sm:$0xf]
    %v497 = vld [vmem:[#allocation5 + $0x8c] sm:$0xf]
    %v498 = vld [vmem:[#allocation5 + $0x90] sm:$0xf]
    %v499 = vld [vmem:[#allocation5 + $0x94] sm:$0xf]
    %v500 = vld [vmem:[#allocation5 + $0x98] sm:$0xf]
    %v501 = vld [vmem:[#allocation5 + $0x9c] sm:$0xf]
    %v502 = vld [vmem:[#allocation5 + $0xa0] sm:$0xf]
    %v503 = vld [vmem:[#allocation5 + $0xa4] sm:$0xf]
    %v504 = vld [vmem:[#allocation5 + $0xa8] sm:$0xf]
    %v505 = vld [vmem:[#allocation5 + $0xac] sm:$0xf]
    %v506 = vld [vmem:[#allocation5 + $0xb0] sm:$0xf]
    %v507 = vld [vmem:[#allocation5 + $0xb4] sm:$0xf]
    %v508 = vld [vmem:[#allocation5 + $0xb8] sm:$0xf]
    %v509 = vld [vmem:[#allocation5 + $0xbc] sm:$0xf]
    %v510 = vld [vmem:[#allocation5 + $0xc0] sm:$0xf]
    %v511 = vld [vmem:[#allocation5 + $0xc4] sm:$0xf]
    %v512 = vld [vmem:[#allocation5 + $0xc8] sm:$0xf]
    %v513 = vld [vmem:[#allocation5 + $0xcc] sm:$0xf]
    %v514 = vld [vmem:[#allocation5 + $0xd0] sm:$0xf]
    %v515 = vld [vmem:[#allocation5 + $0xd4] sm:$0xf]
    %v516 = vld [vmem:[#allocation5 + $0xd8] sm:$0xf]
    %v517 = vld [vmem:[#allocation5 + $0xdc] sm:$0xf]
    %v518 = vld [vmem:[#allocation5 + $0xe0] sm:$0xf]
    %v519 = vld [vmem:[#allocation5 + $0xe4] sm:$0xf]
    %v520 = vld [vmem:[#allocation5 + $0xe8] sm:$0xf]
    %v521 = vld [vmem:[#allocation5 + $0xec] sm:$0xf]
    %v522 = vld [vmem:[#allocation5 + $0xf0] sm:$0xf]
    %v523 = vld [vmem:[#allocation5 + $0xf4] sm:$0xf]
    %v524 = vld [vmem:[#allocation5 + $0xf8] sm:$0xf]
    %v525 = vld [vmem:[#allocation5 + $0xfc] sm:$0xf]
    %v526 = vld [vmem:[%s4] sm:$0x1]
    %v527 = vunpack.c.l.bf16 %v526
    %v528 = vlaneseq
    %v529 = vshrl.u32 %v528, 7
    %v530 = vsub.s32 0, %v529
    %v531 = vrot.slane %v527, %v530
    %v596 = vunpack.c.l.b16 %v462
    %v597 = vunpack.c.l.b16 %v463
    %v598 = vunpack.c.l.b16 %v464
    %v599 = vunpack.c.l.b16 %v465
    %v600 = vunpack.c.l.b16 %v466
    %v601 = vunpack.c.l.b16 %v467
    %v602 = vunpack.c.l.b16 %v468
    %v603 = vunpack.c.l.b16 %v469
    %v604 = vunpack.c.l.b16 %v470
    %v605 = vunpack.c.l.b16 %v471
    %v606 = vunpack.c.l.b16 %v472
    %v607 = vunpack.c.l.b16 %v473
    %v608 = vunpack.c.l.b16 %v474
    %v609 = vunpack.c.l.b16 %v475
    %v610 = vunpack.c.l.b16 %v476
    %v611 = vunpack.c.l.b16 %v477
    %v612 = vunpack.c.l.b16 %v478
    %v613 = vunpack.c.l.b16 %v479
    %v614 = vunpack.c.l.b16 %v480
    %v615 = vunpack.c.l.b16 %v481
    %v616 = vunpack.c.l.b16 %v482
    %v617 = vunpack.c.l.b16 %v483
    %v618 = vunpack.c.l.b16 %v484
    %v619 = vunpack.c.l.b16 %v485
    %v620 = vunpack.c.l.b16 %v486
    %v621 = vunpack.c.l.b16 %v487
    %v622 = vunpack.c.l.b16 %v488
    %v623 = vunpack.c.l.b16 %v489
    %v624 = vunpack.c.l.b16 %v490
    %v625 = vunpack.c.l.b16 %v491
    %v626 = vunpack.c.l.b16 %v492
    %v627 = vunpack.c.l.b16 %v493
    %v628 = vunpack.c.l.b16 %v494
    %v629 = vunpack.c.l.b16 %v495
    %v630 = vunpack.c.l.b16 %v496
    %v631 = vunpack.c.l.b16 %v497
    %v632 = vunpack.c.l.b16 %v498
    %v633 = vunpack.c.l.b16 %v499
    %v634 = vunpack.c.l.b16 %v500
    %v635 = vunpack.c.l.b16 %v501
    %v636 = vunpack.c.l.b16 %v502
    %v637 = vunpack.c.l.b16 %v503
    %v638 = vunpack.c.l.b16 %v504
    %v639 = vunpack.c.l.b16 %v505
    %v640 = vunpack.c.l.b16 %v506
    %v641 = vunpack.c.l.b16 %v507
    %v642 = vunpack.c.l.b16 %v508
    %v643 = vunpack.c.l.b16 %v509
    %v644 = vunpack.c.l.b16 %v510
    %v645 = vunpack.c.l.b16 %v511
    %v646 = vunpack.c.l.b16 %v512
    %v647 = vunpack.c.l.b16 %v513
    %v648 = vunpack.c.l.b16 %v514
    %v649 = vunpack.c.l.b16 %v515
    %v650 = vunpack.c.l.b16 %v516
    %v651 = vunpack.c.l.b16 %v517
    %v652 = vunpack.c.l.b16 %v518
    %v653 = vunpack.c.l.b16 %v519
    %v654 = vunpack.c.l.b16 %v520
    %v655 = vunpack.c.l.b16 %v521
    %v656 = vunpack.c.l.b16 %v522
    %v657 = vunpack.c.l.b16 %v523
    %v658 = vunpack.c.l.b16 %v524
    %v659 = vunpack.c.l.b16 %v525
    %v660 = vpack.c.b16 %v597, %v596
    %v661 = vpack.c.b16 %v599, %v598
    %v662 = vpack.c.b16 %v601, %v600
    %v663 = vpack.c.b16 %v603, %v602
    %v664 = vpack.c.b16 %v605, %v604
    %v665 = vpack.c.b16 %v607, %v606
    %v666 = vpack.c.b16 %v609, %v608
    %v667 = vpack.c.b16 %v611, %v610
    %v668 = vpack.c.b16 %v613, %v612
    %v669 = vpack.c.b16 %v615, %v614
    %v670 = vpack.c.b16 %v617, %v616
    %v671 = vpack.c.b16 %v619, %v618
    %v672 = vpack.c.b16 %v621, %v620
    %v673 = vpack.c.b16 %v623, %v622
    %v674 = vpack.c.b16 %v625, %v624
    %v675 = vpack.c.b16 %v627, %v626
    %v676 = vpack.c.b16 %v629, %v628
    %v677 = vpack.c.b16 %v631, %v630
    %v678 = vpack.c.b16 %v633, %v632
    %v679 = vpack.c.b16 %v635, %v634
    %v680 = vpack.c.b16 %v637, %v636
    %v681 = vpack.c.b16 %v639, %v638
    %v682 = vpack.c.b16 %v641, %v640
    %v683 = vpack.c.b16 %v643, %v642
    %v684 = vpack.c.b16 %v645, %v644
    %v685 = vpack.c.b16 %v647, %v646
    %v686 = vpack.c.b16 %v649, %v648
    %v687 = vpack.c.b16 %v651, %v650
    %v688 = vpack.c.b16 %v653, %v652
    %v689 = vpack.c.b16 %v655, %v654
    %v690 = vpack.c.b16 %v657, %v656
    %v691 = vpack.c.b16 %v659, %v658
    %724 = vmatprep.subr.bf16.mxu0 0
    %725 = vmatpush1.bf16.msra.mxu0 %v660
    %726 = vmatprep.subr.bf16.mxu0 0
    %727 = vmatpush1.bf16.msra.mxu0 %v661
    %728 = vmatprep.subr.bf16.mxu0 0
    %729 = vmatpush1.bf16.msra.mxu0 %v662
    %730 = vmatprep.subr.bf16.mxu0 0
    %731 = vmatpush1.bf16.msra.mxu0 %v663
    %732 = vmatprep.subr.bf16.mxu0 0
    %733 = vmatpush1.bf16.msra.mxu0 %v664
    %734 = vmatprep.subr.bf16.mxu0 0
    %735 = vmatpush1.bf16.msra.mxu0 %v665
    %736 = vmatprep.subr.bf16.mxu0 0
    %737 = vmatpush1.bf16.msra.mxu0 %v666
    %738 = vmatprep.subr.bf16.mxu0 0
    %739 = vmatpush1.bf16.msra.mxu0 %v667
    %740 = vmatprep.subr.bf16.mxu0 0
    %741 = vmatpush1.bf16.msra.mxu0 %v668
    %742 = vmatprep.subr.bf16.mxu0 0
    %743 = vmatpush1.bf16.msra.mxu0 %v669
    %744 = vmatprep.subr.bf16.mxu0 0
    %745 = vmatpush1.bf16.msra.mxu0 %v670
    %746 = vmatprep.subr.bf16.mxu0 0
    %747 = vmatpush1.bf16.msra.mxu0 %v671
    %748 = vmatprep.subr.bf16.mxu0 0
    %749 = vmatpush1.bf16.msra.mxu0 %v672
    %750 = vmatprep.subr.bf16.mxu0 0
    %751 = vmatpush1.bf16.msra.mxu0 %v673
    %752 = vmatprep.subr.bf16.mxu0 0
    %753 = vmatpush1.bf16.msra.mxu0 %v674
    %754 = vmatprep.subr.bf16.mxu0 0
    %755 = vmatpush1.bf16.msra.mxu0 %v675
    %756 = vmatprep.mubr.bf16.mxu0 %v263
    %757 = vmatmul.mubr.bf16.gmra.mrb[0].mxu0 %v262
    %v758 = vpop.f32.mrb[0].mxu0
    %v759 = vadd.f32 %v531, %v758
    %v760 = vpop.f32.mrb[0].mxu0
    %v761 = vpop.f32.mrb[0].mxu0
    %v762 = vadd.f32 %v531, %v761
    %v763 = vpop.f32.mrb[0].mxu0
    %764 = vdwg.mxu0
    %765 = vmatprep.subr.bf16.mxu0 0
    %766 = vmatpush1.bf16.msra.mxu0 %v676
    %767 = vmatprep.subr.bf16.mxu0 0
    %768 = vmatpush1.bf16.msra.mxu0 %v677
    %769 = vmatprep.subr.bf16.mxu0 0
    %770 = vmatpush1.bf16.msra.mxu0 %v678
    %771 = vmatprep.subr.bf16.mxu0 0
    %772 = vmatpush1.bf16.msra.mxu0 %v679
    %773 = vmatprep.subr.bf16.mxu0 0
    %774 = vmatpush1.bf16.msra.mxu0 %v680
    %775 = vmatprep.subr.bf16.mxu0 0
    %776 = vmatpush1.bf16.msra.mxu0 %v681
    %777 = vmatprep.subr.bf16.mxu0 0
    %778 = vmatpush1.bf16.msra.mxu0 %v682
    %779 = vmatprep.subr.bf16.mxu0 0
    %780 = vmatpush1.bf16.msra.mxu0 %v683
    %781 = vmatprep.subr.bf16.mxu0 0
    %782 = vmatpush1.bf16.msra.mxu0 %v684
    %783 = vmatprep.subr.bf16.mxu0 0
    %784 = vmatpush1.bf16.msra.mxu0 %v685
    %785 = vmatprep.subr.bf16.mxu0 0
    %786 = vmatpush1.bf16.msra.mxu0 %v686
    %787 = vmatprep.subr.bf16.mxu0 0
    %788 = vmatpush1.bf16.msra.mxu0 %v687
    %789 = vmatprep.subr.bf16.mxu0 0
    %790 = vmatpush1.bf16.msra.mxu0 %v688
    %791 = vmatprep.subr.bf16.mxu0 0
    %792 = vmatpush1.bf16.msra.mxu0 %v689
    %793 = vmatprep.subr.bf16.mxu0 0
    %794 = vmatpush1.bf16.msra.mxu0 %v690
    %795 = vmatprep.subr.bf16.mxu0 0
    %796 = vmatpush1.bf16.msra.mxu0 %v691
    %797 = vmatprep.mubr.bf16.mxu0 %v461
    %798 = vmatmul.mubr.bf16.gmra.mrb[0].mxu0 %v460
    %v799 = vpop.f32.mrb[0].mxu0
    %v800 = vadd.f32 %v759, %v799
    %v801 = vpop.f32.mrb[0].mxu0
    %v802 = vpop.f32.mrb[0].mxu0
    %v803 = vadd.f32 %v762, %v802
    %v804 = vpop.f32.mrb[0].mxu0
    %805 = vdwg.mxu0
    %v806 = vadd.f32 %v800, %v58
    %v807 = vadd.f32 %v803, %v59
    %808 = vadd.xlane.f32.xlu0 %v806
    %v809 = vpop.xlane.xlu0 %808
    %810 = vadd.xlane.f32.xlu0 %v807
    %v811 = vpop.xlane.xlu0 %810
    %v812 = vrcp.pop 128.0
    %v813 = vmul.f32 %v809, %v812
    %v814 = vmul.f32 %v811, %v812
    %v815 = vmul.f32 %v806, %v806
    %v816 = vmul.f32 %v807, %v807
    %817 = vadd.xlane.f32.xlu0 %v815
    %v818 = vpop.xlane.xlu0 %817
    %819 = vadd.xlane.f32.xlu0 %v816
    %v820 = vpop.xlane.xlu0 %819
    %v821 = vmul.f32 %v818, %v812
    %v822 = vmul.f32 %v820, %v812
    %v823 = vmul.f32 %v813, %v813
    %v824 = vmul.f32 %v814, %v814
    %v825 = vsub.f32 %v821, %v823
    %v826 = vsub.f32 %v822, %v824
    %v827 = vsub.f32 %v806, %v813
    %v828 = vsub.f32 %v807, %v814
    %v829 = vadd.f32 %v825, 1e-05
    %v830 = vadd.f32 %v826, 1e-05
    %v831 = vrsqrt.pop %v829
    %v832 = vrsqrt.pop %v830
    %v833 = vmul.f32 %v827, %v831
    %v834 = vmul.f32 %v828, %v832
    %v835 = vld [vmem:[%s5] sm:$0x1]
    %v837 = vlaneseq
    %v838 = vshrl.u32 %v837, 7
    %v839 = vsub.s32 0, %v838
    %v840 = vrot.slane %v835, %v839
    %v842 = vmul.f32 %v833, %v840
    %v843 = vmul.f32 %v834, %v840
    %v844 = vld [vmem:[%s6] sm:$0x1]
    %v846 = vlaneseq
    %v847 = vshrl.u32 %v846, 7
    %v848 = vsub.s32 0, %v847
    %v849 = vrot.slane %v844, %v848
    %v851 = vadd.f32 %v842, %v849
    %v852 = vadd.f32 %v843, %v849
    %v853 = vpack.c.bf16 %v852, %v851
    %s854 = scalar_lea.vmem [#allocation2], 256
    %v855 = vld [vmem:[%s854] sm:$0xff]
    %v856 = vld [vmem:[%s854 + $0x10] sm:$0xff]
    %v857 = vld [vmem:[%s854 + $0x20] sm:$0xff]
    %v858 = vld [vmem:[%s854 + $0x30] sm:$0xff]
    %v859 = vld [vmem:[%s854 + $0x40] sm:$0xff]
    %v860 = vld [vmem:[%s854 + $0x50] sm:$0xff]
    %v861 = vld [vmem:[%s854 + $0x60] sm:$0xff]
    %v862 = vld [vmem:[%s854 + $0x70] sm:$0xff]
    %v863 = vld [vmem:[%s854 + $0x80] sm:$0xff]
    %v864 = vld [vmem:[%s854 + $0x90] sm:$0xff]
    %v865 = vld [vmem:[%s854 + $0xa0] sm:$0xff]
    %v866 = vld [vmem:[%s854 + $0xb0] sm:$0xff]
    %v867 = vld [vmem:[%s854 + $0xc0] sm:$0xff]
    %v868 = vld [vmem:[%s854 + $0xd0] sm:$0xff]
    %v869 = vld [vmem:[%s854 + $0xe0] sm:$0xff]
    %v870 = vld [vmem:[%s854 + $0xf0] sm:$0xff]
    %s871 = scalar_lea.vmem %s2, 4
    %v872 = vld [vmem:[%s871] sm:$0x3]
    %v873 = vunpack.c.l.bf16 %v872
    %v875 = vlaneseq
    %v876 = vshrl.u32 %v875, 7
    %v877 = vsub.s32 0, %v876
    %v878 = vrot.slane %v873, %v877
    %v879 = vlaneseq
    %v880 = vshrl.u32 %v879, 7
    %v881 = vsub.s32 2, %v880
    %v882 = vrot.slane %v873, %v881
    %v885 = vlaneseq
    %v886 = vshrl.u32 %v885, 7
    %v887 = vsub.s32 0, %v886
    %v888 = vrot.slane %v878, %v887
    %v889 = vlaneseq
    %v890 = vshrl.u32 %v889, 7
    %v891 = vsub.s32 0, %v890
    %v892 = vrot.slane %v882, %v891
    %v909 = vunpack.c.l.b16 %v855
    %v910 = vunpack.c.h.b16 %v855
    %v911 = vunpack.c.l.b16 %v856
    %v912 = vunpack.c.h.b16 %v856
    %v913 = vunpack.c.l.b16 %v857
    %v914 = vunpack.c.h.b16 %v857
    %v915 = vunpack.c.l.b16 %v858
    %v916 = vunpack.c.h.b16 %v858
    %v917 = vunpack.c.l.b16 %v859
    %v918 = vunpack.c.h.b16 %v859
    %v919 = vunpack.c.l.b16 %v860
    %v920 = vunpack.c.h.b16 %v860
    %v921 = vunpack.c.l.b16 %v861
    %v922 = vunpack.c.h.b16 %v861
    %v923 = vunpack.c.l.b16 %v862
    %v924 = vunpack.c.h.b16 %v862
    %v925 = vunpack.c.l.b16 %v863
    %v926 = vunpack.c.h.b16 %v863
    %v927 = vunpack.c.l.b16 %v864
    %v928 = vunpack.c.h.b16 %v864
    %v929 = vunpack.c.l.b16 %v865
    %v930 = vunpack.c.h.b16 %v865
    %v931 = vunpack.c.l.b16 %v866
    %v932 = vunpack.c.h.b16 %v866
    %v933 = vunpack.c.l.b16 %v867
    %v934 = vunpack.c.h.b16 %v867
    %v935 = vunpack.c.l.b16 %v868
    %v936 = vunpack.c.h.b16 %v868
    %v937 = vunpack.c.l.b16 %v869
    %v938 = vunpack.c.h.b16 %v869
    %v939 = vunpack.c.l.b16 %v870
    %v940 = vunpack.c.h.b16 %v870
    %v941 = vpack.c.b16 %v911, %v909
    %v942 = vpack.c.b16 %v912, %v910
    %v943 = vpack.c.b16 %v915, %v913
    %v944 = vpack.c.b16 %v916, %v914
    %v945 = vpack.c.b16 %v919, %v917
    %v946 = vpack.c.b16 %v920, %v918
    %v947 = vpack.c.b16 %v923, %v921
    %v948 = vpack.c.b16 %v924, %v922
    %v949 = vpack.c.b16 %v927, %v925
    %v950 = vpack.c.b16 %v928, %v926
    %v951 = vpack.c.b16 %v931, %v929
    %v952 = vpack.c.b16 %v932, %v930
    %v953 = vpack.c.b16 %v935, %v933
    %v954 = vpack.c.b16 %v936, %v934
    %v955 = vpack.c.b16 %v939, %v937
    %v956 = vpack.c.b16 %v940, %v938
    %973 = vmatprep.subr.bf16.mxu0 %v942
    %974 = vmatpush1.bf16.msra.mxu0 %v941
    %975 = vmatprep.subr.bf16.mxu0 %v944
    %976 = vmatpush1.bf16.msra.mxu0 %v943
    %977 = vmatprep.subr.bf16.mxu0 %v946
    %978 = vmatpush1.bf16.msra.mxu0 %v945
    %979 = vmatprep.subr.bf16.mxu0 %v948
    %980 = vmatpush1.bf16.msra.mxu0 %v947
    %981 = vmatprep.subr.bf16.mxu0 %v950
    %982 = vmatpush1.bf16.msra.mxu0 %v949
    %983 = vmatprep.subr.bf16.mxu0 %v952
    %984 = vmatpush1.bf16.msra.mxu0 %v951
    %985 = vmatprep.subr.bf16.mxu0 %v954
    %986 = vmatpush1.bf16.msra.mxu0 %v953
    %987 = vmatprep.subr.bf16.mxu0 %v956
    %988 = vmatpush1.bf16.msra.mxu0 %v955
    %989 = vmatprep.subr.bf16.mxu0 0
    %990 = vmatpush1.bf16.msra.mxu0 0
    %991 = vmatprep.subr.bf16.mxu0 0
    %992 = vmatpush1.bf16.msra.mxu0 0
    %993 = vmatprep.subr.bf16.mxu0 0
    %994 = vmatpush1.bf16.msra.mxu0 0
    %995 = vmatprep.subr.bf16.mxu0 0
    %996 = vmatpush1.bf16.msra.mxu0 0
    %997 = vmatprep.subr.bf16.mxu0 0
    %998 = vmatpush1.bf16.msra.mxu0 0
    %999 = vmatprep.subr.bf16.mxu0 0
    %1000 = vmatpush1.bf16.msra.mxu0 0
    %1001 = vmatprep.subr.bf16.mxu0 0
    %1002 = vmatpush1.bf16.msra.mxu0 0
    %1003 = vmatprep.subr.bf16.mxu0 0
    %1004 = vmatpush1.bf16.msra.mxu0 0
    %1005 = vmatprep.mubr.bf16.mxu0 0
    %1006 = vmatmul.mubr.bf16.gmra.mrb[0].mxu0 %v853
    %v1007 = vpop.f32.mrb[0].mxu0
    %v1008 = vadd.f32 %v888, %v1007
    %v1009 = vpop.f32.mrb[0].mxu0
    %v1010 = vadd.f32 %v892, %v1009
    %v1011 = vpop.f32.mrb[0].mxu0
    %v1012 = vadd.f32 %v888, %v1011
    %v1013 = vpop.f32.mrb[0].mxu0
    %v1014 = vadd.f32 %v892, %v1013
    %1015 = vdwg.mxu0
    %v1016 = vmul.f32 %v1008, %v1008
    %v1017 = vmul.f32 %v1010, %v1010
    %v1018 = vmul.f32 %v1012, %v1012
    %v1019 = vmul.f32 %v1014, %v1014
    %v1020 = vmul.f32 %v1008, %v1016
    %v1021 = vmul.f32 %v1010, %v1017
    %v1022 = vmul.f32 %v1012, %v1018
    %v1023 = vmul.f32 %v1014, %v1019
    %v1024 = vmul.f32 %v1020, 0.044715
    %v1025 = vmul.f32 %v1021, 0.044715
    %v1026 = vmul.f32 %v1022, 0.044715
    %v1027 = vmul.f32 %v1023, 0.044715
    %v1028 = vadd.f32 %v1008, %v1024
    %v1029 = vadd.f32 %v1010, %v1025
    %v1030 = vadd.f32 %v1012, %v1026
    %v1031 = vadd.f32 %v1014, %v1027
    %v1032 = vmul.f32 %v1028, 0.7978846
    %v1033 = vmul.f32 %v1029, 0.7978846
    %v1034 = vmul.f32 %v1030, 0.7978846
    %v1035 = vmul.f32 %v1031, 0.7978846
    %v1036 = vtanh.pop %v1032
    %v1037 = vtanh.pop %v1033
    %v1038 = vtanh.pop %v1034
    %v1039 = vtanh.pop %v1035
    %v1040 = vadd.f32 %v1036, 1.0
    %v1041 = vadd.f32 %v1037, 1.0
    %v1042 = vadd.f32 %v1038, 1.0
    %v1043 = vadd.f32 %v1039, 1.0
    %v1044 = vmul.f32 %v1040, 0.5
    %v1045 = vmul.f32 %v1041, 0.5
    %v1046 = vmul.f32 %v1042, 0.5
    %v1047 = vmul.f32 %v1043, 0.5
    %v1048 = vmul.f32 %v1008, %v1044
    %v1049 = vmul.f32 %v1010, %v1045
    %v1050 = vmul.f32 %v1012, %v1046
    %v1051 = vmul.f32 %v1014, %v1047
    %v1052 = vpack.c.bf16 %v1050, %v1048
    %v1053 = vpack.c.bf16 %v1051, %v1049
    %v1054 = vld [vmem:[%s854 + $0x8] sm:$0xff]
    %v1055 = vld [vmem:[%s854 + $0x18] sm:$0xff]
    %v1056 = vld [vmem:[%s854 + $0x28] sm:$0xff]
    %v1057 = vld [vmem:[%s854 + $0x38] sm:$0xff]
    %v1058 = vld [vmem:[%s854 + $0x48] sm:$0xff]
    %v1059 = vld [vmem:[%s854 + $0x58] sm:$0xff]
    %v1060 = vld [vmem:[%s854 + $0x68] sm:$0xff]
    %v1061 = vld [vmem:[%s854 + $0x78] sm:$0xff]
    %v1062 = vld [vmem:[%s854 + $0x88] sm:$0xff]
    %v1063 = vld [vmem:[%s854 + $0x98] sm:$0xff]
    %v1064 = vld [vmem:[%s854 + $0xa8] sm:$0xff]
    %v1065 = vld [vmem:[%s854 + $0xb8] sm:$0xff]
    %v1066 = vld [vmem:[%s854 + $0xc8] sm:$0xff]
    %v1067 = vld [vmem:[%s854 + $0xd8] sm:$0xff]
    %v1068 = vld [vmem:[%s854 + $0xe8] sm:$0xff]
    %v1069 = vld [vmem:[%s854 + $0xf8] sm:$0xff]
    %v1070 = vld [vmem:[%s871 + $0x2] sm:$0x3]
    %v1071 = vunpack.c.l.bf16 %v1070
    %v1073 = vlaneseq
    %v1074 = vshrl.u32 %v1073, 7
    %v1075 = vsub.s32 0, %v1074
    %v1076 = vrot.slane %v1071, %v1075
    %v1077 = vlaneseq
    %v1078 = vshrl.u32 %v1077, 7
    %v1079 = vsub.s32 2, %v1078
    %v1080 = vrot.slane %v1071, %v1079
    %v1083 = vlaneseq
    %v1084 = vshrl.u32 %v1083, 7
    %v1085 = vsub.s32 0, %v1084
    %v1086 = vrot.slane %v1076, %v1085
    %v1087 = vlaneseq
    %v1088 = vshrl.u32 %v1087, 7
    %v1089 = vsub.s32 0, %v1088
    %v1090 = vrot.slane %v1080, %v1089
    %v1107 = vunpack.c.l.b16 %v1054
    %v1108 = vunpack.c.h.b16 %v1054
    %v1109 = vunpack.c.l.b16 %v1055
    %v1110 = vunpack.c.h.b16 %v1055
    %v1111 = vunpack.c.l.b16 %v1056
    %v1112 = vunpack.c.h.b16 %v1056
    %v1113 = vunpack.c.l.b16 %v1057
    %v1114 = vunpack.c.h.b16 %v1057
    %v1115 = vunpack.c.l.b16 %v1058
    %v1116 = vunpack.c.h.b16 %v1058
    %v1117 = vunpack.c.l.b16 %v1059
    %v1118 = vunpack.c.h.b16 %v1059
    %v1119 = vunpack.c.l.b16 %v1060
    %v1120 = vunpack.c.h.b16 %v1060
    %v1121 = vunpack.c.l.b16 %v1061
    %v1122 = vunpack.c.h.b16 %v1061
    %v1123 = vunpack.c.l.b16 %v1062
    %v1124 = vunpack.c.h.b16 %v1062
    %v1125 = vunpack.c.l.b16 %v1063
    %v1126 = vunpack.c.h.b16 %v1063
    %v1127 = vunpack.c.l.b16 %v1064
    %v1128 = vunpack.c.h.b16 %v1064
    %v1129 = vunpack.c.l.b16 %v1065
    %v1130 = vunpack.c.h.b16 %v1065
    %v1131 = vunpack.c.l.b16 %v1066
    %v1132 = vunpack.c.h.b16 %v1066
    %v1133 = vunpack.c.l.b16 %v1067
    %v1134 = vunpack.c.h.b16 %v1067
    %v1135 = vunpack.c.l.b16 %v1068
    %v1136 = vunpack.c.h.b16 %v1068
    %v1137 = vunpack.c.l.b16 %v1069
    %v1138 = vunpack.c.h.b16 %v1069
    %v1139 = vpack.c.b16 %v1109, %v1107
    %v1140 = vpack.c.b16 %v1110, %v1108
    %v1141 = vpack.c.b16 %v1113, %v1111
    %v1142 = vpack.c.b16 %v1114, %v1112
    %v1143 = vpack.c.b16 %v1117, %v1115
    %v1144 = vpack.c.b16 %v1118, %v1116
    %v1145 = vpack.c.b16 %v1121, %v1119
    %v1146 = vpack.c.b16 %v1122, %v1120
    %v1147 = vpack.c.b16 %v1125, %v1123
    %v1148 = vpack.c.b16 %v1126, %v1124
    %v1149 = vpack.c.b16 %v1129, %v1127
    %v1150 = vpack.c.b16 %v1130, %v1128
    %v1151 = vpack.c.b16 %v1133, %v1131
    %v1152 = vpack.c.b16 %v1134, %v1132
    %v1153 = vpack.c.b16 %v1137, %v1135
    %v1154 = vpack.c.b16 %v1138, %v1136
    %1171 = vmatprep.subr.bf16.mxu0 %v1140
    %1172 = vmatpush1.bf16.msra.mxu0 %v1139
    %1173 = vmatprep.subr.bf16.mxu0 %v1142
    %1174 = vmatpush1.bf16.msra.mxu0 %v1141
    %1175 = vmatprep.subr.bf16.mxu0 %v1144
    %1176 = vmatpush1.bf16.msra.mxu0 %v1143
    %1177 = vmatprep.subr.bf16.mxu0 %v1146
    %1178 = vmatpush1.bf16.msra.mxu0 %v1145
    %1179 = vmatprep.subr.bf16.mxu0 %v1148
    %1180 = vmatpush1.bf16.msra.mxu0 %v1147
    %1181 = vmatprep.subr.bf16.mxu0 %v1150
    %1182 = vmatpush1.bf16.msra.mxu0 %v1149
    %1183 = vmatprep.subr.bf16.mxu0 %v1152
    %1184 = vmatpush1.bf16.msra.mxu0 %v1151
    %1185 = vmatprep.subr.bf16.mxu0 %v1154
    %1186 = vmatpush1.bf16.msra.mxu0 %v1153
    %1187 = vmatprep.subr.bf16.mxu0 0
    %1188 = vmatpush1.bf16.msra.mxu0 0
    %1189 = vmatprep.subr.bf16.mxu0 0
    %1190 = vmatpush1.bf16.msra.mxu0 0
    %1191 = vmatprep.subr.bf16.mxu0 0
    %1192 = vmatpush1.bf16.msra.mxu0 0
    %1193 = vmatprep.subr.bf16.mxu0 0
    %1194 = vmatpush1.bf16.msra.mxu0 0
    %1195 = vmatprep.subr.bf16.mxu0 0
    %1196 = vmatpush1.bf16.msra.mxu0 0
    %1197 = vmatprep.subr.bf16.mxu0 0
    %1198 = vmatpush1.bf16.msra.mxu0 0
    %1199 = vmatprep.subr.bf16.mxu0 0
    %1200 = vmatpush1.bf16.msra.mxu0 0
    %1201 = vmatprep.subr.bf16.mxu0 0
    %1202 = vmatpush1.bf16.msra.mxu0 0
    %1203 = vmatprep.mubr.bf16.mxu0 0
    %1204 = vmatmul.mubr.bf16.gmra.mrb[0].mxu0 %v853
    %v1205 = vpop.f32.mrb[0].mxu0
    %v1206 = vadd.f32 %v1086, %v1205
    %v1207 = vpop.f32.mrb[0].mxu0
    %v1208 = vadd.f32 %v1090, %v1207
    %v1209 = vpop.f32.mrb[0].mxu0
    %v1210 = vadd.f32 %v1086, %v1209
    %v1211 = vpop.f32.mrb[0].mxu0
    %v1212 = vadd.f32 %v1090, %v1211
    %1213 = vdwg.mxu0
    %v1214 = vmul.f32 %v1206, %v1206
    %v1215 = vmul.f32 %v1208, %v1208
    %v1216 = vmul.f32 %v1210, %v1210
    %v1217 = vmul.f32 %v1212, %v1212
    %v1218 = vmul.f32 %v1206, %v1214
    %v1219 = vmul.f32 %v1208, %v1215
    %v1220 = vmul.f32 %v1210, %v1216
    %v1221 = vmul.f32 %v1212, %v1217
    %v1222 = vmul.f32 %v1218, 0.044715
    %v1223 = vmul.f32 %v1219, 0.044715
    %v1224 = vmul.f32 %v1220, 0.044715
    %v1225 = vmul.f32 %v1221, 0.044715
    %v1226 = vadd.f32 %v1206, %v1222
    %v1227 = vadd.f32 %v1208, %v1223
    %v1228 = vadd.f32 %v1210, %v1224
    %v1229 = vadd.f32 %v1212, %v1225
    %v1230 = vmul.f32 %v1226, 0.7978846
    %v1231 = vmul.f32 %v1227, 0.7978846
    %v1232 = vmul.f32 %v1228, 0.7978846
    %v1233 = vmul.f32 %v1229, 0.7978846
    %v1234 = vtanh.pop %v1230
    %v1235 = vtanh.pop %v1231
    %v1236 = vtanh.pop %v1232
    %v1237 = vtanh.pop %v1233
    %v1238 = vadd.f32 %v1234, 1.0
    %v1239 = vadd.f32 %v1235, 1.0
    %v1240 = vadd.f32 %v1236, 1.0
    %v1241 = vadd.f32 %v1237, 1.0
    %v1242 = vmul.f32 %v1238, 0.5
    %v1243 = vmul.f32 %v1239, 0.5
    %v1244 = vmul.f32 %v1240, 0.5
    %v1245 = vmul.f32 %v1241, 0.5
    %v1246 = vmul.f32 %v1206, %v1242
    %v1247 = vmul.f32 %v1208, %v1243
    %v1248 = vmul.f32 %v1210, %v1244
    %v1249 = vmul.f32 %v1212, %v1245
    %v1250 = vpack.c.bf16 %v1248, %v1246
    %v1251 = vpack.c.bf16 %v1249, %v1247
    %s1252 = scalar_lea.vmem [#allocation5], 256
    %v1253 = vld [vmem:[%s1252] sm:$0xf]
    %v1254 = vld [vmem:[%s1252 + $0x4] sm:$0xf]
    %v1255 = vld [vmem:[%s1252 + $0x8] sm:$0xf]
    %v1256 = vld [vmem:[%s1252 + $0xc] sm:$0xf]
    %v1257 = vld [vmem:[%s1252 + $0x10] sm:$0xf]
    %v1258 = vld [vmem:[%s1252 + $0x14] sm:$0xf]
    %v1259 = vld [vmem:[%s1252 + $0x18] sm:$0xf]
    %v1260 = vld [vmem:[%s1252 + $0x1c] sm:$0xf]
    %v1261 = vld [vmem:[%s1252 + $0x20] sm:$0xf]
    %v1262 = vld [vmem:[%s1252 + $0x24] sm:$0xf]
    %v1263 = vld [vmem:[%s1252 + $0x28] sm:$0xf]
    %v1264 = vld [vmem:[%s1252 + $0x2c] sm:$0xf]
    %v1265 = vld [vmem:[%s1252 + $0x30] sm:$0xf]
    %v1266 = vld [vmem:[%s1252 + $0x34] sm:$0xf]
    %v1267 = vld [vmem:[%s1252 + $0x38] sm:$0xf]
    %v1268 = vld [vmem:[%s1252 + $0x3c] sm:$0xf]
    %v1269 = vld [vmem:[%s1252 + $0x40] sm:$0xf]
    %v1270 = vld [vmem:[%s1252 + $0x44] sm:$0xf]
    %v1271 = vld [vmem:[%s1252 + $0x48] sm:$0xf]
    %v1272 = vld [vmem:[%s1252 + $0x4c] sm:$0xf]
    %v1273 = vld [vmem:[%s1252 + $0x50] sm:$0xf]
    %v1274 = vld [vmem:[%s1252 + $0x54] sm:$0xf]
    %v1275 = vld [vmem:[%s1252 + $0x58] sm:$0xf]
    %v1276 = vld [vmem:[%s1252 + $0x5c] sm:$0xf]
    %v1277 = vld [vmem:[%s1252 + $0x60] sm:$0xf]
    %v1278 = vld [vmem:[%s1252 + $0x64] sm:$0xf]
    %v1279 = vld [vmem:[%s1252 + $0x68] sm:$0xf]
    %v1280 = vld [vmem:[%s1252 + $0x6c] sm:$0xf]
    %v1281 = vld [vmem:[%s1252 + $0x70] sm:$0xf]
    %v1282 = vld [vmem:[%s1252 + $0x74] sm:$0xf]
    %v1283 = vld [vmem:[%s1252 + $0x78] sm:$0xf]
    %v1284 = vld [vmem:[%s1252 + $0x7c] sm:$0xf]
    %v1285 = vld [vmem:[%s1252 + $0x80] sm:$0xf]
    %v1286 = vld [vmem:[%s1252 + $0x84] sm:$0xf]
    %v1287 = vld [vmem:[%s1252 + $0x88] sm:$0xf]
    %v1288 = vld [vmem:[%s1252 + $0x8c] sm:$0xf]
    %v1289 = vld [vmem:[%s1252 + $0x90] sm:$0xf]
    %v1290 = vld [vmem:[%s1252 + $0x94] sm:$0xf]
    %v1291 = vld [vmem:[%s1252 + $0x98] sm:$0xf]
    %v1292 = vld [vmem:[%s1252 + $0x9c] sm:$0xf]
    %v1293 = vld [vmem:[%s1252 + $0xa0] sm:$0xf]
    %v1294 = vld [vmem:[%s1252 + $0xa4] sm:$0xf]
    %v1295 = vld [vmem:[%s1252 + $0xa8] sm:$0xf]
    %v1296 = vld [vmem:[%s1252 + $0xac] sm:$0xf]
    %v1297 = vld [vmem:[%s1252 + $0xb0] sm:$0xf]
    %v1298 = vld [vmem:[%s1252 + $0xb4] sm:$0xf]
    %v1299 = vld [vmem:[%s1252 + $0xb8] sm:$0xf]
    %v1300 = vld [vmem:[%s1252 + $0xbc] sm:$0xf]
    %v1301 = vld [vmem:[%s1252 + $0xc0] sm:$0xf]
    %v1302 = vld [vmem:[%s1252 + $0xc4] sm:$0xf]
    %v1303 = vld [vmem:[%s1252 + $0xc8] sm:$0xf]
    %v1304 = vld [vmem:[%s1252 + $0xcc] sm:$0xf]
    %v1305 = vld [vmem:[%s1252 + $0xd0] sm:$0xf]
    %v1306 = vld [vmem:[%s1252 + $0xd4] sm:$0xf]
    %v1307 = vld [vmem:[%s1252 + $0xd8] sm:$0xf]
    %v1308 = vld [vmem:[%s1252 + $0xdc] sm:$0xf]
    %v1309 = vld [vmem:[%s1252 + $0xe0] sm:$0xf]
    %v1310 = vld [vmem:[%s1252 + $0xe4] sm:$0xf]
    %v1311 = vld [vmem:[%s1252 + $0xe8] sm:$0xf]
    %v1312 = vld [vmem:[%s1252 + $0xec] sm:$0xf]
    %v1313 = vld [vmem:[%s1252 + $0xf0] sm:$0xf]
    %v1314 = vld [vmem:[%s1252 + $0xf4] sm:$0xf]
    %v1315 = vld [vmem:[%s1252 + $0xf8] sm:$0xf]
    %v1316 = vld [vmem:[%s1252 + $0xfc] sm:$0xf]
    %s1317 = scalar_lea.vmem %s4, 1
    %v1318 = vld [vmem:[%s1317] sm:$0x1]
    %v1319 = vunpack.c.l.bf16 %v1318
    %v1320 = vlaneseq
    %v1321 = vshrl.u32 %v1320, 7
    %v1322 = vsub.s32 0, %v1321
    %v1323 = vrot.slane %v1319, %v1322
    %v1388 = vunpack.c.l.b16 %v1253
    %v1389 = vunpack.c.l.b16 %v1254
    %v1390 = vunpack.c.l.b16 %v1255
    %v1391 = vunpack.c.l.b16 %v1256
    %v1392 = vunpack.c.l.b16 %v1257
    %v1393 = vunpack.c.l.b16 %v1258
    %v1394 = vunpack.c.l.b16 %v1259
    %v1395 = vunpack.c.l.b16 %v1260
    %v1396 = vunpack.c.l.b16 %v1261
    %v1397 = vunpack.c.l.b16 %v1262
    %v1398 = vunpack.c.l.b16 %v1263
    %v1399 = vunpack.c.l.b16 %v1264
    %v1400 = vunpack.c.l.b16 %v1265
    %v1401 = vunpack.c.l.b16 %v1266
    %v1402 = vunpack.c.l.b16 %v1267
    %v1403 = vunpack.c.l.b16 %v1268
    %v1404 = vunpack.c.l.b16 %v1269
    %v1405 = vunpack.c.l.b16 %v1270
    %v1406 = vunpack.c.l.b16 %v1271
    %v1407 = vunpack.c.l.b16 %v1272
    %v1408 = vunpack.c.l.b16 %v1273
    %v1409 = vunpack.c.l.b16 %v1274
    %v1410 = vunpack.c.l.b16 %v1275
    %v1411 = vunpack.c.l.b16 %v1276
    %v1412 = vunpack.c.l.b16 %v1277
    %v1413 = vunpack.c.l.b16 %v1278
    %v1414 = vunpack.c.l.b16 %v1279
    %v1415 = vunpack.c.l.b16 %v1280
    %v1416 = vunpack.c.l.b16 %v1281
    %v1417 = vunpack.c.l.b16 %v1282
    %v1418 = vunpack.c.l.b16 %v1283
    %v1419 = vunpack.c.l.b16 %v1284
    %v1420 = vunpack.c.l.b16 %v1285
    %v1421 = vunpack.c.l.b16 %v1286
    %v1422 = vunpack.c.l.b16 %v1287
    %v1423 = vunpack.c.l.b16 %v1288
    %v1424 = vunpack.c.l.b16 %v1289
    %v1425 = vunpack.c.l.b16 %v1290
    %v1426 = vunpack.c.l.b16 %v1291
    %v1427 = vunpack.c.l.b16 %v1292
    %v1428 = vunpack.c.l.b16 %v1293
    %v1429 = vunpack.c.l.b16 %v1294
    %v1430 = vunpack.c.l.b16 %v1295
    %v1431 = vunpack.c.l.b16 %v1296
    %v1432 = vunpack.c.l.b16 %v1297
    %v1433 = vunpack.c.l.b16 %v1298
    %v1434 = vunpack.c.l.b16 %v1299
    %v1435 = vunpack.c.l.b16 %v1300
    %v1436 = vunpack.c.l.b16 %v1301
    %v1437 = vunpack.c.l.b16 %v1302
    %v1438 = vunpack.c.l.b16 %v1303
    %v1439 = vunpack.c.l.b16 %v1304
    %v1440 = vunpack.c.l.b16 %v1305
    %v1441 = vunpack.c.l.b16 %v1306
    %v1442 = vunpack.c.l.b16 %v1307
    %v1443 = vunpack.c.l.b16 %v1308
    %v1444 = vunpack.c.l.b16 %v1309
    %v1445 = vunpack.c.l.b16 %v1310
    %v1446 = vunpack.c.l.b16 %v1311
    %v1447 = vunpack.c.l.b16 %v1312
    %v1448 = vunpack.c.l.b16 %v1313
    %v1449 = vunpack.c.l.b16 %v1314
    %v1450 = vunpack.c.l.b16 %v1315
    %v1451 = vunpack.c.l.b16 %v1316
    %v1452 = vpack.c.b16 %v1389, %v1388
    %v1453 = vpack.c.b16 %v1391, %v1390
    %v1454 = vpack.c.b16 %v1393, %v1392
    %v1455 = vpack.c.b16 %v1395, %v1394
    %v1456 = vpack.c.b16 %v1397, %v1396
    %v1457 = vpack.c.b16 %v1399, %v1398
    %v1458 = vpack.c.b16 %v1401, %v1400
    %v1459 = vpack.c.b16 %v1403, %v1402
    %v1460 = vpack.c.b16 %v1405, %v1404
    %v1461 = vpack.c.b16 %v1407, %v1406
    %v1462 = vpack.c.b16 %v1409, %v1408
    %v1463 = vpack.c.b16 %v1411, %v1410
    %v1464 = vpack.c.b16 %v1413, %v1412
    %v1465 = vpack.c.b16 %v1415, %v1414
    %v1466 = vpack.c.b16 %v1417, %v1416
    %v1467 = vpack.c.b16 %v1419, %v1418
    %v1468 = vpack.c.b16 %v1421, %v1420
    %v1469 = vpack.c.b16 %v1423, %v1422
    %v1470 = vpack.c.b16 %v1425, %v1424
    %v1471 = vpack.c.b16 %v1427, %v1426
    %v1472 = vpack.c.b16 %v1429, %v1428
    %v1473 = vpack.c.b16 %v1431, %v1430
    %v1474 = vpack.c.b16 %v1433, %v1432
    %v1475 = vpack.c.b16 %v1435, %v1434
    %v1476 = vpack.c.b16 %v1437, %v1436
    %v1477 = vpack.c.b16 %v1439, %v1438
    %v1478 = vpack.c.b16 %v1441, %v1440
    %v1479 = vpack.c.b16 %v1443, %v1442
    %v1480 = vpack.c.b16 %v1445, %v1444
    %v1481 = vpack.c.b16 %v1447, %v1446
    %v1482 = vpack.c.b16 %v1449, %v1448
    %v1483 = vpack.c.b16 %v1451, %v1450
    %1516 = vmatprep.subr.bf16.mxu0 0
    %1517 = vmatpush1.bf16.msra.mxu0 %v1452
    %1518 = vmatprep.subr.bf16.mxu0 0
    %1519 = vmatpush1.bf16.msra.mxu0 %v1453
    %1520 = vmatprep.subr.bf16.mxu0 0
    %1521 = vmatpush1.bf16.msra.mxu0 %v1454
    %1522 = vmatprep.subr.bf16.mxu0 0
    %1523 = vmatpush1.bf16.msra.mxu0 %v1455
    %1524 = vmatprep.subr.bf16.mxu0 0
    %1525 = vmatpush1.bf16.msra.mxu0 %v1456
    %1526 = vmatprep.subr.bf16.mxu0 0
    %1527 = vmatpush1.bf16.msra.mxu0 %v1457
    %1528 = vmatprep.subr.bf16.mxu0 0
    %1529 = vmatpush1.bf16.msra.mxu0 %v1458
    %1530 = vmatprep.subr.bf16.mxu0 0
    %1531 = vmatpush1.bf16.msra.mxu0 %v1459
    %1532 = vmatprep.subr.bf16.mxu0 0
    %1533 = vmatpush1.bf16.msra.mxu0 %v1460
    %1534 = vmatprep.subr.bf16.mxu0 0
    %1535 = vmatpush1.bf16.msra.mxu0 %v1461
    %1536 = vmatprep.subr.bf16.mxu0 0
    %1537 = vmatpush1.bf16.msra.mxu0 %v1462
    %1538 = vmatprep.subr.bf16.mxu0 0
    %1539 = vmatpush1.bf16.msra.mxu0 %v1463
    %1540 = vmatprep.subr.bf16.mxu0 0
    %1541 = vmatpush1.bf16.msra.mxu0 %v1464
    %1542 = vmatprep.subr.bf16.mxu0 0
    %1543 = vmatpush1.bf16.msra.mxu0 %v1465
    %1544 = vmatprep.subr.bf16.mxu0 0
    %1545 = vmatpush1.bf16.msra.mxu0 %v1466
    %1546 = vmatprep.subr.bf16.mxu0 0
    %1547 = vmatpush1.bf16.msra.mxu0 %v1467
    %1548 = vmatprep.mubr.bf16.mxu0 %v1053
    %1549 = vmatmul.mubr.bf16.gmra.mrb[0].mxu0 %v1052
    %v1550 = vpop.f32.mrb[0].mxu0
    %v1551 = vadd.f32 %v1323, %v1550
    %v1552 = vpop.f32.mrb[0].mxu0
    %v1553 = vpop.f32.mrb[0].mxu0
    %v1554 = vadd.f32 %v1323, %v1553
    %v1555 = vpop.f32.mrb[0].mxu0
    %1556 = vdwg.mxu0
    %1557 = vmatprep.subr.bf16.mxu0 0
    %1558 = vmatpush1.bf16.msra.mxu0 %v1468
    %1559 = vmatprep.subr.bf16.mxu0 0
    %1560 = vmatpush1.bf16.msra.mxu0 %v1469
    %1561 = vmatprep.subr.bf16.mxu0 0
    %1562 = vmatpush1.bf16.msra.mxu0 %v1470
    %1563 = vmatprep.subr.bf16.mxu0 0
    %1564 = vmatpush1.bf16.msra.mxu0 %v1471
    %1565 = vmatprep.subr.bf16.mxu0 0
    %1566 = vmatpush1.bf16.msra.mxu0 %v1472
    %1567 = vmatprep.subr.bf16.mxu0 0
    %1568 = vmatpush1.bf16.msra.mxu0 %v1473
    %1569 = vmatprep.subr.bf16.mxu0 0
    %1570 = vmatpush1.bf16.msra.mxu0 %v1474
    %1571 = vmatprep.subr.bf16.mxu0 0
    %1572 = vmatpush1.bf16.msra.mxu0 %v1475
    %1573 = vmatprep.subr.bf16.mxu0 0
    %1574 = vmatpush1.bf16.msra.mxu0 %v1476
    %1575 = vmatprep.subr.bf16.mxu0 0
    %1576 = vmatpush1.bf16.msra.mxu0 %v1477
    %1577 = vmatprep.subr.bf16.mxu0 0
    %1578 = vmatpush1.bf16.msra.mxu0 %v1478
    %1579 = vmatprep.subr.bf16.mxu0 0
    %1580 = vmatpush1.bf16.msra.mxu0 %v1479
    %1581 = vmatprep.subr.bf16.mxu0 0
    %1582 = vmatpush1.bf16.msra.mxu0 %v1480
    %1583 = vmatprep.subr.bf16.mxu0 0
    %1584 = vmatpush1.bf16.msra.mxu0 %v1481
    %1585 = vmatprep.subr.bf16.mxu0 0
    %1586 = vmatpush1.bf16.msra.mxu0 %v1482
    %1587 = vmatprep.subr.bf16.mxu0 0
    %1588 = vmatpush1.bf16.msra.mxu0 %v1483
    %1589 = vmatprep.mubr.bf16.mxu0 %v1251
    %1590 = vmatmul.mubr.bf16.gmra.mrb[0].mxu0 %v1250
    %v1591 = vpop.f32.mrb[0].mxu0
    %v1592 = vadd.f32 %v1551, %v1591
    %v1593 = vpop.f32.mrb[0].mxu0
    %v1594 = vpop.f32.mrb[0].mxu0
    %v1595 = vadd.f32 %v1554, %v1594
    %v1596 = vpop.f32.mrb[0].mxu0
    %1597 = vdwg.mxu0
    %v1598 = vadd.f32 %v1592, %v851
    %v1599 = vadd.f32 %v1595, %v852
    %1600 = vadd.xlane.f32.xlu0 %v1598
    %v1601 = vpop.xlane.xlu0 %1600
    %1602 = vadd.xlane.f32.xlu0 %v1599
    %v1603 = vpop.xlane.xlu0 %1602
    %v1604 = vmul.f32 %v1601, %v812
    %v1605 = vmul.f32 %v1603, %v812
    %v1606 = vmul.f32 %v1598, %v1598
    %v1607 = vmul.f32 %v1599, %v1599
    %1608 = vadd.xlane.f32.xlu0 %v1606
    %v1609 = vpop.xlane.xlu0 %1608
    %1610 = vadd.xlane.f32.xlu0 %v1607
    %v1611 = vpop.xlane.xlu0 %1610
    %v1612 = vmul.f32 %v1609, %v812
    %v1613 = vmul.f32 %v1611, %v812
    %v1614 = vmul.f32 %v1604, %v1604
    %v1615 = vmul.f32 %v1605, %v1605
    %v1616 = vsub.f32 %v1612, %v1614
    %v1617 = vsub.f32 %v1613, %v1615
    %v1618 = vsub.f32 %v1598, %v1604
    %v1619 = vsub.f32 %v1599, %v1605
    %v1620 = vadd.f32 %v1616, 1e-05
    %v1621 = vadd.f32 %v1617, 1e-05
    %v1622 = vrsqrt.pop %v1620
    %v1623 = vrsqrt.pop %v1621
    %v1624 = vmul.f32 %v1618, %v1622
    %v1625 = vmul.f32 %v1619, %v1623
    %s1626 = scalar_lea.vmem %s5, 1
    %v1627 = vld [vmem:[%s1626] sm:$0x1]
    %v1629 = vlaneseq
    %v1630 = vshrl.u32 %v1629, 7
    %v1631 = vsub.s32 0, %v1630
    %v1632 = vrot.slane %v1627, %v1631
    %v1634 = vmul.f32 %v1624, %v1632
    %v1635 = vmul.f32 %v1625, %v1632
    %s1636 = scalar_lea.vmem %s6, 1
    %v1637 = vld [vmem:[%s1636] sm:$0x1]
    %v1639 = vlaneseq
    %v1640 = vshrl.u32 %v1639, 7
    %v1641 = vsub.s32 0, %v1640
    %v1642 = vrot.slane %v1637, %v1641
    %v1644 = vadd.f32 %v1634, %v1642
    %v1645 = vadd.f32 %v1635, %v1642
    %v1646 = vpack.c.bf16 %v1645, %v1644
    %s1647 = scalar_lea.vmem [#allocation2], 512
    %v1648 = vld [vmem:[%s1647] sm:$0xff]
    %v1649 = vld [vmem:[%s1647 + $0x10] sm:$0xff]
    %v1650 = vld [vmem:[%s1647 + $0x20] sm:$0xff]
    %v1651 = vld [vmem:[%s1647 + $0x30] sm:$0xff]
    %v1652 = vld [vmem:[%s1647 + $0x40] sm:$0xff]
    %v1653 = vld [vmem:[%s1647 + $0x50] sm:$0xff]
    %v1654 = vld [vmem:[%s1647 + $0x60] sm:$0xff]
    %v1655 = vld [vmem:[%s1647 + $0x70] sm:$0xff]
    %v1656 = vld [vmem:[%s1647 + $0x80] sm:$0xff]
    %v1657 = vld [vmem:[%s1647 + $0x90] sm:$0xff]
    %v1658 = vld [vmem:[%s1647 + $0xa0] sm:$0xff]
    %v1659 = vld [vmem:[%s1647 + $0xb0] sm:$0xff]
    %v1660 = vld [vmem:[%s1647 + $0xc0] sm:$0xff]
    %v1661 = vld [vmem:[%s1647 + $0xd0] sm:$0xff]
    %v1662 = vld [vmem:[%s1647 + $0xe0] sm:$0xff]
    %v1663 = vld [vmem:[%s1647 + $0xf0] sm:$0xff]
    %s1664 = scalar_lea.vmem %s2, 8
    %v1665 = vld [vmem:[%s1664] sm:$0x3]
    %v1666 = vunpack.c.l.bf16 %v1665
    %v1668 = vlaneseq
    %v1669 = vshrl.u32 %v1668, 7
    %v1670 = vsub.s32 0, %v1669
    %v1671 = vrot.slane %v1666, %v1670
    %v1672 = vlaneseq
    %v1673 = vshrl.u32 %v1672, 7
    %v1674 = vsub.s32 2, %v1673
    %v1675 = vrot.slane %v1666, %v1674
    %v1678 = vlaneseq
    %v1679 = vshrl.u32 %v1678, 7
    %v1680 = vsub.s32 0, %v1679
    %v1681 = vrot.slane %v1671, %v1680
    %v1682 = vlaneseq
    %v1683 = vshrl.u32 %v1682, 7
    %v1684 = vsub.s32 0, %v1683
    %v1685 = vrot.slane %v1675, %v1684
    %v1702 = vunpack.c.l.b16 %v1648
    %v1703 = vunpack.c.h.b16 %v1648
    %v1704 = vunpack.c.l.b16 %v1649
    %v1705 = vunpack.c.h.b16 %v1649
    %v1706 = vunpack.c.l.b16 %v1650
    %v1707 = vunpack.c.h.b16 %v1650
    %v1708 = vunpack.c.l.b16 %v1651
    %v1709 = vunpack.c.h.b16 %v1651
    %v1710 = vunpack.c.l.b16 %v1652
    %v1711 = vunpack.c.h.b16 %v1652
    %v1712 = vunpack.c.l.b16 %v1653
    %v1713 = vunpack.c.h.b16 %v1653
    %v1714 = vunpack.c.l.b16 %v1654
    %v1715 = vunpack.c.h.b16 %v1654
    %v1716 = vunpack.c.l.b16 %v1655
    %v1717 = vunpack.c.h.b16 %v1655
    %v1718 = vunpack.c.l.b16 %v1656
    %v1719 = vunpack.c.h.b16 %v1656
    %v1720 = vunpack.c.l.b16 %v1657
    %v1721 = vunpack.c.h.b16 %v1657
    %v1722 = vunpack.c.l.b16 %v1658
    %v1723 = vunpack.c.h.b16 %v1658
    %v1724 = vunpack.c.l.b16 %v1659
    %v1725 = vunpack.c.h.b16 %v1659
    %v1726 = vunpack.c.l.b16 %v1660
    %v1727 = vunpack.c.h.b16 %v1660
    %v1728 = vunpack.c.l.b16 %v1661
    %v1729 = vunpack.c.h.b16 %v1661
    %v1730 = vunpack.c.l.b16 %v1662
    %v1731 = vunpack.c.h.b16 %v1662
    %v1732 = vunpack.c.l.b16 %v1663
    %v1733 = vunpack.c.h.b16 %v1663
    %v1734 = vpack.c.b16 %v1704, %v1702
    %v1735 = vpack.c.b16 %v1705, %v1703
    %v1736 = vpack.c.b16 %v1708, %v1706
    %v1737 = vpack.c.b16 %v1709, %v1707
    %v1738 = vpack.c.b16 %v1712, %v1710
    %v1739 = vpack.c.b16 %v1713, %v1711
    %v1740 = vpack.c.b16 %v1716, %v1714
    %v1741 = vpack.c.b16 %v1717, %v1715
    %v1742 = vpack.c.b16 %v1720, %v1718
    %v1743 = vpack.c.b16 %v1721, %v1719
    %v1744 = vpack.c.b16 %v1724, %v1722
    %v1745 = vpack.c.b16 %v1725, %v1723
    %v1746 = vpack.c.b16 %v1728, %v1726
    %v1747 = vpack.c.b16 %v1729, %v1727
    %v1748 = vpack.c.b16 %v1732, %v1730
    %v1749 = vpack.c.b16 %v1733, %v1731
    %1766 = vmatprep.subr.bf16.mxu0 %v1735
    %1767 = vmatpush1.bf16.msra.mxu0 %v1734
    %1768 = vmatprep.subr.bf16.mxu0 %v1737
    %1769 = vmatpush1.bf16.msra.mxu0 %v1736
    %1770 = vmatprep.subr.bf16.mxu0 %v1739
    %1771 = vmatpush1.bf16.msra.mxu0 %v1738
    %1772 = vmatprep.subr.bf16.mxu0 %v1741
    %1773 = vmatpush1.bf16.msra.mxu0 %v1740
    %1774 = vmatprep.subr.bf16.mxu0 %v1743
    %1775 = vmatpush1.bf16.msra.mxu0 %v1742
    %1776 = vmatprep.subr.bf16.mxu0 %v1745
    %1777 = vmatpush1.bf16.msra.mxu0 %v1744
    %1778 = vmatprep.subr.bf16.mxu0 %v1747
    %1779 = vmatpush1.bf16.msra.mxu0 %v1746
    %1780 = vmatprep.subr.bf16.mxu0 %v1749
    %1781 = vmatpush1.bf16.msra.mxu0 %v1748
    %1782 = vmatprep.subr.bf16.mxu0 0
    %1783 = vmatpush1.bf16.msra.mxu0 0
    %1784 = vmatprep.subr.bf16.mxu0 0
    %1785 = vmatpush1.bf16.msra.mxu0 0
    %1786 = vmatprep.subr.bf16.mxu0 0
    %1787 = vmatpush1.bf16.msra.mxu0 0
    %1788 = vmatprep.subr.bf16.mxu0 0
    %1789 = vmatpush1.bf16.msra.mxu0 0
    %1790 = vmatprep.subr.bf16.mxu0 0
    %1791 = vmatpush1.bf16.msra.mxu0 0
    %1792 = vmatprep.subr.bf16.mxu0 0
    %1793 = vmatpush1.bf16.msra.mxu0 0
    %1794 = vmatprep.subr.bf16.mxu0 0
    %1795 = vmatpush1.bf16.msra.mxu0 0
    %1796 = vmatprep.subr.bf16.mxu0 0
    %1797 = vmatpush1.bf16.msra.mxu0 0
    %1798 = vmatprep.mubr.bf16.mxu0 0
    %1799 = vmatmul.mubr.bf16.gmra.mrb[0].mxu0 %v1646
    %v1800 = vpop.f32.mrb[0].mxu0
    %v1801 = vadd.f32 %v1681, %v1800
    %v1802 = vpop.f32.mrb[0].mxu0
    %v1803 = vadd.f32 %v1685, %v1802
    %v1804 = vpop.f32.mrb[0].mxu0
    %v1805 = vadd.f32 %v1681, %v1804
    %v1806 = vpop.f32.mrb[0].mxu0
    %v1807 = vadd.f32 %v1685, %v1806
    %1808 = vdwg.mxu0
    %v1809 = vmul.f32 %v1801, %v1801
    %v1810 = vmul.f32 %v1803, %v1803
    %v1811 = vmul.f32 %v1805, %v1805
    %v1812 = vmul.f32 %v1807, %v1807
    %v1813 = vmul.f32 %v1801, %v1809
    %v1814 = vmul.f32 %v1803, %v1810
    %v1815 = vmul.f32 %v1805, %v1811
    %v1816 = vmul.f32 %v1807, %v1812
    %v1817 = vmul.f32 %v1813, 0.044715
    %v1818 = vmul.f32 %v1814, 0.044715
    %v1819 = vmul.f32 %v1815, 0.044715
    %v1820 = vmul.f32 %v1816, 0.044715
    %v1821 = vadd.f32 %v1801, %v1817
    %v1822 = vadd.f32 %v1803, %v1818
    %v1823 = vadd.f32 %v1805, %v1819
    %v1824 = vadd.f32 %v1807, %v1820
    %v1825 = vmul.f32 %v1821, 0.7978846
    %v1826 = vmul.f32 %v1822, 0.7978846
    %v1827 = vmul.f32 %v1823, 0.7978846
    %v1828 = vmul.f32 %v1824, 0.7978846
    %v1829 = vtanh.pop %v1825
    %v1830 = vtanh.pop %v1826
    %v1831 = vtanh.pop %v1827
    %v1832 = vtanh.pop %v1828
    %v1833 = vadd.f32 %v1829, 1.0
    %v1834 = vadd.f32 %v1830, 1.0
    %v1835 = vadd.f32 %v1831, 1.0
    %v1836 = vadd.f32 %v1832, 1.0
    %v1837 = vmul.f32 %v1833, 0.5
    %v1838 = vmul.f32 %v1834, 0.5
    %v1839 = vmul.f32 %v1835, 0.5
    %v1840 = vmul.f32 %v1836, 0.5
    %v1841 = vmul.f32 %v1801, %v1837
    %v1842 = vmul.f32 %v1803, %v1838
    %v1843 = vmul.f32 %v1805, %v1839
    %v1844 = vmul.f32 %v1807, %v1840
    %v1845 = vpack.c.bf16 %v1843, %v1841
    %v1846 = vpack.c.bf16 %v1844, %v1842
    %v1847 = vld [vmem:[%s1647 + $0x8] sm:$0xff]
    %v1848 = vld [vmem:[%s1647 + $0x18] sm:$0xff]
    %v1849 = vld [vmem:[%s1647 + $0x28] sm:$0xff]
    %v1850 = vld [vmem:[%s1647 + $0x38] sm:$0xff]
    %v1851 = vld [vmem:[%s1647 + $0x48] sm:$0xff]
    %v1852 = vld [vmem:[%s1647 + $0x58] sm:$0xff]
    %v1853 = vld [vmem:[%s1647 + $0x68] sm:$0xff]
    %v1854 = vld [vmem:[%s1647 + $0x78] sm:$0xff]
    %v1855 = vld [vmem:[%s1647 + $0x88] sm:$0xff]
    %v1856 = vld [vmem:[%s1647 + $0x98] sm:$0xff]
    %v1857 = vld [vmem:[%s1647 + $0xa8] sm:$0xff]
    %v1858 = vld [vmem:[%s1647 + $0xb8] sm:$0xff]
    %v1859 = vld [vmem:[%s1647 + $0xc8] sm:$0xff]
    %v1860 = vld [vmem:[%s1647 + $0xd8] sm:$0xff]
    %v1861 = vld [vmem:[%s1647 + $0xe8] sm:$0xff]
    %v1862 = vld [vmem:[%s1647 + $0xf8] sm:$0xff]
    %v1863 = vld [vmem:[%s1664 + $0x2] sm:$0x3]
    %v1864 = vunpack.c.l.bf16 %v1863
    %v1866 = vlaneseq
    %v1867 = vshrl.u32 %v1866, 7
    %v1868 = vsub.s32 0, %v1867
    %v1869 = vrot.slane %v1864, %v1868
    %v1870 = vlaneseq
    %v1871 = vshrl.u32 %v1870, 7
    %v1872 = vsub.s32 2, %v1871
    %v1873 = vrot.slane %v1864, %v1872
    %v1876 = vlaneseq
    %v1877 = vshrl.u32 %v1876, 7
    %v1878 = vsub.s32 0, %v1877
    %v1879 = vrot.slane %v1869, %v1878
    %v1880 = vlaneseq
    %v1881 = vshrl.u32 %v1880, 7
    %v1882 = vsub.s32 0, %v1881
    %v1883 = vrot.slane %v1873, %v1882
    %v1900 = vunpack.c.l.b16 %v1847
    %v1901 = vunpack.c.h.b16 %v1847
    %v1902 = vunpack.c.l.b16 %v1848
    %v1903 = vunpack.c.h.b16 %v1848
    %v1904 = vunpack.c.l.b16 %v1849
    %v1905 = vunpack.c.h.b16 %v1849
    %v1906 = vunpack.c.l.b16 %v1850
    %v1907 = vunpack.c.h.b16 %v1850
    %v1908 = vunpack.c.l.b16 %v1851
    %v1909 = vunpack.c.h.b16 %v1851
    %v1910 = vunpack.c.l.b16 %v1852
    %v1911 = vunpack.c.h.b16 %v1852
    %v1912 = vunpack.c.l.b16 %v1853
    %v1913 = vunpack.c.h.b16 %v1853
    %v1914 = vunpack.c.l.b16 %v1854
    %v1915 = vunpack.c.h.b16 %v1854
    %v1916 = vunpack.c.l.b16 %v1855
    %v1917 = vunpack.c.h.b16 %v1855
    %v1918 = vunpack.c.l.b16 %v1856
    %v1919 = vunpack.c.h.b16 %v1856
    %v1920 = vunpack.c.l.b16 %v1857
    %v1921 = vunpack.c.h.b16 %v1857
    %v1922 = vunpack.c.l.b16 %v1858
    %v1923 = vunpack.c.h.b16 %v1858
    %v1924 = vunpack.c.l.b16 %v1859
    %v1925 = vunpack.c.h.b16 %v1859
    %v1926 = vunpack.c.l.b16 %v1860
    %v1927 = vunpack.c.h.b16 %v1860
    %v1928 = vunpack.c.l.b16 %v1861
    %v1929 = vunpack.c.h.b16 %v1861
    %v1930 = vunpack.c.l.b16 %v1862
    %v1931 = vunpack.c.h.b16 %v1862
    %v1932 = vpack.c.b16 %v1902, %v1900
    %v1933 = vpack.c.b16 %v1903, %v1901
    %v1934 = vpack.c.b16 %v1906, %v1904
    %v1935 = vpack.c.b16 %v1907, %v1905
    %v1936 = vpack.c.b16 %v1910, %v1908
    %v1937 = vpack.c.b16 %v1911, %v1909
    %v1938 = vpack.c.b16 %v1914, %v1912
    %v1939 = vpack.c.b16 %v1915, %v1913
    %v1940 = vpack.c.b16 %v1918, %v1916
    %v1941 = vpack.c.b16 %v1919, %v1917
    %v1942 = vpack.c.b16 %v1922, %v1920
    %v1943 = vpack.c.b16 %v1923, %v1921
    %v1944 = vpack.c.b16 %v1926, %v1924
    %v1945 = vpack.c.b16 %v1927, %v1925
    %v1946 = vpack.c.b16 %v1930, %v1928
    %v1947 = vpack.c.b16 %v1931, %v1929
    %1964 = vmatprep.subr.bf16.mxu0 %v1933
    %1965 = vmatpush1.bf16.msra.mxu0 %v1932
    %1966 = vmatprep.subr.bf16.mxu0 %v1935
    %1967 = vmatpush1.bf16.msra.mxu0 %v1934
    %1968 = vmatprep.subr.bf16.mxu0 %v1937
    %1969 = vmatpush1.bf16.msra.mxu0 %v1936
    %1970 = vmatprep.subr.bf16.mxu0 %v1939
    %1971 = vmatpush1.bf16.msra.mxu0 %v1938
    %1972 = vmatprep.subr.bf16.mxu0 %v1941
    %1973 = vmatpush1.bf16.msra.mxu0 %v1940
    %1974 = vmatprep.subr.bf16.mxu0 %v1943
    %1975 = vmatpush1.bf16.msra.mxu0 %v1942
    %1976 = vmatprep.subr.bf16.mxu0 %v1945
    %1977 = vmatpush1.bf16.msra.mxu0 %v1944
    %1978 = vmatprep.subr.bf16.mxu0 %v1947
    %1979 = vmatpush1.bf16.msra.mxu0 %v1946
    %1980 = vmatprep.subr.bf16.mxu0 0
    %1981 = vmatpush1.bf16.msra.mxu0 0
    %1982 = vmatprep.subr.bf16.mxu0 0
    %1983 = vmatpush1.bf16.msra.mxu0 0
    %1984 = vmatprep.subr.bf16.mxu0 0
    %1985 = vmatpush1.bf16.msra.mxu0 0
    %1986 = vmatprep.subr.bf16.mxu0 0
    %1987 = vmatpush1.bf16.msra.mxu0 0
    %1988 = vmatprep.subr.bf16.mxu0 0
    %1989 = vmatpush1.bf16.msra.mxu0 0
    %1990 = vmatprep.subr.bf16.mxu0 0
    %1991 = vmatpush1.bf16.msra.mxu0 0
    %1992 = vmatprep.subr.bf16.mxu0 0
    %1993 = vmatpush1.bf16.msra.mxu0 0
    %1994 = vmatprep.subr.bf16.mxu0 0
    %1995 = vmatpush1.bf16.msra.mxu0 0
    %1996 = vmatprep.mubr.bf16.mxu0 0
    %1997 = vmatmul.mubr.bf16.gmra.mrb[0].mxu0 %v1646
    %v1998 = vpop.f32.mrb[0].mxu0
    %v1999 = vadd.f32 %v1879, %v1998
    %v2000 = vpop.f32.mrb[0].mxu0
    %v2001 = vadd.f32 %v1883, %v2000
    %v2002 = vpop.f32.mrb[0].mxu0
    %v2003 = vadd.f32 %v1879, %v2002
    %v2004 = vpop.f32.mrb[0].mxu0
    %v2005 = vadd.f32 %v1883, %v2004
    %2006 = vdwg.mxu0
    %v2007 = vmul.f32 %v1999, %v1999
    %v2008 = vmul.f32 %v2001, %v2001
    %v2009 = vmul.f32 %v2003, %v2003
    %v2010 = vmul.f32 %v2005, %v2005
    %v2011 = vmul.f32 %v1999, %v2007
    %v2012 = vmul.f32 %v2001, %v2008
    %v2013 = vmul.f32 %v2003, %v2009
    %v2014 = vmul.f32 %v2005, %v2010
    %v2015 = vmul.f32 %v2011, 0.044715
    %v2016 = vmul.f32 %v2012, 0.044715
    %v2017 = vmul.f32 %v2013, 0.044715
    %v2018 = vmul.f32 %v2014, 0.044715
    %v2019 = vadd.f32 %v1999, %v2015
    %v2020 = vadd.f32 %v2001, %v2016
    %v2021 = vadd.f32 %v2003, %v2017
    %v2022 = vadd.f32 %v2005, %v2018
    %v2023 = vmul.f32 %v2019, 0.7978846
    %v2024 = vmul.f32 %v2020, 0.7978846
    %v2025 = vmul.f32 %v2021, 0.7978846
    %v2026 = vmul.f32 %v2022, 0.7978846
    %v2027 = vtanh.pop %v2023
    %v2028 = vtanh.pop %v2024
    %v2029 = vtanh.pop %v2025
    %v2030 = vtanh.pop %v2026
    %v2031 = vadd.f32 %v2027, 1.0
    %v2032 = vadd.f32 %v2028, 1.0
    %v2033 = vadd.f32 %v2029, 1.0
    %v2034 = vadd.f32 %v2030, 1.0
    %v2035 = vmul.f32 %v2031, 0.5
    %v2036 = vmul.f32 %v2032, 0.5
    %v2037 = vmul.f32 %v2033, 0.5
    %v2038 = vmul.f32 %v2034, 0.5
    %v2039 = vmul.f32 %v1999, %v2035
    %v2040 = vmul.f32 %v2001, %v2036
    %v2041 = vmul.f32 %v2003, %v2037
    %v2042 = vmul.f32 %v2005, %v2038
    %v2043 = vpack.c.bf16 %v2041, %v2039
    %v2044 = vpack.c.bf16 %v2042, %v2040
    %s2045 = scalar_lea.vmem [#allocation5], 512
    %v2046 = vld [vmem:[%s2045] sm:$0xf]
    %v2047 = vld [vmem:[%s2045 + $0x4] sm:$0xf]
    %v2048 = vld [vmem:[%s2045 + $0x8] sm:$0xf]
    %v2049 = vld [vmem:[%s2045 + $0xc] sm:$0xf]
    %v2050 = vld [vmem:[%s2045 + $0x10] sm:$0xf]
    %v2051 = vld [vmem:[%s2045 + $0x14] sm:$0xf]
    %v2052 = vld [vmem:[%s2045 + $0x18] sm:$0xf]
    %v2053 = vld [vmem:[%s2045 + $0x1c] sm:$0xf]
    %v2054 = vld [vmem:[%s2045 + $0x20] sm:$0xf]
    %v2055 = vld [vmem:[%s2045 + $0x24] sm:$0xf]
    %v2056 = vld [vmem:[%s2045 + $0x28] sm:$0xf]
    %v2057 = vld [vmem:[%s2045 + $0x2c] sm:$0xf]
    %v2058 = vld [vmem:[%s2045 + $0x30] sm:$0xf]
    %v2059 = vld [vmem:[%s2045 + $0x34] sm:$0xf]
    %v2060 = vld [vmem:[%s2045 + $0x38] sm:$0xf]
    %v2061 = vld [vmem:[%s2045 + $0x3c] sm:$0xf]
    %v2062 = vld [vmem:[%s2045 + $0x40] sm:$0xf]
    %v2063 = vld [vmem:[%s2045 + $0x44] sm:$0xf]
    %v2064 = vld [vmem:[%s2045 + $0x48] sm:$0xf]
    %v2065 = vld [vmem:[%s2045 + $0x4c] sm:$0xf]
    %v2066 = vld [vmem:[%s2045 + $0x50] sm:$0xf]
    %v2067 = vld [vmem:[%s2045 + $0x54] sm:$0xf]
    %v2068 = vld [vmem:[%s2045 + $0x58] sm:$0xf]
    %v2069 = vld [vmem:[%s2045 + $0x5c] sm:$0xf]
    %v2070 = vld [vmem:[%s2045 + $0x60] sm:$0xf]
    %v2071 = vld [vmem:[%s2045 + $0x64] sm:$0xf]
    %v2072 = vld [vmem:[%s2045 + $0x68] sm:$0xf]
    %v2073 = vld [vmem:[%s2045 + $0x6c] sm:$0xf]
    %v2074 = vld [vmem:[%s2045 + $0x70] sm:$0xf]
    %v2075 = vld [vmem:[%s2045 + $0x74] sm:$0xf]
    %v2076 = vld [vmem:[%s2045 + $0x78] sm:$0xf]
    %v2077 = vld [vmem:[%s2045 + $0x7c] sm:$0xf]
    %v2078 = vld [vmem:[%s2045 + $0x80] sm:$0xf]
    %v2079 = vld [vmem:[%s2045 + $0x84] sm:$0xf]
    %v2080 = vld [vmem:[%s2045 + $0x88] sm:$0xf]
    %v2081 = vld [vmem:[%s2045 + $0x8c] sm:$0xf]
    %v2082 = vld [vmem:[%s2045 + $0x90] sm:$0xf]
    %v2083 = vld [vmem:[%s2045 + $0x94] sm:$0xf]
    %v2084 = vld [vmem:[%s2045 + $0x98] sm:$0xf]
    %v2085 = vld [vmem:[%s2045 + $0x9c] sm:$0xf]
    %v2086 = vld [vmem:[%s2045 + $0xa0] sm:$0xf]
    %v2087 = vld [vmem:[%s2045 + $0xa4] sm:$0xf]
    %v2088 = vld [vmem:[%s2045 + $0xa8] sm:$0xf]
    %v2089 = vld [vmem:[%s2045 + $0xac] sm:$0xf]
    %v2090 = vld [vmem:[%s2045 + $0xb0] sm:$0xf]
    %v2091 = vld [vmem:[%s2045 + $0xb4] sm:$0xf]
    %v2092 = vld [vmem:[%s2045 + $0xb8] sm:$0xf]
    %v2093 = vld [vmem:[%s2045 + $0xbc] sm:$0xf]
    %v2094 = vld [vmem:[%s2045 + $0xc0] sm:$0xf]
    %v2095 = vld [vmem:[%s2045 + $0xc4] sm:$0xf]
    %v2096 = vld [vmem:[%s2045 + $0xc8] sm:$0xf]
    %v2097 = vld [vmem:[%s2045 + $0xcc] sm:$0xf]
    %v2098 = vld [vmem:[%s2045 + $0xd0] sm:$0xf]
    %v2099 = vld [vmem:[%s2045 + $0xd4] sm:$0xf]
    %v2100 = vld [vmem:[%s2045 + $0xd8] sm:$0xf]
    %v2101 = vld [vmem:[%s2045 + $0xdc] sm:$0xf]
    %v2102 = vld [vmem:[%s2045 + $0xe0] sm:$0xf]
    %v2103 = vld [vmem:[%s2045 + $0xe4] sm:$0xf]
    %v2104 = vld [vmem:[%s2045 + $0xe8] sm:$0xf]
    %v2105 = vld [vmem:[%s2045 + $0xec] sm:$0xf]
    %v2106 = vld [vmem:[%s2045 + $0xf0] sm:$0xf]
    %v2107 = vld [vmem:[%s2045 + $0xf4] sm:$0xf]
    %v2108 = vld [vmem:[%s2045 + $0xf8] sm:$0xf]
    %v2109 = vld [vmem:[%s2045 + $0xfc] sm:$0xf]
    %s2110 = scalar_lea.vmem %s4, 2
    %v2111 = vld [vmem:[%s2110] sm:$0x1]
    %v2112 = vunpack.c.l.bf16 %v2111
    %v2113 = vlaneseq
    %v2114 = vshrl.u32 %v2113, 7
    %v2115 = vsub.s32 0, %v2114
    %v2116 = vrot.slane %v2112, %v2115
    %v2181 = vunpack.c.l.b16 %v2046
    %v2182 = vunpack.c.l.b16 %v2047
    %v2183 = vunpack.c.l.b16 %v2048
    %v2184 = vunpack.c.l.b16 %v2049
    %v2185 = vunpack.c.l.b16 %v2050
    %v2186 = vunpack.c.l.b16 %v2051
    %v2187 = vunpack.c.l.b16 %v2052
    %v2188 = vunpack.c.l.b16 %v2053
    %v2189 = vunpack.c.l.b16 %v2054
    %v2190 = vunpack.c.l.b16 %v2055
    %v2191 = vunpack.c.l.b16 %v2056
    %v2192 = vunpack.c.l.b16 %v2057
    %v2193 = vunpack.c.l.b16 %v2058
    %v2194 = vunpack.c.l.b16 %v2059
    %v2195 = vunpack.c.l.b16 %v2060
    %v2196 = vunpack.c.l.b16 %v2061
    %v2197 = vunpack.c.l.b16 %v2062
    %v2198 = vunpack.c.l.b16 %v2063
    %v2199 = vunpack.c.l.b16 %v2064
    %v2200 = vunpack.c.l.b16 %v2065
    %v2201 = vunpack.c.l.b16 %v2066
    %v2202 = vunpack.c.l.b16 %v2067
    %v2203 = vunpack.c.l.b16 %v2068
    %v2204 = vunpack.c.l.b16 %v2069
    %v2205 = vunpack.c.l.b16 %v2070
    %v2206 = vunpack.c.l.b16 %v2071
    %v2207 = vunpack.c.l.b16 %v2072
    %v2208 = vunpack.c.l.b16 %v2073
    %v2209 = vunpack.c.l.b16 %v2074
    %v2210 = vunpack.c.l.b16 %v2075
    %v2211 = vunpack.c.l.b16 %v2076
    %v2212 = vunpack.c.l.b16 %v2077
    %v2213 = vunpack.c.l.b16 %v2078
    %v2214 = vunpack.c.l.b16 %v2079
    %v2215 = vunpack.c.l.b16 %v2080
    %v2216 = vunpack.c.l.b16 %v2081
    %v2217 = vunpack.c.l.b16 %v2082
    %v2218 = vunpack.c.l.b16 %v2083
    %v2219 = vunpack.c.l.b16 %v2084
    %v2220 = vunpack.c.l.b16 %v2085
    %v2221 = vunpack.c.l.b16 %v2086
    %v2222 = vunpack.c.l.b16 %v2087
    %v2223 = vunpack.c.l.b16 %v2088
    %v2224 = vunpack.c.l.b16 %v2089
    %v2225 = vunpack.c.l.b16 %v2090
    %v2226 = vunpack.c.l.b16 %v2091
    %v2227 = vunpack.c.l.b16 %v2092
    %v2228 = vunpack.c.l.b16 %v2093
    %v2229 = vunpack.c.l.b16 %v2094
    %v2230 = vunpack.c.l.b16 %v2095
    %v2231 = vunpack.c.l.b16 %v2096
    %v2232 = vunpack.c.l.b16 %v2097
    %v2233 = vunpack.c.l.b16 %v2098
    %v2234 = vunpack.c.l.b16 %v2099
    %v2235 = vunpack.c.l.b16 %v2100
    %v2236 = vunpack.c.l.b16 %v2101
    %v2237 = vunpack.c.l.b16 %v2102
    %v2238 = vunpack.c.l.b16 %v2103
    %v2239 = vunpack.c.l.b16 %v2104
    %v2240 = vunpack.c.l.b16 %v2105
    %v2241 = vunpack.c.l.b16 %v2106
    %v2242 = vunpack.c.l.b16 %v2107
    %v2243 = vunpack.c.l.b16 %v2108
    %v2244 = vunpack.c.l.b16 %v2109
    %v2245 = vpack.c.b16 %v2182, %v2181
    %v2246 = vpack.c.b16 %v2184, %v2183
    %v2247 = vpack.c.b16 %v2186, %v2185
    %v2248 = vpack.c.b16 %v2188, %v2187
    %v2249 = vpack.c.b16 %v2190, %v2189
    %v2250 = vpack.c.b16 %v2192, %v2191
    %v2251 = vpack.c.b16 %v2194, %v2193
    %v2252 = vpack.c.b16 %v2196, %v2195
    %v2253 = vpack.c.b16 %v2198, %v2197
    %v2254 = vpack.c.b16 %v2200, %v2199
    %v2255 = vpack.c.b16 %v2202, %v2201
    %v2256 = vpack.c.b16 %v2204, %v2203
    %v2257 = vpack.c.b16 %v2206, %v2205
    %v2258 = vpack.c.b16 %v2208, %v2207
    %v2259 = vpack.c.b16 %v2210, %v2209
    %v2260 = vpack.c.b16 %v2212, %v2211
    %v2261 = vpack.c.b16 %v2214, %v2213
    %v2262 = vpack.c.b16 %v2216, %v2215
    %v2263 = vpack.c.b16 %v2218, %v2217
    %v2264 = vpack.c.b16 %v2220, %v2219
    %v2265 = vpack.c.b16 %v2222, %v2221
    %v2266 = vpack.c.b16 %v2224, %v2223
    %v2267 = vpack.c.b16 %v2226, %v2225
    %v2268 = vpack.c.b16 %v2228, %v2227
    %v2269 = vpack.c.b16 %v2230, %v2229
    %v2270 = vpack.c.b16 %v2232, %v2231
    %v2271 = vpack.c.b16 %v2234, %v2233
    %v2272 = vpack.c.b16 %v2236, %v2235
    %v2273 = vpack.c.b16 %v2238, %v2237
    %v2274 = vpack.c.b16 %v2240, %v2239
    %v2275 = vpack.c.b16 %v2242, %v2241
    %v2276 = vpack.c.b16 %v2244, %v2243
    %2309 = vmatprep.subr.bf16.mxu0 0
    %2310 = vmatpush1.bf16.msra.mxu0 %v2245
    %2311 = vmatprep.subr.bf16.mxu0 0
    %2312 = vmatpush1.bf16.msra.mxu0 %v2246
    %2313 = vmatprep.subr.bf16.mxu0 0
    %2314 = vmatpush1.bf16.msra.mxu0 %v2247
    %2315 = vmatprep.subr.bf16.mxu0 0
    %2316 = vmatpush1.bf16.msra.mxu0 %v2248
    %2317 = vmatprep.subr.bf16.mxu0 0
    %2318 = vmatpush1.bf16.msra.mxu0 %v2249
    %2319 = vmatprep.subr.bf16.mxu0 0
    %2320 = vmatpush1.bf16.msra.mxu0 %v2250
    %2321 = vmatprep.subr.bf16.mxu0 0
    %2322 = vmatpush1.bf16.msra.mxu0 %v2251
    %2323 = vmatprep.subr.bf16.mxu0 0
    %2324 = vmatpush1.bf16.msra.mxu0 %v2252
    %2325 = vmatprep.subr.bf16.mxu0 0
    %2326 = vmatpush1.bf16.msra.mxu0 %v2253
    %2327 = vmatprep.subr.bf16.mxu0 0
    %2328 = vmatpush1.bf16.msra.mxu0 %v2254
    %2329 = vmatprep.subr.bf16.mxu0 0
    %2330 = vmatpush1.bf16.msra.mxu0 %v2255
    %2331 = vmatprep.subr.bf16.mxu0 0
    %2332 = vmatpush1.bf16.msra.mxu0 %v2256
    %2333 = vmatprep.subr.bf16.mxu0 0
    %2334 = vmatpush1.bf16.msra.mxu0 %v2257
    %2335 = vmatprep.subr.bf16.mxu0 0
    %2336 = vmatpush1.bf16.msra.mxu0 %v2258
    %2337 = vmatprep.subr.bf16.mxu0 0
    %2338 = vmatpush1.bf16.msra.mxu0 %v2259
    %2339 = vmatprep.subr.bf16.mxu0 0
    %2340 = vmatpush1.bf16.msra.mxu0 %v2260
    %2341 = vmatprep.mubr.bf16.mxu0 %v1846
    %2342 = vmatmul.mubr.bf16.gmra.mrb[0].mxu0 %v1845
    %v2343 = vpop.f32.mrb[0].mxu0
    %v2344 = vadd.f32 %v2116, %v2343
    %v2345 = vpop.f32.mrb[0].mxu0
    %v2346 = vpop.f32.mrb[0].mxu0
    %v2347 = vadd.f32 %v2116, %v2346
    %v2348 = vpop.f32.mrb[0].mxu0
    %2349 = vdwg.mxu0
    %2350 = vmatprep.subr.bf16.mxu0 0
    %2351 = vmatpush1.bf16.msra.mxu0 %v2261
    %2352 = vmatprep.subr.bf16.mxu0 0
    %2353 = vmatpush1.bf16.msra.mxu0 %v2262
    %2354 = vmatprep.subr.bf16.mxu0 0
    %2355 = vmatpush1.bf16.msra.mxu0 %v2263
    %2356 = vmatprep.subr.bf16.mxu0 0
    %2357 = vmatpush1.bf16.msra.mxu0 %v2264
    %2358 = vmatprep.subr.bf16.mxu0 0
    %2359 = vmatpush1.bf16.msra.mxu0 %v2265
    %2360 = vmatprep.subr.bf16.mxu0 0
    %2361 = vmatpush1.bf16.msra.mxu0 %v2266
    %2362 = vmatprep.subr.bf16.mxu0 0
    %2363 = vmatpush1.bf16.msra.mxu0 %v2267
    %2364 = vmatprep.subr.bf16.mxu0 0
    %2365 = vmatpush1.bf16.msra.mxu0 %v2268
    %2366 = vmatprep.subr.bf16.mxu0 0
    %2367 = vmatpush1.bf16.msra.mxu0 %v2269
    %2368 = vmatprep.subr.bf16.mxu0 0
    %2369 = vmatpush1.bf16.msra.mxu0 %v2270
    %2370 = vmatprep.subr.bf16.mxu0 0
    %2371 = vmatpush1.bf16.msra.mxu0 %v2271
    %2372 = vmatprep.subr.bf16.mxu0 0
    %2373 = vmatpush1.bf16.msra.mxu0 %v2272
    %2374 = vmatprep.subr.bf16.mxu0 0
    %2375 = vmatpush1.bf16.msra.mxu0 %v2273
    %2376 = vmatprep.subr.bf16.mxu0 0
    %2377 = vmatpush1.bf16.msra.mxu0 %v2274
    %2378 = vmatprep.subr.bf16.mxu0 0
    %2379 = vmatpush1.bf16.msra.mxu0 %v2275
    %2380 = vmatprep.subr.bf16.mxu0 0
    %2381 = vmatpush1.bf16.msra.mxu0 %v2276
    %2382 = vmatprep.mubr.bf16.mxu0 %v2044
    %2383 = vmatmul.mubr.bf16.gmra.mrb[0].mxu0 %v2043
    %v2384 = vpop.f32.mrb[0].mxu0
    %v2385 = vadd.f32 %v2344, %v2384
    %v2386 = vpop.f32.mrb[0].mxu0
    %v2387 = vpop.f32.mrb[0].mxu0
    %v2388 = vadd.f32 %v2347, %v2387
    %v2389 = vpop.f32.mrb[0].mxu0
    %2390 = vdwg.mxu0
    %v2391 = vadd.f32 %v2385, %v1644
    %v2392 = vadd.f32 %v2388, %v1645
    %2393 = vadd.xlane.f32.xlu0 %v2391
    %v2394 = vpop.xlane.xlu0 %2393
    %2395 = vadd.xlane.f32.xlu0 %v2392
    %v2396 = vpop.xlane.xlu0 %2395
    %v2397 = vmul.f32 %v2394, %v812
    %v2398 = vmul.f32 %v2396, %v812
    %v2399 = vmul.f32 %v2391, %v2391
    %v2400 = vmul.f32 %v2392, %v2392
    %2401 = vadd.xlane.f32.xlu0 %v2399
    %v2402 = vpop.xlane.xlu0 %2401
    %2403 = vadd.xlane.f32.xlu0 %v2400
    %v2404 = vpop.xlane.xlu0 %2403
    %v2405 = vmul.f32 %v2402, %v812
    %v2406 = vmul.f32 %v2404, %v812
    %v2407 = vmul.f32 %v2397, %v2397
    %v2408 = vmul.f32 %v2398, %v2398
    %v2409 = vsub.f32 %v2405, %v2407
    %v2410 = vsub.f32 %v2406, %v2408
    %v2411 = vsub.f32 %v2391, %v2397
    %v2412 = vsub.f32 %v2392, %v2398
    %v2413 = vadd.f32 %v2409, 1e-05
    %v2414 = vadd.f32 %v2410, 1e-05
    %v2415 = vrsqrt.pop %v2413
    %v2416 = vrsqrt.pop %v2414
    %v2417 = vmul.f32 %v2411, %v2415
    %v2418 = vmul.f32 %v2412, %v2416
    %s2419 = scalar_lea.vmem %s5, 2
    %v2420 = vld [vmem:[%s2419] sm:$0x1]
    %v2422 = vlaneseq
    %v2423 = vshrl.u32 %v2422, 7
    %v2424 = vsub.s32 0, %v2423
    %v2425 = vrot.slane %v2420, %v2424
    %v2427 = vmul.f32 %v2417, %v2425
    %v2428 = vmul.f32 %v2418, %v2425
    %s2429 = scalar_lea.vmem %s6, 2
    %v2430 = vld [vmem:[%s2429] sm:$0x1]
    %v2432 = vlaneseq
    %v2433 = vshrl.u32 %v2432, 7
    %v2434 = vsub.s32 0, %v2433
    %v2435 = vrot.slane %v2430, %v2434
    %v2437 = vadd.f32 %v2427, %v2435
    %v2438 = vadd.f32 %v2428, %v2435
    %v2439 = vpack.c.bf16 %v2438, %v2437
    %s2440 = scalar_lea.vmem [#allocation2], 768
    %v2441 = vld [vmem:[%s2440] sm:$0xff]
    %v2442 = vld [vmem:[%s2440 + $0x10] sm:$0xff]
    %v2443 = vld [vmem:[%s2440 + $0x20] sm:$0xff]
    %v2444 = vld [vmem:[%s2440 + $0x30] sm:$0xff]
    %v2445 = vld [vmem:[%s2440 + $0x40] sm:$0xff]
    %v2446 = vld [vmem:[%s2440 + $0x50] sm:$0xff]
    %v2447 = vld [vmem:[%s2440 + $0x60] sm:$0xff]
    %v2448 = vld [vmem:[%s2440 + $0x70] sm:$0xff]
    %v2449 = vld [vmem:[%s2440 + $0x80] sm:$0xff]
    %v2450 = vld [vmem:[%s2440 + $0x90] sm:$0xff]
    %v2451 = vld [vmem:[%s2440 + $0xa0] sm:$0xff]
    %v2452 = vld [vmem:[%s2440 + $0xb0] sm:$0xff]
    %v2453 = vld [vmem:[%s2440 + $0xc0] sm:$0xff]
    %v2454 = vld [vmem:[%s2440 + $0xd0] sm:$0xff]
    %v2455 = vld [vmem:[%s2440 + $0xe0] sm:$0xff]
    %v2456 = vld [vmem:[%s2440 + $0xf0] sm:$0xff]
    %s2457 = scalar_lea.vmem %s2, 12
    %v2458 = vld [vmem:[%s2457] sm:$0x3]
    %v2459 = vunpack.c.l.bf16 %v2458
    %v2461 = vlaneseq
    %v2462 = vshrl.u32 %v2461, 7
    %v2463 = vsub.s32 0, %v2462
    %v2464 = vrot.slane %v2459, %v2463
    %v2465 = vlaneseq
    %v2466 = vshrl.u32 %v2465, 7
    %v2467 = vsub.s32 2, %v2466
    %v2468 = vrot.slane %v2459, %v2467
    %v2471 = vlaneseq
    %v2472 = vshrl.u32 %v2471, 7
    %v2473 = vsub.s32 0, %v2472
    %v2474 = vrot.slane %v2464, %v2473
    %v2475 = vlaneseq
    %v2476 = vshrl.u32 %v2475, 7
    %v2477 = vsub.s32 0, %v2476
    %v2478 = vrot.slane %v2468, %v2477
    %v2495 = vunpack.c.l.b16 %v2441
    %v2496 = vunpack.c.h.b16 %v2441
    %v2497 = vunpack.c.l.b16 %v2442
    %v2498 = vunpack.c.h.b16 %v2442
    %v2499 = vunpack.c.l.b16 %v2443
    %v2500 = vunpack.c.h.b16 %v2443
    %v2501 = vunpack.c.l.b16 %v2444
    %v2502 = vunpack.c.h.b16 %v2444
    %v2503 = vunpack.c.l.b16 %v2445
    %v2504 = vunpack.c.h.b16 %v2445
    %v2505 = vunpack.c.l.b16 %v2446
    %v2506 = vunpack.c.h.b16 %v2446
    %v2507 = vunpack.c.l.b16 %v2447
    %v2508 = vunpack.c.h.b16 %v2447
    %v2509 = vunpack.c.l.b16 %v2448
    %v2510 = vunpack.c.h.b16 %v2448
    %v2511 = vunpack.c.l.b16 %v2449
    %v2512 = vunpack.c.h.b16 %v2449
    %v2513 = vunpack.c.l.b16 %v2450
    %v2514 = vunpack.c.h.b16 %v2450
    %v2515 = vunpack.c.l.b16 %v2451
    %v2516 = vunpack.c.h.b16 %v2451
    %v2517 = vunpack.c.l.b16 %v2452
    %v2518 = vunpack.c.h.b16 %v2452
    %v2519 = vunpack.c.l.b16 %v2453
    %v2520 = vunpack.c.h.b16 %v2453
    %v2521 = vunpack.c.l.b16 %v2454
    %v2522 = vunpack.c.h.b16 %v2454
    %v2523 = vunpack.c.l.b16 %v2455
    %v2524 = vunpack.c.h.b16 %v2455
    %v2525 = vunpack.c.l.b16 %v2456
    %v2526 = vunpack.c.h.b16 %v2456
    %v2527 = vpack.c.b16 %v2497, %v2495
    %v2528 = vpack.c.b16 %v2498, %v2496
    %v2529 = vpack.c.b16 %v2501, %v2499
    %v2530 = vpack.c.b16 %v2502, %v2500
    %v2531 = vpack.c.b16 %v2505, %v2503
    %v2532 = vpack.c.b16 %v2506, %v2504
    %v2533 = vpack.c.b16 %v2509, %v2507
    %v2534 = vpack.c.b16 %v2510, %v2508
    %v2535 = vpack.c.b16 %v2513, %v2511
    %v2536 = vpack.c.b16 %v2514, %v2512
    %v2537 = vpack.c.b16 %v2517, %v2515
    %v2538 = vpack.c.b16 %v2518, %v2516
    %v2539 = vpack.c.b16 %v2521, %v2519
    %v2540 = vpack.c.b16 %v2522, %v2520
    %v2541 = vpack.c.b16 %v2525, %v2523
    %v2542 = vpack.c.b16 %v2526, %v2524
    %2559 = vmatprep.subr.bf16.mxu0 %v2528
    %2560 = vmatpush1.bf16.msra.mxu0 %v2527
    %2561 = vmatprep.subr.bf16.mxu0 %v2530
    %2562 = vmatpush1.bf16.msra.mxu0 %v2529
    %2563 = vmatprep.subr.bf16.mxu0 %v2532
    %2564 = vmatpush1.bf16.msra.mxu0 %v2531
    %2565 = vmatprep.subr.bf16.mxu0 %v2534
    %2566 = vmatpush1.bf16.msra.mxu0 %v2533
    %2567 = vmatprep.subr.bf16.mxu0 %v2536
    %2568 = vmatpush1.bf16.msra.mxu0 %v2535
    %2569 = vmatprep.subr.bf16.mxu0 %v2538
    %2570 = vmatpush1.bf16.msra.mxu0 %v2537
    %2571 = vmatprep.subr.bf16.mxu0 %v2540
    %2572 = vmatpush1.bf16.msra.mxu0 %v2539
    %2573 = vmatprep.subr.bf16.mxu0 %v2542
    %2574 = vmatpush1.bf16.msra.mxu0 %v2541
    %2575 = vmatprep.subr.bf16.mxu0 0
    %2576 = vmatpush1.bf16.msra.mxu0 0
    %2577 = vmatprep.subr.bf16.mxu0 0
    %2578 = vmatpush1.bf16.msra.mxu0 0
    %2579 = vmatprep.subr.bf16.mxu0 0
    %2580 = vmatpush1.bf16.msra.mxu0 0
    %2581 = vmatprep.subr.bf16.mxu0 0
    %2582 = vmatpush1.bf16.msra.mxu0 0
    %2583 = vmatprep.subr.bf16.mxu0 0
    %2584 = vmatpush1.bf16.msra.mxu0 0
    %2585 = vmatprep.subr.bf16.mxu0 0
    %2586 = vmatpush1.bf16.msra.mxu0 0
    %2587 = vmatprep.subr.bf16.mxu0 0
    %2588 = vmatpush1.bf16.msra.mxu0 0
    %2589 = vmatprep.subr.bf16.mxu0 0
    %2590 = vmatpush1.bf16.msra.mxu0 0
    %2591 = vmatprep.mubr.bf16.mxu0 0
    %2592 = vmatmul.mubr.bf16.gmra.mrb[0].mxu0 %v2439
    %v2593 = vpop.f32.mrb[0].mxu0
    %v2594 = vadd.f32 %v2474, %v2593
    %v2595 = vpop.f32.mrb[0].mxu0
    %v2596 = vadd.f32 %v2478, %v2595
    %v2597 = vpop.f32.mrb[0].mxu0
    %v2598 = vadd.f32 %v2474, %v2597
    %v2599 = vpop.f32.mrb[0].mxu0
    %v2600 = vadd.f32 %v2478, %v2599
    %2601 = vdwg.mxu0
    %v2602 = vmul.f32 %v2594, %v2594
    %v2603 = vmul.f32 %v2596, %v2596
    %v2604 = vmul.f32 %v2598, %v2598
    %v2605 = vmul.f32 %v2600, %v2600
    %v2606 = vmul.f32 %v2594, %v2602
    %v2607 = vmul.f32 %v2596, %v2603
    %v2608 = vmul.f32 %v2598, %v2604
    %v2609 = vmul.f32 %v2600, %v2605
    %v2610 = vmul.f32 %v2606, 0.044715
    %v2611 = vmul.f32 %v2607, 0.044715
    %v2612 = vmul.f32 %v2608, 0.044715
    %v2613 = vmul.f32 %v2609, 0.044715
    %v2614 = vadd.f32 %v2594, %v2610
    %v2615 = vadd.f32 %v2596, %v2611
    %v2616 = vadd.f32 %v2598, %v2612
    %v2617 = vadd.f32 %v2600, %v2613
    %v2618 = vmul.f32 %v2614, 0.7978846
    %v2619 = vmul.f32 %v2615, 0.7978846
    %v2620 = vmul.f32 %v2616, 0.7978846
    %v2621 = vmul.f32 %v2617, 0.7978846
    %v2622 = vtanh.pop %v2618
    %v2623 = vtanh.pop %v2619
    %v2624 = vtanh.pop %v2620
    %v2625 = vtanh.pop %v2621
    %v2626 = vadd.f32 %v2622, 1.0
    %v2627 = vadd.f32 %v2623, 1.0
    %v2628 = vadd.f32 %v2624, 1.0
    %v2629 = vadd.f32 %v2625, 1.0
    %v2630 = vmul.f32 %v2626, 0.5
    %v2631 = vmul.f32 %v2627, 0.5
    %v2632 = vmul.f32 %v2628, 0.5
    %v2633 = vmul.f32 %v2629, 0.5
    %v2634 = vmul.f32 %v2594, %v2630
    %v2635 = vmul.f32 %v2596, %v2631
    %v2636 = vmul.f32 %v2598, %v2632
    %v2637 = vmul.f32 %v2600, %v2633
    %v2638 = vpack.c.bf16 %v2636, %v2634
    %v2639 = vpack.c.bf16 %v2637, %v2635
    %v2640 = vld [vmem:[%s2440 + $0x8] sm:$0xff]
    %v2641 = vld [vmem:[%s2440 + $0x18] sm:$0xff]
    %v2642 = vld [vmem:[%s2440 + $0x28] sm:$0xff]
    %v2643 = vld [vmem:[%s2440 + $0x38] sm:$0xff]
    %v2644 = vld [vmem:[%s2440 + $0x48] sm:$0xff]
    %v2645 = vld [vmem:[%s2440 + $0x58] sm:$0xff]
    %v2646 = vld [vmem:[%s2440 + $0x68] sm:$0xff]
    %v2647 = vld [vmem:[%s2440 + $0x78] sm:$0xff]
    %v2648 = vld [vmem:[%s2440 + $0x88] sm:$0xff]
    %v2649 = vld [vmem:[%s2440 + $0x98] sm:$0xff]
    %v2650 = vld [vmem:[%s2440 + $0xa8] sm:$0xff]
    %v2651 = vld [vmem:[%s2440 + $0xb8] sm:$0xff]
    %v2652 = vld [vmem:[%s2440 + $0xc8] sm:$0xff]
    %v2653 = vld [vmem:[%s2440 + $0xd8] sm:$0xff]
    %v2654 = vld [vmem:[%s2440 + $0xe8] sm:$0xff]
    %v2655 = vld [vmem:[%s2440 + $0xf8] sm:$0xff]
    %v2656 = vld [vmem:[%s2457 + $0x2] sm:$0x3]
    %v2657 = vunpack.c.l.bf16 %v2656
    %v2659 = vlaneseq
    %v2660 = vshrl.u32 %v2659, 7
    %v2661 = vsub.s32 0, %v2660
    %v2662 = vrot.slane %v2657, %v2661
    %v2663 = vlaneseq
    %v2664 = vshrl.u32 %v2663, 7
    %v2665 = vsub.s32 2, %v2664
    %v2666 = vrot.slane %v2657, %v2665
    %v2669 = vlaneseq
    %v2670 = vshrl.u32 %v2669, 7
    %v2671 = vsub.s32 0, %v2670
    %v2672 = vrot.slane %v2662, %v2671
    %v2673 = vlaneseq
    %v2674 = vshrl.u32 %v2673, 7
    %v2675 = vsub.s32 0, %v2674
    %v2676 = vrot.slane %v2666, %v2675
    %v2693 = vunpack.c.l.b16 %v2640
    %v2694 = vunpack.c.h.b16 %v2640
    %v2695 = vunpack.c.l.b16 %v2641
    %v2696 = vunpack.c.h.b16 %v2641
    %v2697 = vunpack.c.l.b16 %v2642
    %v2698 = vunpack.c.h.b16 %v2642
    %v2699 = vunpack.c.l.b16 %v2643
    %v2700 = vunpack.c.h.b16 %v2643
    %v2701 = vunpack.c.l.b16 %v2644
    %v2702 = vunpack.c.h.b16 %v2644
    %v2703 = vunpack.c.l.b16 %v2645
    %v2704 = vunpack.c.h.b16 %v2645
    %v2705 = vunpack.c.l.b16 %v2646
    %v2706 = vunpack.c.h.b16 %v2646
    %v2707 = vunpack.c.l.b16 %v2647
    %v2708 = vunpack.c.h.b16 %v2647
    %v2709 = vunpack.c.l.b16 %v2648
    %v2710 = vunpack.c.h.b16 %v2648
    %v2711 = vunpack.c.l.b16 %v2649
    %v2712 = vunpack.c.h.b16 %v2649
    %v2713 = vunpack.c.l.b16 %v2650
    %v2714 = vunpack.c.h.b16 %v2650
    %v2715 = vunpack.c.l.b16 %v2651
    %v2716 = vunpack.c.h.b16 %v2651
    %v2717 = vunpack.c.l.b16 %v2652
    %v2718 = vunpack.c.h.b16 %v2652
    %v2719 = vunpack.c.l.b16 %v2653
    %v2720 = vunpack.c.h.b16 %v2653
    %v2721 = vunpack.c.l.b16 %v2654
    %v2722 = vunpack.c.h.b16 %v2654
    %v2723 = vunpack.c.l.b16 %v2655
    %v2724 = vunpack.c.h.b16 %v2655
    %v2725 = vpack.c.b16 %v2695, %v2693
    %v2726 = vpack.c.b16 %v2696, %v2694
    %v2727 = vpack.c.b16 %v2699, %v2697
    %v2728 = vpack.c.b16 %v2700, %v2698
    %v2729 = vpack.c.b16 %v2703, %v2701
    %v2730 = vpack.c.b16 %v2704, %v2702
    %v2731 = vpack.c.b16 %v2707, %v2705
    %v2732 = vpack.c.b16 %v2708, %v2706
    %v2733 = vpack.c.b16 %v2711, %v2709
    %v2734 = vpack.c.b16 %v2712, %v2710
    %v2735 = vpack.c.b16 %v2715, %v2713
    %v2736 = vpack.c.b16 %v2716, %v2714
    %v2737 = vpack.c.b16 %v2719, %v2717
    %v2738 = vpack.c.b16 %v2720, %v2718
    %v2739 = vpack.c.b16 %v2723, %v2721
    %v2740 = vpack.c.b16 %v2724, %v2722
    %2757 = vmatprep.subr.bf16.mxu0 %v2726
    %2758 = vmatpush1.bf16.msra.mxu0 %v2725
    %2759 = vmatprep.subr.bf16.mxu0 %v2728
    %2760 = vmatpush1.bf16.msra.mxu0 %v2727
    %2761 = vmatprep.subr.bf16.mxu0 %v2730
    %2762 = vmatpush1.bf16.msra.mxu0 %v2729
    %2763 = vmatprep.subr.bf16.mxu0 %v2732
    %2764 = vmatpush1.bf16.msra.mxu0 %v2731
    %2765 = vmatprep.subr.bf16.mxu0 %v2734
    %2766 = vmatpush1.bf16.msra.mxu0 %v2733
    %2767 = vmatprep.subr.bf16.mxu0 %v2736
    %2768 = vmatpush1.bf16.msra.mxu0 %v2735
    %2769 = vmatprep.subr.bf16.mxu0 %v2738
    %2770 = vmatpush1.bf16.msra.mxu0 %v2737
    %2771 = vmatprep.subr.bf16.mxu0 %v2740
    %2772 = vmatpush1.bf16.msra.mxu0 %v2739
    %2773 = vmatprep.subr.bf16.mxu0 0
    %2774 = vmatpush1.bf16.msra.mxu0 0
    %2775 = vmatprep.subr.bf16.mxu0 0
    %2776 = vmatpush1.bf16.msra.mxu0 0
    %2777 = vmatprep.subr.bf16.mxu0 0
    %2778 = vmatpush1.bf16.msra.mxu0 0
    %2779 = vmatprep.subr.bf16.mxu0 0
    %2780 = vmatpush1.bf16.msra.mxu0 0
    %2781 = vmatprep.subr.bf16.mxu0 0
    %2782 = vmatpush1.bf16.msra.mxu0 0
    %2783 = vmatprep.subr.bf16.mxu0 0
    %2784 = vmatpush1.bf16.msra.mxu0 0
    %2785 = vmatprep.subr.bf16.mxu0 0
    %2786 = vmatpush1.bf16.msra.mxu0 0
    %2787 = vmatprep.subr.bf16.mxu0 0
    %2788 = vmatpush1.bf16.msra.mxu0 0
    %2789 = vmatprep.mubr.bf16.mxu0 0
    %2790 = vmatmul.mubr.bf16.gmra.mrb[0].mxu0 %v2439
    %v2791 = vpop.f32.mrb[0].mxu0
    %v2792 = vadd.f32 %v2672, %v2791
    %v2793 = vpop.f32.mrb[0].mxu0
    %v2794 = vadd.f32 %v2676, %v2793
    %v2795 = vpop.f32.mrb[0].mxu0
    %v2796 = vadd.f32 %v2672, %v2795
    %v2797 = vpop.f32.mrb[0].mxu0
    %v2798 = vadd.f32 %v2676, %v2797
    %2799 = vdwg.mxu0
    %v2800 = vmul.f32 %v2792, %v2792
    %v2801 = vmul.f32 %v2794, %v2794
    %v2802 = vmul.f32 %v2796, %v2796
    %v2803 = vmul.f32 %v2798, %v2798
    %v2804 = vmul.f32 %v2792, %v2800
    %v2805 = vmul.f32 %v2794, %v2801
    %v2806 = vmul.f32 %v2796, %v2802
    %v2807 = vmul.f32 %v2798, %v2803
    %v2808 = vmul.f32 %v2804, 0.044715
    %v2809 = vmul.f32 %v2805, 0.044715
    %v2810 = vmul.f32 %v2806, 0.044715
    %v2811 = vmul.f32 %v2807, 0.044715
    %v2812 = vadd.f32 %v2792, %v2808
    %v2813 = vadd.f32 %v2794, %v2809
    %v2814 = vadd.f32 %v2796, %v2810
    %v2815 = vadd.f32 %v2798, %v2811
    %v2816 = vmul.f32 %v2812, 0.7978846
    %v2817 = vmul.f32 %v2813, 0.7978846
    %v2818 = vmul.f32 %v2814, 0.7978846
    %v2819 = vmul.f32 %v2815, 0.7978846
    %v2820 = vtanh.pop %v2816
    %v2821 = vtanh.pop %v2817
    %v2822 = vtanh.pop %v2818
    %v2823 = vtanh.pop %v2819
    %v2824 = vadd.f32 %v2820, 1.0
    %v2825 = vadd.f32 %v2821, 1.0
    %v2826 = vadd.f32 %v2822, 1.0
    %v2827 = vadd.f32 %v2823, 1.0
    %v2828 = vmul.f32 %v2824, 0.5
    %v2829 = vmul.f32 %v2825, 0.5
    %v2830 = vmul.f32 %v2826, 0.5
    %v2831 = vmul.f32 %v2827, 0.5
    %v2832 = vmul.f32 %v2792, %v2828
    %v2833 = vmul.f32 %v2794, %v2829
    %v2834 = vmul.f32 %v2796, %v2830
    %v2835 = vmul.f32 %v2798, %v2831
    %v2836 = vpack.c.bf16 %v2834, %v2832
    %v2837 = vpack.c.bf16 %v2835, %v2833
    %s2838 = scalar_lea.vmem [#allocation5], 768
    %v2839 = vld [vmem:[%s2838] sm:$0xf]
    %v2840 = vld [vmem:[%s2838 + $0x4] sm:$0xf]
    %v2841 = vld [vmem:[%s2838 + $0x8] sm:$0xf]
    %v2842 = vld [vmem:[%s2838 + $0xc] sm:$0xf]
    %v2843 = vld [vmem:[%s2838 + $0x10] sm:$0xf]
    %v2844 = vld [vmem:[%s2838 + $0x14] sm:$0xf]
    %v2845 = vld [vmem:[%s2838 + $0x18] sm:$0xf]
    %v2846 = vld [vmem:[%s2838 + $0x1c] sm:$0xf]
    %v2847 = vld [vmem:[%s2838 + $0x20] sm:$0xf]
    %v2848 = vld [vmem:[%s2838 + $0x24] sm:$0xf]
    %v2849 = vld [vmem:[%s2838 + $0x28] sm:$0xf]
    %v2850 = vld [vmem:[%s2838 + $0x2c] sm:$0xf]
    %v2851 = vld [vmem:[%s2838 + $0x30] sm:$0xf]
    %v2852 = vld [vmem:[%s2838 + $0x34] sm:$0xf]
    %v2853 = vld [vmem:[%s2838 + $0x38] sm:$0xf]
    %v2854 = vld [vmem:[%s2838 + $0x3c] sm:$0xf]
    %v2855 = vld [vmem:[%s2838 + $0x40] sm:$0xf]
    %v2856 = vld [vmem:[%s2838 + $0x44] sm:$0xf]
    %v2857 = vld [vmem:[%s2838 + $0x48] sm:$0xf]
    %v2858 = vld [vmem:[%s2838 + $0x4c] sm:$0xf]
    %v2859 = vld [vmem:[%s2838 + $0x50] sm:$0xf]
    %v2860 = vld [vmem:[%s2838 + $0x54] sm:$0xf]
    %v2861 = vld [vmem:[%s2838 + $0x58] sm:$0xf]
    %v2862 = vld [vmem:[%s2838 + $0x5c] sm:$0xf]
    %v2863 = vld [vmem:[%s2838 + $0x60] sm:$0xf]
    %v2864 = vld [vmem:[%s2838 + $0x64] sm:$0xf]
    %v2865 = vld [vmem:[%s2838 + $0x68] sm:$0xf]
    %v2866 = vld [vmem:[%s2838 + $0x6c] sm:$0xf]
    %v2867 = vld [vmem:[%s2838 + $0x70] sm:$0xf]
    %v2868 = vld [vmem:[%s2838 + $0x74] sm:$0xf]
    %v2869 = vld [vmem:[%s2838 + $0x78] sm:$0xf]
    %v2870 = vld [vmem:[%s2838 + $0x7c] sm:$0xf]
    %v2871 = vld [vmem:[%s2838 + $0x80] sm:$0xf]
    %v2872 = vld [vmem:[%s2838 + $0x84] sm:$0xf]
    %v2873 = vld [vmem:[%s2838 + $0x88] sm:$0xf]
    %v2874 = vld [vmem:[%s2838 + $0x8c] sm:$0xf]
    %v2875 = vld [vmem:[%s2838 + $0x90] sm:$0xf]
    %v2876 = vld [vmem:[%s2838 + $0x94] sm:$0xf]
    %v2877 = vld [vmem:[%s2838 + $0x98] sm:$0xf]
    %v2878 = vld [vmem:[%s2838 + $0x9c] sm:$0xf]
    %v2879 = vld [vmem:[%s2838 + $0xa0] sm:$0xf]
    %v2880 = vld [vmem:[%s2838 + $0xa4] sm:$0xf]
    %v2881 = vld [vmem:[%s2838 + $0xa8] sm:$0xf]
    %v2882 = vld [vmem:[%s2838 + $0xac] sm:$0xf]
    %v2883 = vld [vmem:[%s2838 + $0xb0] sm:$0xf]
    %v2884 = vld [vmem:[%s2838 + $0xb4] sm:$0xf]
    %v2885 = vld [vmem:[%s2838 + $0xb8] sm:$0xf]
    %v2886 = vld [vmem:[%s2838 + $0xbc] sm:$0xf]
    %v2887 = vld [vmem:[%s2838 + $0xc0] sm:$0xf]
    %v2888 = vld [vmem:[%s2838 + $0xc4] sm:$0xf]
    %v2889 = vld [vmem:[%s2838 + $0xc8] sm:$0xf]
    %v2890 = vld [vmem:[%s2838 + $0xcc] sm:$0xf]
    %v2891 = vld [vmem:[%s2838 + $0xd0] sm:$0xf]
    %v2892 = vld [vmem:[%s2838 + $0xd4] sm:$0xf]
    %v2893 = vld [vmem:[%s2838 + $0xd8] sm:$0xf]
    %v2894 = vld [vmem:[%s2838 + $0xdc] sm:$0xf]
    %v2895 = vld [vmem:[%s2838 + $0xe0] sm:$0xf]
    %v2896 = vld [vmem:[%s2838 + $0xe4] sm:$0xf]
    %v2897 = vld [vmem:[%s2838 + $0xe8] sm:$0xf]
    %v2898 = vld [vmem:[%s2838 + $0xec] sm:$0xf]
    %v2899 = vld [vmem:[%s2838 + $0xf0] sm:$0xf]
    %v2900 = vld [vmem:[%s2838 + $0xf4] sm:$0xf]
    %v2901 = vld [vmem:[%s2838 + $0xf8] sm:$0xf]
    %v2902 = vld [vmem:[%s2838 + $0xfc] sm:$0xf]
    %s2903 = scalar_lea.vmem %s4, 3
    %v2904 = vld [vmem:[%s2903] sm:$0x1]
    %v2905 = vunpack.c.l.bf16 %v2904
    %v2906 = vlaneseq
    %v2907 = vshrl.u32 %v2906, 7
    %v2908 = vsub.s32 0, %v2907
    %v2909 = vrot.slane %v2905, %v2908
    %v2974 = vunpack.c.l.b16 %v2839
    %v2975 = vunpack.c.l.b16 %v2840
    %v2976 = vunpack.c.l.b16 %v2841
    %v2977 = vunpack.c.l.b16 %v2842
    %v2978 = vunpack.c.l.b16 %v2843
    %v2979 = vunpack.c.l.b16 %v2844
    %v2980 = vunpack.c.l.b16 %v2845
    %v2981 = vunpack.c.l.b16 %v2846
    %v2982 = vunpack.c.l.b16 %v2847
    %v2983 = vunpack.c.l.b16 %v2848
    %v2984 = vunpack.c.l.b16 %v2849
    %v2985 = vunpack.c.l.b16 %v2850
    %v2986 = vunpack.c.l.b16 %v2851
    %v2987 = vunpack.c.l.b16 %v2852
    %v2988 = vunpack.c.l.b16 %v2853
    %v2989 = vunpack.c.l.b16 %v2854
    %v2990 = vunpack.c.l.b16 %v2855
    %v2991 = vunpack.c.l.b16 %v2856
    %v2992 = vunpack.c.l.b16 %v2857
    %v2993 = vunpack.c.l.b16 %v2858
    %v2994 = vunpack.c.l.b16 %v2859
    %v2995 = vunpack.c.l.b16 %v2860
    %v2996 = vunpack.c.l.b16 %v2861
    %v2997 = vunpack.c.l.b16 %v2862
    %v2998 = vunpack.c.l.b16 %v2863
    %v2999 = vunpack.c.l.b16 %v2864
    %v3000 = vunpack.c.l.b16 %v2865
    %v3001 = vunpack.c.l.b16 %v2866
    %v3002 = vunpack.c.l.b16 %v2867
    %v3003 = vunpack.c.l.b16 %v2868
    %v3004 = vunpack.c.l.b16 %v2869
    %v3005 = vunpack.c.l.b16 %v2870
    %v3006 = vunpack.c.l.b16 %v2871
    %v3007 = vunpack.c.l.b16 %v2872
    %v3008 = vunpack.c.l.b16 %v2873
    %v3009 = vunpack.c.l.b16 %v2874
    %v3010 = vunpack.c.l.b16 %v2875
    %v3011 = vunpack.c.l.b16 %v2876
    %v3012 = vunpack.c.l.b16 %v2877
    %v3013 = vunpack.c.l.b16 %v2878
    %v3014 = vunpack.c.l.b16 %v2879
    %v3015 = vunpack.c.l.b16 %v2880
    %v3016 = vunpack.c.l.b16 %v2881
    %v3017 = vunpack.c.l.b16 %v2882
    %v3018 = vunpack.c.l.b16 %v2883
    %v3019 = vunpack.c.l.b16 %v2884
    %v3020 = vunpack.c.l.b16 %v2885
    %v3021 = vunpack.c.l.b16 %v2886
    %v3022 = vunpack.c.l.b16 %v2887
    %v3023 = vunpack.c.l.b16 %v2888
    %v3024 = vunpack.c.l.b16 %v2889
    %v3025 = vunpack.c.l.b16 %v2890
    %v3026 = vunpack.c.l.b16 %v2891
    %v3027 = vunpack.c.l.b16 %v2892
    %v3028 = vunpack.c.l.b16 %v2893
    %v3029 = vunpack.c.l.b16 %v2894
    %v3030 = vunpack.c.l.b16 %v2895
    %v3031 = vunpack.c.l.b16 %v2896
    %v3032 = vunpack.c.l.b16 %v2897
    %v3033 = vunpack.c.l.b16 %v2898
    %v3034 = vunpack.c.l.b16 %v2899
    %v3035 = vunpack.c.l.b16 %v2900
    %v3036 = vunpack.c.l.b16 %v2901
    %v3037 = vunpack.c.l.b16 %v2902
    %v3038 = vpack.c.b16 %v2975, %v2974
    %v3039 = vpack.c.b16 %v2977, %v2976
    %v3040 = vpack.c.b16 %v2979, %v2978
    %v3041 = vpack.c.b16 %v2981, %v2980
    %v3042 = vpack.c.b16 %v2983, %v2982
    %v3043 = vpack.c.b16 %v2985, %v2984
    %v3044 = vpack.c.b16 %v2987, %v2986
    %v3045 = vpack.c.b16 %v2989, %v2988
    %v3046 = vpack.c.b16 %v2991, %v2990
    %v3047 = vpack.c.b16 %v2993, %v2992
    %v3048 = vpack.c.b16 %v2995, %v2994
    %v3049 = vpack.c.b16 %v2997, %v2996
    %v3050 = vpack.c.b16 %v2999, %v2998
    %v3051 = vpack.c.b16 %v3001, %v3000
    %v3052 = vpack.c.b16 %v3003, %v3002
    %v3053 = vpack.c.b16 %v3005, %v3004
    %v3054 = vpack.c.b16 %v3007, %v3006
    %v3055 = vpack.c.b16 %v3009, %v3008
    %v3056 = vpack.c.b16 %v3011, %v3010
    %v3057 = vpack.c.b16 %v3013, %v3012
    %v3058 = vpack.c.b16 %v3015, %v3014
    %v3059 = vpack.c.b16 %v3017, %v3016
    %v3060 = vpack.c.b16 %v3019, %v3018
    %v3061 = vpack.c.b16 %v3021, %v3020
    %v3062 = vpack.c.b16 %v3023, %v3022
    %v3063 = vpack.c.b16 %v3025, %v3024
    %v3064 = vpack.c.b16 %v3027, %v3026
    %v3065 = vpack.c.b16 %v3029, %v3028
    %v3066 = vpack.c.b16 %v3031, %v3030
    %v3067 = vpack.c.b16 %v3033, %v3032
    %v3068 = vpack.c.b16 %v3035, %v3034
    %v3069 = vpack.c.b16 %v3037, %v3036
    %3102 = vmatprep.subr.bf16.mxu0 0
    %3103 = vmatpush1.bf16.msra.mxu0 %v3038
    %3104 = vmatprep.subr.bf16.mxu0 0
    %3105 = vmatpush1.bf16.msra.mxu0 %v3039
    %3106 = vmatprep.subr.bf16.mxu0 0
    %3107 = vmatpush1.bf16.msra.mxu0 %v3040
    %3108 = vmatprep.subr.bf16.mxu0 0
    %3109 = vmatpush1.bf16.msra.mxu0 %v3041
    %3110 = vmatprep.subr.bf16.mxu0 0
    %3111 = vmatpush1.bf16.msra.mxu0 %v3042
    %3112 = vmatprep.subr.bf16.mxu0 0
    %3113 = vmatpush1.bf16.msra.mxu0 %v3043
    %3114 = vmatprep.subr.bf16.mxu0 0
    %3115 = vmatpush1.bf16.msra.mxu0 %v3044
    %3116 = vmatprep.subr.bf16.mxu0 0
    %3117 = vmatpush1.bf16.msra.mxu0 %v3045
    %3118 = vmatprep.subr.bf16.mxu0 0
    %3119 = vmatpush1.bf16.msra.mxu0 %v3046
    %3120 = vmatprep.subr.bf16.mxu0 0
    %3121 = vmatpush1.bf16.msra.mxu0 %v3047
    %3122 = vmatprep.subr.bf16.mxu0 0
    %3123 = vmatpush1.bf16.msra.mxu0 %v3048
    %3124 = vmatprep.subr.bf16.mxu0 0
    %3125 = vmatpush1.bf16.msra.mxu0 %v3049
    %3126 = vmatprep.subr.bf16.mxu0 0
    %3127 = vmatpush1.bf16.msra.mxu0 %v3050
    %3128 = vmatprep.subr.bf16.mxu0 0
    %3129 = vmatpush1.bf16.msra.mxu0 %v3051
    %3130 = vmatprep.subr.bf16.mxu0 0
    %3131 = vmatpush1.bf16.msra.mxu0 %v3052
    %3132 = vmatprep.subr.bf16.mxu0 0
    %3133 = vmatpush1.bf16.msra.mxu0 %v3053
    %3134 = vmatprep.mubr.bf16.mxu0 %v2639
    %3135 = vmatmul.mubr.bf16.gmra.mrb[0].mxu0 %v2638
    %v3136 = vpop.f32.mrb[0].mxu0
    %v3137 = vadd.f32 %v2909, %v3136
    %v3138 = vpop.f32.mrb[0].mxu0
    %v3139 = vpop.f32.mrb[0].mxu0
    %v3140 = vadd.f32 %v2909, %v3139
    %v3141 = vpop.f32.mrb[0].mxu0
    %3142 = vdwg.mxu0
    %3143 = vmatprep.subr.bf16.mxu0 0
    %3144 = vmatpush1.bf16.msra.mxu0 %v3054
    %3145 = vmatprep.subr.bf16.mxu0 0
    %3146 = vmatpush1.bf16.msra.mxu0 %v3055
    %3147 = vmatprep.subr.bf16.mxu0 0
    %3148 = vmatpush1.bf16.msra.mxu0 %v3056
    %3149 = vmatprep.subr.bf16.mxu0 0
    %3150 = vmatpush1.bf16.msra.mxu0 %v3057
    %3151 = vmatprep.subr.bf16.mxu0 0
    %3152 = vmatpush1.bf16.msra.mxu0 %v3058
    %3153 = vmatprep.subr.bf16.mxu0 0
    %3154 = vmatpush1.bf16.msra.mxu0 %v3059
    %3155 = vmatprep.subr.bf16.mxu0 0
    %3156 = vmatpush1.bf16.msra.mxu0 %v3060
    %3157 = vmatprep.subr.bf16.mxu0 0
    %3158 = vmatpush1.bf16.msra.mxu0 %v3061
    %3159 = vmatprep.subr.bf16.mxu0 0
    %3160 = vmatpush1.bf16.msra.mxu0 %v3062
    %3161 = vmatprep.subr.bf16.mxu0 0
    %3162 = vmatpush1.bf16.msra.mxu0 %v3063
    %3163 = vmatprep.subr.bf16.mxu0 0
    %3164 = vmatpush1.bf16.msra.mxu0 %v3064
    %3165 = vmatprep.subr.bf16.mxu0 0
    %3166 = vmatpush1.bf16.msra.mxu0 %v3065
    %3167 = vmatprep.subr.bf16.mxu0 0
    %3168 = vmatpush1.bf16.msra.mxu0 %v3066
    %3169 = vmatprep.subr.bf16.mxu0 0
    %3170 = vmatpush1.bf16.msra.mxu0 %v3067
    %3171 = vmatprep.subr.bf16.mxu0 0
    %3172 = vmatpush1.bf16.msra.mxu0 %v3068
    %3173 = vmatprep.subr.bf16.mxu0 0
    %3174 = vmatpush1.bf16.msra.mxu0 %v3069
    %3175 = vmatprep.mubr.bf16.mxu0 %v2837
    %3176 = vmatmul.mubr.bf16.gmra.mrb[0].mxu0 %v2836
    %v3177 = vpop.f32.mrb[0].mxu0
    %v3178 = vadd.f32 %v3137, %v3177
    %v3179 = vpop.f32.mrb[0].mxu0
    %v3180 = vpop.f32.mrb[0].mxu0
    %v3181 = vadd.f32 %v3140, %v3180
    %v3182 = vpop.f32.mrb[0].mxu0
    %3183 = vdwg.mxu0
    %v3184 = vadd.f32 %v3178, %v2437
    %v3185 = vadd.f32 %v3181, %v2438
    %3186 = vadd.xlane.f32.xlu0 %v3184
    %v3187 = vpop.xlane.xlu0 %3186
    %3188 = vadd.xlane.f32.xlu0 %v3185
    %v3189 = vpop.xlane.xlu0 %3188
    %v3190 = vmul.f32 %v3187, %v812
    %v3191 = vmul.f32 %v3189, %v812
    %v3192 = vmul.f32 %v3184, %v3184
    %v3193 = vmul.f32 %v3185, %v3185
    %3194 = vadd.xlane.f32.xlu0 %v3192
    %v3195 = vpop.xlane.xlu0 %3194
    %3196 = vadd.xlane.f32.xlu0 %v3193
    %v3197 = vpop.xlane.xlu0 %3196
    %v3198 = vmul.f32 %v3195, %v812
    %v3199 = vmul.f32 %v3197, %v812
    %v3200 = vmul.f32 %v3190, %v3190
    %v3201 = vmul.f32 %v3191, %v3191
    %v3202 = vsub.f32 %v3198, %v3200
    %v3203 = vsub.f32 %v3199, %v3201
    %v3204 = vsub.f32 %v3184, %v3190
    %v3205 = vsub.f32 %v3185, %v3191
    %v3206 = vadd.f32 %v3202, 1e-05
    %v3207 = vadd.f32 %v3203, 1e-05
    %v3208 = vrsqrt.pop %v3206
    %v3209 = vrsqrt.pop %v3207
    %v3210 = vmul.f32 %v3204, %v3208
    %v3211 = vmul.f32 %v3205, %v3209
    %s3212 = scalar_lea.vmem %s5, 3
    %v3213 = vld [vmem:[%s3212] sm:$0x1]
    %v3215 = vlaneseq
    %v3216 = vshrl.u32 %v3215, 7
    %v3217 = vsub.s32 0, %v3216
    %v3218 = vrot.slane %v3213, %v3217
    %v3220 = vmul.f32 %v3210, %v3218
    %v3221 = vmul.f32 %v3211, %v3218
    %s3222 = scalar_lea.vmem %s6, 3
    %v3223 = vld [vmem:[%s3222] sm:$0x1]
    %v3225 = vlaneseq
    %v3226 = vshrl.u32 %v3225, 7
    %v3227 = vsub.s32 0, %v3226
    %v3228 = vrot.slane %v3223, %v3227
    %v3230 = vadd.f32 %v3220, %v3228
    %v3231 = vadd.f32 %v3221, %v3228
    %v3232 = vpack.c.bf16 %v3231, %v3230
    %s3233 = scalar_lea.vmem [#allocation2], 1024
    %v3234 = vld [vmem:[%s3233] sm:$0xff]
    %v3235 = vld [vmem:[%s3233 + $0x10] sm:$0xff]
    %v3236 = vld [vmem:[%s3233 + $0x20] sm:$0xff]
    %v3237 = vld [vmem:[%s3233 + $0x30] sm:$0xff]
    %v3238 = vld [vmem:[%s3233 + $0x40] sm:$0xff]
    %v3239 = vld [vmem:[%s3233 + $0x50] sm:$0xff]
    %v3240 = vld [vmem:[%s3233 + $0x60] sm:$0xff]
    %v3241 = vld [vmem:[%s3233 + $0x70] sm:$0xff]
    %v3242 = vld [vmem:[%s3233 + $0x80] sm:$0xff]
    %v3243 = vld [vmem:[%s3233 + $0x90] sm:$0xff]
    %v3244 = vld [vmem:[%s3233 + $0xa0] sm:$0xff]
    %v3245 = vld [vmem:[%s3233 + $0xb0] sm:$0xff]
    %v3246 = vld [vmem:[%s3233 + $0xc0] sm:$0xff]
    %v3247 = vld [vmem:[%s3233 + $0xd0] sm:$0xff]
    %v3248 = vld [vmem:[%s3233 + $0xe0] sm:$0xff]
    %v3249 = vld [vmem:[%s3233 + $0xf0] sm:$0xff]
    %s3250 = scalar_lea.vmem %s2, 16
    %v3251 = vld [vmem:[%s3250] sm:$0x3]
    %v3252 = vunpack.c.l.bf16 %v3251
    %v3254 = vlaneseq
    %v3255 = vshrl.u32 %v3254, 7
    %v3256 = vsub.s32 0, %v3255
    %v3257 = vrot.slane %v3252, %v3256
    %v3258 = vlaneseq
    %v3259 = vshrl.u32 %v3258, 7
    %v3260 = vsub.s32 2, %v3259
    %v3261 = vrot.slane %v3252, %v3260
    %v3264 = vlaneseq
    %v3265 = vshrl.u32 %v3264, 7
    %v3266 = vsub.s32 0, %v3265
    %v3267 = vrot.slane %v3257, %v3266
    %v3268 = vlaneseq
    %v3269 = vshrl.u32 %v3268, 7
    %v3270 = vsub.s32 0, %v3269
    %v3271 = vrot.slane %v3261, %v3270
    %v3288 = vunpack.c.l.b16 %v3234
    %v3289 = vunpack.c.h.b16 %v3234
    %v3290 = vunpack.c.l.b16 %v3235
    %v3291 = vunpack.c.h.b16 %v3235
    %v3292 = vunpack.c.l.b16 %v3236
    %v3293 = vunpack.c.h.b16 %v3236
    %v3294 = vunpack.c.l.b16 %v3237
    %v3295 = vunpack.c.h.b16 %v3237
    %v3296 = vunpack.c.l.b16 %v3238
    %v3297 = vunpack.c.h.b16 %v3238
    %v3298 = vunpack.c.l.b16 %v3239
    %v3299 = vunpack.c.h.b16 %v3239
    %v3300 = vunpack.c.l.b16 %v3240
    %v3301 = vunpack.c.h.b16 %v3240
    %v3302 = vunpack.c.l.b16 %v3241
    %v3303 = vunpack.c.h.b16 %v3241
    %v3304 = vunpack.c.l.b16 %v3242
    %v3305 = vunpack.c.h.b16 %v3242
    %v3306 = vunpack.c.l.b16 %v3243
    %v3307 = vunpack.c.h.b16 %v3243
    %v3308 = vunpack.c.l.b16 %v3244
    %v3309 = vunpack.c.h.b16 %v3244
    %v3310 = vunpack.c.l.b16 %v3245
    %v3311 = vunpack.c.h.b16 %v3245
    %v3312 = vunpack.c.l.b16 %v3246
    %v3313 = vunpack.c.h.b16 %v3246
    %v3314 = vunpack.c.l.b16 %v3247
    %v3315 = vunpack.c.h.b16 %v3247
    %v3316 = vunpack.c.l.b16 %v3248
    %v3317 = vunpack.c.h.b16 %v3248
    %v3318 = vunpack.c.l.b16 %v3249
    %v3319 = vunpack.c.h.b16 %v3249
    %v3320 = vpack.c.b16 %v3290, %v3288
    %v3321 = vpack.c.b16 %v3291, %v3289
    %v3322 = vpack.c.b16 %v3294, %v3292
    %v3323 = vpack.c.b16 %v3295, %v3293
    %v3324 = vpack.c.b16 %v3298, %v3296
    %v3325 = vpack.c.b16 %v3299, %v3297
    %v3326 = vpack.c.b16 %v3302, %v3300
    %v3327 = vpack.c.b16 %v3303, %v3301
    %v3328 = vpack.c.b16 %v3306, %v3304
    %v3329 = vpack.c.b16 %v3307, %v3305
    %v3330 = vpack.c.b16 %v3310, %v3308
    %v3331 = vpack.c.b16 %v3311, %v3309
    %v3332 = vpack.c.b16 %v3314, %v3312
    %v3333 = vpack.c.b16 %v3315, %v3313
    %v3334 = vpack.c.b16 %v3318, %v3316
    %v3335 = vpack.c.b16 %v3319, %v3317
    %3352 = vmatprep.subr.bf16.mxu0 %v3321
    %3353 = vmatpush1.bf16.msra.mxu0 %v3320
    %3354 = vmatprep.subr.bf16.mxu0 %v3323
    %3355 = vmatpush1.bf16.msra.mxu0 %v3322
    %3356 = vmatprep.subr.bf16.mxu0 %v3325
    %3357 = vmatpush1.bf16.msra.mxu0 %v3324
    %3358 = vmatprep.subr.bf16.mxu0 %v3327
    %3359 = vmatpush1.bf16.msra.mxu0 %v3326
    %3360 = vmatprep.subr.bf16.mxu0 %v3329
    %3361 = vmatpush1.bf16.msra.mxu0 %v3328
    %3362 = vmatprep.subr.bf16.mxu0 %v3331
    %3363 = vmatpush1.bf16.msra.mxu0 %v3330
    %3364 = vmatprep.subr.bf16.mxu0 %v3333
    %3365 = vmatpush1.bf16.msra.mxu0 %v3332
    %3366 = vmatprep.subr.bf16.mxu0 %v3335
    %3367 = vmatpush1.bf16.msra.mxu0 %v3334
    %3368 = vmatprep.subr.bf16.mxu0 0
    %3369 = vmatpush1.bf16.msra.mxu0 0
    %3370 = vmatprep.subr.bf16.mxu0 0
    %3371 = vmatpush1.bf16.msra.mxu0 0
    %3372 = vmatprep.subr.bf16.mxu0 0
    %3373 = vmatpush1.bf16.msra.mxu0 0
    %3374 = vmatprep.subr.bf16.mxu0 0
    %3375 = vmatpush1.bf16.msra.mxu0 0
    %3376 = vmatprep.subr.bf16.mxu0 0
    %3377 = vmatpush1.bf16.msra.mxu0 0
    %3378 = vmatprep.subr.bf16.mxu0 0
    %3379 = vmatpush1.bf16.msra.mxu0 0
    %3380 = vmatprep.subr.bf16.mxu0 0
    %3381 = vmatpush1.bf16.msra.mxu0 0
    %3382 = vmatprep.subr.bf16.mxu0 0
    %3383 = vmatpush1.bf16.msra.mxu0 0
    %3384 = vmatprep.mubr.bf16.mxu0 0
    %3385 = vmatmul.mubr.bf16.gmra.mrb[0].mxu0 %v3232
    %v3386 = vpop.f32.mrb[0].mxu0
    %v3387 = vadd.f32 %v3267, %v3386
    %v3388 = vpop.f32.mrb[0].mxu0
    %v3389 = vadd.f32 %v3271, %v3388
    %v3390 = vpop.f32.mrb[0].mxu0
    %v3391 = vadd.f32 %v3267, %v3390
    %v3392 = vpop.f32.mrb[0].mxu0
    %v3393 = vadd.f32 %v3271, %v3392
    %3394 = vdwg.mxu0
    %v3395 = vmul.f32 %v3387, %v3387
    %v3396 = vmul.f32 %v3389, %v3389
    %v3397 = vmul.f32 %v3391, %v3391
    %v3398 = vmul.f32 %v3393, %v3393
    %v3399 = vmul.f32 %v3387, %v3395
    %v3400 = vmul.f32 %v3389, %v3396
    %v3401 = vmul.f32 %v3391, %v3397
    %v3402 = vmul.f32 %v3393, %v3398
    %v3403 = vmul.f32 %v3399, 0.044715
    %v3404 = vmul.f32 %v3400, 0.044715
    %v3405 = vmul.f32 %v3401, 0.044715
    %v3406 = vmul.f32 %v3402, 0.044715
    %v3407 = vadd.f32 %v3387, %v3403
    %v3408 = vadd.f32 %v3389, %v3404
    %v3409 = vadd.f32 %v3391, %v3405
    %v3410 = vadd.f32 %v3393, %v3406
    %v3411 = vmul.f32 %v3407, 0.7978846
    %v3412 = vmul.f32 %v3408, 0.7978846
    %v3413 = vmul.f32 %v3409, 0.7978846
    %v3414 = vmul.f32 %v3410, 0.7978846
    %v3415 = vtanh.pop %v3411
    %v3416 = vtanh.pop %v3412
    %v3417 = vtanh.pop %v3413
    %v3418 = vtanh.pop %v3414
    %v3419 = vadd.f32 %v3415, 1.0
    %v3420 = vadd.f32 %v3416, 1.0
    %v3421 = vadd.f32 %v3417, 1.0
    %v3422 = vadd.f32 %v3418, 1.0
    %v3423 = vmul.f32 %v3419, 0.5
    %v3424 = vmul.f32 %v3420, 0.5
    %v3425 = vmul.f32 %v3421, 0.5
    %v3426 = vmul.f32 %v3422, 0.5
    %v3427 = vmul.f32 %v3387, %v3423
    %v3428 = vmul.f32 %v3389, %v3424
    %v3429 = vmul.f32 %v3391, %v3425
    %v3430 = vmul.f32 %v3393, %v3426
    %v3431 = vpack.c.bf16 %v3429, %v3427
    %v3432 = vpack.c.bf16 %v3430, %v3428
    %v3433 = vld [vmem:[%s3233 + $0x8] sm:$0xff]
    %v3434 = vld [vmem:[%s3233 + $0x18] sm:$0xff]
    %v3435 = vld [vmem:[%s3233 + $0x28] sm:$0xff]
    %v3436 = vld [vmem:[%s3233 + $0x38] sm:$0xff]
    %v3437 = vld [vmem:[%s3233 + $0x48] sm:$0xff]
    %v3438 = vld [vmem:[%s3233 + $0x58] sm:$0xff]
    %v3439 = vld [vmem:[%s3233 + $0x68] sm:$0xff]
    %v3440 = vld [vmem:[%s3233 + $0x78] sm:$0xff]
    %v3441 = vld [vmem:[%s3233 + $0x88] sm:$0xff]
    %v3442 = vld [vmem:[%s3233 + $0x98] sm:$0xff]
    %v3443 = vld [vmem:[%s3233 + $0xa8] sm:$0xff]
    %v3444 = vld [vmem:[%s3233 + $0xb8] sm:$0xff]
    %v3445 = vld [vmem:[%s3233 + $0xc8] sm:$0xff]
    %v3446 = vld [vmem:[%s3233 + $0xd8] sm:$0xff]
    %v3447 = vld [vmem:[%s3233 + $0xe8] sm:$0xff]
    %v3448 = vld [vmem:[%s3233 + $0xf8] sm:$0xff]
    %v3449 = vld [vmem:[%s3250 + $0x2] sm:$0x3]
    %v3450 = vunpack.c.l.bf16 %v3449
    %v3452 = vlaneseq
    %v3453 = vshrl.u32 %v3452, 7
    %v3454 = vsub.s32 0, %v3453
    %v3455 = vrot.slane %v3450, %v3454
    %v3456 = vlaneseq
    %v3457 = vshrl.u32 %v3456, 7
    %v3458 = vsub.s32 2, %v3457
    %v3459 = vrot.slane %v3450, %v3458
    %v3462 = vlaneseq
    %v3463 = vshrl.u32 %v3462, 7
    %v3464 = vsub.s32 0, %v3463
    %v3465 = vrot.slane %v3455, %v3464
    %v3466 = vlaneseq
    %v3467 = vshrl.u32 %v3466, 7
    %v3468 = vsub.s32 0, %v3467
    %v3469 = vrot.slane %v3459, %v3468
    %v3486 = vunpack.c.l.b16 %v3433
    %v3487 = vunpack.c.h.b16 %v3433
    %v3488 = vunpack.c.l.b16 %v3434
    %v3489 = vunpack.c.h.b16 %v3434
    %v3490 = vunpack.c.l.b16 %v3435
    %v3491 = vunpack.c.h.b16 %v3435
    %v3492 = vunpack.c.l.b16 %v3436
    %v3493 = vunpack.c.h.b16 %v3436
    %v3494 = vunpack.c.l.b16 %v3437
    %v3495 = vunpack.c.h.b16 %v3437
    %v3496 = vunpack.c.l.b16 %v3438
    %v3497 = vunpack.c.h.b16 %v3438
    %v3498 = vunpack.c.l.b16 %v3439
    %v3499 = vunpack.c.h.b16 %v3439
    %v3500 = vunpack.c.l.b16 %v3440
    %v3501 = vunpack.c.h.b16 %v3440
    %v3502 = vunpack.c.l.b16 %v3441
    %v3503 = vunpack.c.h.b16 %v3441
    %v3504 = vunpack.c.l.b16 %v3442
    %v3505 = vunpack.c.h.b16 %v3442
    %v3506 = vunpack.c.l.b16 %v3443
    %v3507 = vunpack.c.h.b16 %v3443
    %v3508 = vunpack.c.l.b16 %v3444
    %v3509 = vunpack.c.h.b16 %v3444
    %v3510 = vunpack.c.l.b16 %v3445
    %v3511 = vunpack.c.h.b16 %v3445
    %v3512 = vunpack.c.l.b16 %v3446
    %v3513 = vunpack.c.h.b16 %v3446
    %v3514 = vunpack.c.l.b16 %v3447
    %v3515 = vunpack.c.h.b16 %v3447
    %v3516 = vunpack.c.l.b16 %v3448
    %v3517 = vunpack.c.h.b16 %v3448
    %v3518 = vpack.c.b16 %v3488, %v3486
    %v3519 = vpack.c.b16 %v3489, %v3487
    %v3520 = vpack.c.b16 %v3492, %v3490
    %v3521 = vpack.c.b16 %v3493, %v3491
    %v3522 = vpack.c.b16 %v3496, %v3494
    %v3523 = vpack.c.b16 %v3497, %v3495
    %v3524 = vpack.c.b16 %v3500, %v3498
    %v3525 = vpack.c.b16 %v3501, %v3499
    %v3526 = vpack.c.b16 %v3504, %v3502
    %v3527 = vpack.c.b16 %v3505, %v3503
    %v3528 = vpack.c.b16 %v3508, %v3506
    %v3529 = vpack.c.b16 %v3509, %v3507
    %v3530 = vpack.c.b16 %v3512, %v3510
    %v3531 = vpack.c.b16 %v3513, %v3511
    %v3532 = vpack.c.b16 %v3516, %v3514
    %v3533 = vpack.c.b16 %v3517, %v3515
    %3550 = vmatprep.subr.bf16.mxu0 %v3519
    %3551 = vmatpush1.bf16.msra.mxu0 %v3518
    %3552 = vmatprep.subr.bf16.mxu0 %v3521
    %3553 = vmatpush1.bf16.msra.mxu0 %v3520
    %3554 = vmatprep.subr.bf16.mxu0 %v3523
    %3555 = vmatpush1.bf16.msra.mxu0 %v3522
    %3556 = vmatprep.subr.bf16.mxu0 %v3525
    %3557 = vmatpush1.bf16.msra.mxu0 %v3524
    %3558 = vmatprep.subr.bf16.mxu0 %v3527
    %3559 = vmatpush1.bf16.msra.mxu0 %v3526
    %3560 = vmatprep.subr.bf16.mxu0 %v3529
    %3561 = vmatpush1.bf16.msra.mxu0 %v3528
    %3562 = vmatprep.subr.bf16.mxu0 %v3531
    %3563 = vmatpush1.bf16.msra.mxu0 %v3530
    %3564 = vmatprep.subr.bf16.mxu0 %v3533
    %3565 = vmatpush1.bf16.msra.mxu0 %v3532
    %3566 = vmatprep.subr.bf16.mxu0 0
    %3567 = vmatpush1.bf16.msra.mxu0 0
    %3568 = vmatprep.subr.bf16.mxu0 0
    %3569 = vmatpush1.bf16.msra.mxu0 0
    %3570 = vmatprep.subr.bf16.mxu0 0
    %3571 = vmatpush1.bf16.msra.mxu0 0
    %3572 = vmatprep.subr.bf16.mxu0 0
    %3573 = vmatpush1.bf16.msra.mxu0 0
    %3574 = vmatprep.subr.bf16.mxu0 0
    %3575 = vmatpush1.bf16.msra.mxu0 0
    %3576 = vmatprep.subr.bf16.mxu0 0
    %3577 = vmatpush1.bf16.msra.mxu0 0
    %3578 = vmatprep.subr.bf16.mxu0 0
    %3579 = vmatpush1.bf16.msra.mxu0 0
    %3580 = vmatprep.subr.bf16.mxu0 0
    %3581 = vmatpush1.bf16.msra.mxu0 0
    %3582 = vmatprep.mubr.bf16.mxu0 0
    %3583 = vmatmul.mubr.bf16.gmra.mrb[0].mxu0 %v3232
    %v3584 = vpop.f32.mrb[0].mxu0
    %v3585 = vadd.f32 %v3465, %v3584
    %v3586 = vpop.f32.mrb[0].mxu0
    %v3587 = vadd.f32 %v3469, %v3586
    %v3588 = vpop.f32.mrb[0].mxu0
    %v3589 = vadd.f32 %v3465, %v3588
    %v3590 = vpop.f32.mrb[0].mxu0
    %v3591 = vadd.f32 %v3469, %v3590
    %3592 = vdwg.mxu0
    %v3593 = vmul.f32 %v3585, %v3585
    %v3594 = vmul.f32 %v3587, %v3587
    %v3595 = vmul.f32 %v3589, %v3589
    %v3596 = vmul.f32 %v3591, %v3591
    %v3597 = vmul.f32 %v3585, %v3593
    %v3598 = vmul.f32 %v3587, %v3594
    %v3599 = vmul.f32 %v3589, %v3595
    %v3600 = vmul.f32 %v3591, %v3596
    %v3601 = vmul.f32 %v3597, 0.044715
    %v3602 = vmul.f32 %v3598, 0.044715
    %v3603 = vmul.f32 %v3599, 0.044715
    %v3604 = vmul.f32 %v3600, 0.044715
    %v3605 = vadd.f32 %v3585, %v3601
    %v3606 = vadd.f32 %v3587, %v3602
    %v3607 = vadd.f32 %v3589, %v3603
    %v3608 = vadd.f32 %v3591, %v3604
    %v3609 = vmul.f32 %v3605, 0.7978846
    %v3610 = vmul.f32 %v3606, 0.7978846
    %v3611 = vmul.f32 %v3607, 0.7978846
    %v3612 = vmul.f32 %v3608, 0.7978846
    %v3613 = vtanh.pop %v3609
    %v3614 = vtanh.pop %v3610
    %v3615 = vtanh.pop %v3611
    %v3616 = vtanh.pop %v3612
    %v3617 = vadd.f32 %v3613, 1.0
    %v3618 = vadd.f32 %v3614, 1.0
    %v3619 = vadd.f32 %v3615, 1.0
    %v3620 = vadd.f32 %v3616, 1.0
    %v3621 = vmul.f32 %v3617, 0.5
    %v3622 = vmul.f32 %v3618, 0.5
    %v3623 = vmul.f32 %v3619, 0.5
    %v3624 = vmul.f32 %v3620, 0.5
    %v3625 = vmul.f32 %v3585, %v3621
    %v3626 = vmul.f32 %v3587, %v3622
    %v3627 = vmul.f32 %v3589, %v3623
    %v3628 = vmul.f32 %v3591, %v3624
    %v3629 = vpack.c.bf16 %v3627, %v3625
    %v3630 = vpack.c.bf16 %v3628, %v3626
    %s3631 = scalar_lea.vmem [#allocation5], 1024
    %v3632 = vld [vmem:[%s3631] sm:$0xf]
    %v3633 = vld [vmem:[%s3631 + $0x4] sm:$0xf]
    %v3634 = vld [vmem:[%s3631 + $0x8] sm:$0xf]
    %v3635 = vld [vmem:[%s3631 + $0xc] sm:$0xf]
    %v3636 = vld [vmem:[%s3631 + $0x10] sm:$0xf]
    %v3637 = vld [vmem:[%s3631 + $0x14] sm:$0xf]
    %v3638 = vld [vmem:[%s3631 + $0x18] sm:$0xf]
    %v3639 = vld [vmem:[%s3631 + $0x1c] sm:$0xf]
    %v3640 = vld [vmem:[%s3631 + $0x20] sm:$0xf]
    %v3641 = vld [vmem:[%s3631 + $0x24] sm:$0xf]
    %v3642 = vld [vmem:[%s3631 + $0x28] sm:$0xf]
    %v3643 = vld [vmem:[%s3631 + $0x2c] sm:$0xf]
    %v3644 = vld [vmem:[%s3631 + $0x30] sm:$0xf]
    %v3645 = vld [vmem:[%s3631 + $0x34] sm:$0xf]
    %v3646 = vld [vmem:[%s3631 + $0x38] sm:$0xf]
    %v3647 = vld [vmem:[%s3631 + $0x3c] sm:$0xf]
    %v3648 = vld [vmem:[%s3631 + $0x40] sm:$0xf]
    %v3649 = vld [vmem:[%s3631 + $0x44] sm:$0xf]
    %v3650 = vld [vmem:[%s3631 + $0x48] sm:$0xf]
    %v3651 = vld [vmem:[%s3631 + $0x4c] sm:$0xf]
    %v3652 = vld [vmem:[%s3631 + $0x50] sm:$0xf]
    %v3653 = vld [vmem:[%s3631 + $0x54] sm:$0xf]
    %v3654 = vld [vmem:[%s3631 + $0x58] sm:$0xf]
    %v3655 = vld [vmem:[%s3631 + $0x5c] sm:$0xf]
    %v3656 = vld [vmem:[%s3631 + $0x60] sm:$0xf]
    %v3657 = vld [vmem:[%s3631 + $0x64] sm:$0xf]
    %v3658 = vld [vmem:[%s3631 + $0x68] sm:$0xf]
    %v3659 = vld [vmem:[%s3631 + $0x6c] sm:$0xf]
    %v3660 = vld [vmem:[%s3631 + $0x70] sm:$0xf]
    %v3661 = vld [vmem:[%s3631 + $0x74] sm:$0xf]
    %v3662 = vld [vmem:[%s3631 + $0x78] sm:$0xf]
    %v3663 = vld [vmem:[%s3631 + $0x7c] sm:$0xf]
    %v3664 = vld [vmem:[%s3631 + $0x80] sm:$0xf]
    %v3665 = vld [vmem:[%s3631 + $0x84] sm:$0xf]
    %v3666 = vld [vmem:[%s3631 + $0x88] sm:$0xf]
    %v3667 = vld [vmem:[%s3631 + $0x8c] sm:$0xf]
    %v3668 = vld [vmem:[%s3631 + $0x90] sm:$0xf]
    %v3669 = vld [vmem:[%s3631 + $0x94] sm:$0xf]
    %v3670 = vld [vmem:[%s3631 + $0x98] sm:$0xf]
    %v3671 = vld [vmem:[%s3631 + $0x9c] sm:$0xf]
    %v3672 = vld [vmem:[%s3631 + $0xa0] sm:$0xf]
    %v3673 = vld [vmem:[%s3631 + $0xa4] sm:$0xf]
    %v3674 = vld [vmem:[%s3631 + $0xa8] sm:$0xf]
    %v3675 = vld [vmem:[%s3631 + $0xac] sm:$0xf]
    %v3676 = vld [vmem:[%s3631 + $0xb0] sm:$0xf]
    %v3677 = vld [vmem:[%s3631 + $0xb4] sm:$0xf]
    %v3678 = vld [vmem:[%s3631 + $0xb8] sm:$0xf]
    %v3679 = vld [vmem:[%s3631 + $0xbc] sm:$0xf]
    %v3680 = vld [vmem:[%s3631 + $0xc0] sm:$0xf]
    %v3681 = vld [vmem:[%s3631 + $0xc4] sm:$0xf]
    %v3682 = vld [vmem:[%s3631 + $0xc8] sm:$0xf]
    %v3683 = vld [vmem:[%s3631 + $0xcc] sm:$0xf]
    %v3684 = vld [vmem:[%s3631 + $0xd0] sm:$0xf]
    %v3685 = vld [vmem:[%s3631 + $0xd4] sm:$0xf]
    %v3686 = vld [vmem:[%s3631 + $0xd8] sm:$0xf]
    %v3687 = vld [vmem:[%s3631 + $0xdc] sm:$0xf]
    %v3688 = vld [vmem:[%s3631 + $0xe0] sm:$0xf]
    %v3689 = vld [vmem:[%s3631 + $0xe4] sm:$0xf]
    %v3690 = vld [vmem:[%s3631 + $0xe8] sm:$0xf]
    %v3691 = vld [vmem:[%s3631 + $0xec] sm:$0xf]
    %v3692 = vld [vmem:[%s3631 + $0xf0] sm:$0xf]
    %v3693 = vld [vmem:[%s3631 + $0xf4] sm:$0xf]
    %v3694 = vld [vmem:[%s3631 + $0xf8] sm:$0xf]
    %v3695 = vld [vmem:[%s3631 + $0xfc] sm:$0xf]
    %s3696 = scalar_lea.vmem %s4, 4
    %v3697 = vld [vmem:[%s3696] sm:$0x1]
    %v3698 = vunpack.c.l.bf16 %v3697
    %v3699 = vlaneseq
    %v3700 = vshrl.u32 %v3699, 7
    %v3701 = vsub.s32 0, %v3700
    %v3702 = vrot.slane %v3698, %v3701
    %v3767 = vunpack.c.l.b16 %v3632
    %v3768 = vunpack.c.l.b16 %v3633
    %v3769 = vunpack.c.l.b16 %v3634
    %v3770 = vunpack.c.l.b16 %v3635
    %v3771 = vunpack.c.l.b16 %v3636
    %v3772 = vunpack.c.l.b16 %v3637
    %v3773 = vunpack.c.l.b16 %v3638
    %v3774 = vunpack.c.l.b16 %v3639
    %v3775 = vunpack.c.l.b16 %v3640
    %v3776 = vunpack.c.l.b16 %v3641
    %v3777 = vunpack.c.l.b16 %v3642
    %v3778 = vunpack.c.l.b16 %v3643
    %v3779 = vunpack.c.l.b16 %v3644
    %v3780 = vunpack.c.l.b16 %v3645
    %v3781 = vunpack.c.l.b16 %v3646
    %v3782 = vunpack.c.l.b16 %v3647
    %v3783 = vunpack.c.l.b16 %v3648
    %v3784 = vunpack.c.l.b16 %v3649
    %v3785 = vunpack.c.l.b16 %v3650
    %v3786 = vunpack.c.l.b16 %v3651
    %v3787 = vunpack.c.l.b16 %v3652
    %v3788 = vunpack.c.l.b16 %v3653
    %v3789 = vunpack.c.l.b16 %v3654
    %v3790 = vunpack.c.l.b16 %v3655
    %v3791 = vunpack.c.l.b16 %v3656
    %v3792 = vunpack.c.l.b16 %v3657
    %v3793 = vunpack.c.l.b16 %v3658
    %v3794 = vunpack.c.l.b16 %v3659
    %v3795 = vunpack.c.l.b16 %v3660
    %v3796 = vunpack.c.l.b16 %v3661
    %v3797 = vunpack.c.l.b16 %v3662
    %v3798 = vunpack.c.l.b16 %v3663
    %v3799 = vunpack.c.l.b16 %v3664
    %v3800 = vunpack.c.l.b16 %v3665
    %v3801 = vunpack.c.l.b16 %v3666
    %v3802 = vunpack.c.l.b16 %v3667
    %v3803 = vunpack.c.l.b16 %v3668
    %v3804 = vunpack.c.l.b16 %v3669
    %v3805 = vunpack.c.l.b16 %v3670
    %v3806 = vunpack.c.l.b16 %v3671
    %v3807 = vunpack.c.l.b16 %v3672
    %v3808 = vunpack.c.l.b16 %v3673
    %v3809 = vunpack.c.l.b16 %v3674
    %v3810 = vunpack.c.l.b16 %v3675
    %v3811 = vunpack.c.l.b16 %v3676
    %v3812 = vunpack.c.l.b16 %v3677
    %v3813 = vunpack.c.l.b16 %v3678
    %v3814 = vunpack.c.l.b16 %v3679
    %v3815 = vunpack.c.l.b16 %v3680
    %v3816 = vunpack.c.l.b16 %v3681
    %v3817 = vunpack.c.l.b16 %v3682
    %v3818 = vunpack.c.l.b16 %v3683
    %v3819 = vunpack.c.l.b16 %v3684
    %v3820 = vunpack.c.l.b16 %v3685
    %v3821 = vunpack.c.l.b16 %v3686
    %v3822 = vunpack.c.l.b16 %v3687
    %v3823 = vunpack.c.l.b16 %v3688
    %v3824 = vunpack.c.l.b16 %v3689
    %v3825 = vunpack.c.l.b16 %v3690
    %v3826 = vunpack.c.l.b16 %v3691
    %v3827 = vunpack.c.l.b16 %v3692
    %v3828 = vunpack.c.l.b16 %v3693
    %v3829 = vunpack.c.l.b16 %v3694
    %v3830 = vunpack.c.l.b16 %v3695
    %v3831 = vpack.c.b16 %v3768, %v3767
    %v3832 = vpack.c.b16 %v3770, %v3769
    %v3833 = vpack.c.b16 %v3772, %v3771
    %v3834 = vpack.c.b16 %v3774, %v3773
    %v3835 = vpack.c.b16 %v3776, %v3775
    %v3836 = vpack.c.b16 %v3778, %v3777
    %v3837 = vpack.c.b16 %v3780, %v3779
    %v3838 = vpack.c.b16 %v3782, %v3781
    %v3839 = vpack.c.b16 %v3784, %v3783
    %v3840 = vpack.c.b16 %v3786, %v3785
    %v3841 = vpack.c.b16 %v3788, %v3787
    %v3842 = vpack.c.b16 %v3790, %v3789
    %v3843 = vpack.c.b16 %v3792, %v3791
    %v3844 = vpack.c.b16 %v3794, %v3793
    %v3845 = vpack.c.b16 %v3796, %v3795
    %v3846 = vpack.c.b16 %v3798, %v3797
    %v3847 = vpack.c.b16 %v3800, %v3799
    %v3848 = vpack.c.b16 %v3802, %v3801
    %v3849 = vpack.c.b16 %v3804, %v3803
    %v3850 = vpack.c.b16 %v3806, %v3805
    %v3851 = vpack.c.b16 %v3808, %v3807
    %v3852 = vpack.c.b16 %v3810, %v3809
    %v3853 = vpack.c.b16 %v3812, %v3811
    %v3854 = vpack.c.b16 %v3814, %v3813
    %v3855 = vpack.c.b16 %v3816, %v3815
    %v3856 = vpack.c.b16 %v3818, %v3817
    %v3857 = vpack.c.b16 %v3820, %v3819
    %v3858 = vpack.c.b16 %v3822, %v3821
    %v3859 = vpack.c.b16 %v3824, %v3823
    %v3860 = vpack.c.b16 %v3826, %v3825
    %v3861 = vpack.c.b16 %v3828, %v3827
    %v3862 = vpack.c.b16 %v3830, %v3829
    %3895 = vmatprep.subr.bf16.mxu0 0
    %3896 = vmatpush1.bf16.msra.mxu0 %v3831
    %3897 = vmatprep.subr.bf16.mxu0 0
    %3898 = vmatpush1.bf16.msra.mxu0 %v3832
    %3899 = vmatprep.subr.bf16.mxu0 0
    %3900 = vmatpush1.bf16.msra.mxu0 %v3833
    %3901 = vmatprep.subr.bf16.mxu0 0
    %3902 = vmatpush1.bf16.msra.mxu0 %v3834
    %3903 = vmatprep.subr.bf16.mxu0 0
    %3904 = vmatpush1.bf16.msra.mxu0 %v3835
    %3905 = vmatprep.subr.bf16.mxu0 0
    %3906 = vmatpush1.bf16.msra.mxu0 %v3836
    %3907 = vmatprep.subr.bf16.mxu0 0
    %3908 = vmatpush1.bf16.msra.mxu0 %v3837
    %3909 = vmatprep.subr.bf16.mxu0 0
    %3910 = vmatpush1.bf16.msra.mxu0 %v3838
    %3911 = vmatprep.subr.bf16.mxu0 0
    %3912 = vmatpush1.bf16.msra.mxu0 %v3839
    %3913 = vmatprep.subr.bf16.mxu0 0
    %3914 = vmatpush1.bf16.msra.mxu0 %v3840
    %3915 = vmatprep.subr.bf16.mxu0 0
    %3916 = vmatpush1.bf16.msra.mxu0 %v3841
    %3917 = vmatprep.subr.bf16.mxu0 0
    %3918 = vmatpush1.bf16.msra.mxu0 %v3842
    %3919 = vmatprep.subr.bf16.mxu0 0
    %3920 = vmatpush1.bf16.msra.mxu0 %v3843
    %3921 = vmatprep.subr.bf16.mxu0 0
    %3922 = vmatpush1.bf16.msra.mxu0 %v3844
    %3923 = vmatprep.subr.bf16.mxu0 0
    %3924 = vmatpush1.bf16.msra.mxu0 %v3845
    %3925 = vmatprep.subr.bf16.mxu0 0
    %3926 = vmatpush1.bf16.msra.mxu0 %v3846
    %3927 = vmatprep.mubr.bf16.mxu0 %v3432
    %3928 = vmatmul.mubr.bf16.gmra.mrb[0].mxu0 %v3431
    %v3929 = vpop.f32.mrb[0].mxu0
    %v3930 = vadd.f32 %v3702, %v3929
    %v3931 = vpop.f32.mrb[0].mxu0
    %v3932 = vpop.f32.mrb[0].mxu0
    %v3933 = vadd.f32 %v3702, %v3932
    %v3934 = vpop.f32.mrb[0].mxu0
    %3935 = vdwg.mxu0
    %3936 = vmatprep.subr.bf16.mxu0 0
    %3937 = vmatpush1.bf16.msra.mxu0 %v3847
    %3938 = vmatprep.subr.bf16.mxu0 0
    %3939 = vmatpush1.bf16.msra.mxu0 %v3848
    %3940 = vmatprep.subr.bf16.mxu0 0
    %3941 = vmatpush1.bf16.msra.mxu0 %v3849
    %3942 = vmatprep.subr.bf16.mxu0 0
    %3943 = vmatpush1.bf16.msra.mxu0 %v3850
    %3944 = vmatprep.subr.bf16.mxu0 0
    %3945 = vmatpush1.bf16.msra.mxu0 %v3851
    %3946 = vmatprep.subr.bf16.mxu0 0
    %3947 = vmatpush1.bf16.msra.mxu0 %v3852
    %3948 = vmatprep.subr.bf16.mxu0 0
    %3949 = vmatpush1.bf16.msra.mxu0 %v3853
    %3950 = vmatprep.subr.bf16.mxu0 0
    %3951 = vmatpush1.bf16.msra.mxu0 %v3854
    %3952 = vmatprep.subr.bf16.mxu0 0
    %3953 = vmatpush1.bf16.msra.mxu0 %v3855
    %3954 = vmatprep.subr.bf16.mxu0 0
    %3955 = vmatpush1.bf16.msra.mxu0 %v3856
    %3956 = vmatprep.subr.bf16.mxu0 0
    %3957 = vmatpush1.bf16.msra.mxu0 %v3857
    %3958 = vmatprep.subr.bf16.mxu0 0
    %3959 = vmatpush1.bf16.msra.mxu0 %v3858
    %3960 = vmatprep.subr.bf16.mxu0 0
    %3961 = vmatpush1.bf16.msra.mxu0 %v3859
    %3962 = vmatprep.subr.bf16.mxu0 0
    %3963 = vmatpush1.bf16.msra.mxu0 %v3860
    %3964 = vmatprep.subr.bf16.mxu0 0
    %3965 = vmatpush1.bf16.msra.mxu0 %v3861
    %3966 = vmatprep.subr.bf16.mxu0 0
    %3967 = vmatpush1.bf16.msra.mxu0 %v3862
    %3968 = vmatprep.mubr.bf16.mxu0 %v3630
    %3969 = vmatmul.mubr.bf16.gmra.mrb[0].mxu0 %v3629
    %v3970 = vpop.f32.mrb[0].mxu0
    %v3971 = vadd.f32 %v3930, %v3970
    %v3972 = vpop.f32.mrb[0].mxu0
    %v3973 = vpop.f32.mrb[0].mxu0
    %v3974 = vadd.f32 %v3933, %v3973
    %v3975 = vpop.f32.mrb[0].mxu0
    %3976 = vdwg.mxu0
    %v3977 = vadd.f32 %v3971, %v3230
    %v3978 = vadd.f32 %v3974, %v3231
    %3979 = vadd.xlane.f32.xlu0 %v3977
    %v3980 = vpop.xlane.xlu0 %3979
    %3981 = vadd.xlane.f32.xlu0 %v3978
    %v3982 = vpop.xlane.xlu0 %3981
    %v3983 = vmul.f32 %v3980, %v812
    %v3984 = vmul.f32 %v3982, %v812
    %v3985 = vmul.f32 %v3977, %v3977
    %v3986 = vmul.f32 %v3978, %v3978
    %3987 = vadd.xlane.f32.xlu0 %v3985
    %v3988 = vpop.xlane.xlu0 %3987
    %3989 = vadd.xlane.f32.xlu0 %v3986
    %v3990 = vpop.xlane.xlu0 %3989
    %v3991 = vmul.f32 %v3988, %v812
    %v3992 = vmul.f32 %v3990, %v812
    %v3993 = vmul.f32 %v3983, %v3983
    %v3994 = vmul.f32 %v3984, %v3984
    %v3995 = vsub.f32 %v3991, %v3993
    %v3996 = vsub.f32 %v3992, %v3994
    %v3997 = vsub.f32 %v3977, %v3983
    %v3998 = vsub.f32 %v3978, %v3984
    %v3999 = vadd.f32 %v3995, 1e-05
    %v4000 = vadd.f32 %v3996, 1e-05
    %v4001 = vrsqrt.pop %v3999
    %v4002 = vrsqrt.pop %v4000
    %v4003 = vmul.f32 %v3997, %v4001
    %v4004 = vmul.f32 %v3998, %v4002
    %s4005 = scalar_lea.vmem %s5, 4
    %v4006 = vld [vmem:[%s4005] sm:$0x1]
    %v4008 = vlaneseq
    %v4009 = vshrl.u32 %v4008, 7
    %v4010 = vsub.s32 0, %v4009
    %v4011 = vrot.slane %v4006, %v4010
    %v4013 = vmul.f32 %v4003, %v4011
    %v4014 = vmul.f32 %v4004, %v4011
    %s4015 = scalar_lea.vmem %s6, 4
    %v4016 = vld [vmem:[%s4015] sm:$0x1]
    %v4018 = vlaneseq
    %v4019 = vshrl.u32 %v4018, 7
    %v4020 = vsub.s32 0, %v4019
    %v4021 = vrot.slane %v4016, %v4020
    %v4023 = vadd.f32 %v4013, %v4021
    %v4024 = vadd.f32 %v4014, %v4021
    %v4025 = vpack.c.bf16 %v4024, %v4023
    %s4026 = scalar_lea.vmem [#allocation2], 1280
    %v4027 = vld [vmem:[%s4026] sm:$0xff]
    %v4028 = vld [vmem:[%s4026 + $0x10] sm:$0xff]
    %v4029 = vld [vmem:[%s4026 + $0x20] sm:$0xff]
    %v4030 = vld [vmem:[%s4026 + $0x30] sm:$0xff]
    %v4031 = vld [vmem:[%s4026 + $0x40] sm:$0xff]
    %v4032 = vld [vmem:[%s4026 + $0x50] sm:$0xff]
    %v4033 = vld [vmem:[%s4026 + $0x60] sm:$0xff]
    %v4034 = vld [vmem:[%s4026 + $0x70] sm:$0xff]
    %v4035 = vld [vmem:[%s4026 + $0x80] sm:$0xff]
    %v4036 = vld [vmem:[%s4026 + $0x90] sm:$0xff]
    %v4037 = vld [vmem:[%s4026 + $0xa0] sm:$0xff]
    %v4038 = vld [vmem:[%s4026 + $0xb0] sm:$0xff]
    %v4039 = vld [vmem:[%s4026 + $0xc0] sm:$0xff]
    %v4040 = vld [vmem:[%s4026 + $0xd0] sm:$0xff]
    %v4041 = vld [vmem:[%s4026 + $0xe0] sm:$0xff]
    %v4042 = vld [vmem:[%s4026 + $0xf0] sm:$0xff]
    %s4043 = scalar_lea.vmem %s2, 20
    %v4044 = vld [vmem:[%s4043] sm:$0x3]
    %v4045 = vunpack.c.l.bf16 %v4044
    %v4047 = vlaneseq
    %v4048 = vshrl.u32 %v4047, 7
    %v4049 = vsub.s32 0, %v4048
    %v4050 = vrot.slane %v4045, %v4049
    %v4051 = vlaneseq
    %v4052 = vshrl.u32 %v4051, 7
    %v4053 = vsub.s32 2, %v4052
    %v4054 = vrot.slane %v4045, %v4053
    %v4057 = vlaneseq
    %v4058 = vshrl.u32 %v4057, 7
    %v4059 = vsub.s32 0, %v4058
    %v4060 = vrot.slane %v4050, %v4059
    %v4061 = vlaneseq
    %v4062 = vshrl.u32 %v4061, 7
    %v4063 = vsub.s32 0, %v4062
    %v4064 = vrot.slane %v4054, %v4063
    %v4081 = vunpack.c.l.b16 %v4027
    %v4082 = vunpack.c.h.b16 %v4027
    %v4083 = vunpack.c.l.b16 %v4028
    %v4084 = vunpack.c.h.b16 %v4028
    %v4085 = vunpack.c.l.b16 %v4029
    %v4086 = vunpack.c.h.b16 %v4029
    %v4087 = vunpack.c.l.b16 %v4030
    %v4088 = vunpack.c.h.b16 %v4030
    %v4089 = vunpack.c.l.b16 %v4031
    %v4090 = vunpack.c.h.b16 %v4031
    %v4091 = vunpack.c.l.b16 %v4032
    %v4092 = vunpack.c.h.b16 %v4032
    %v4093 = vunpack.c.l.b16 %v4033
    %v4094 = vunpack.c.h.b16 %v4033
    %v4095 = vunpack.c.l.b16 %v4034
    %v4096 = vunpack.c.h.b16 %v4034
    %v4097 = vunpack.c.l.b16 %v4035
    %v4098 = vunpack.c.h.b16 %v4035
    %v4099 = vunpack.c.l.b16 %v4036
    %v4100 = vunpack.c.h.b16 %v4036
    %v4101 = vunpack.c.l.b16 %v4037
    %v4102 = vunpack.c.h.b16 %v4037
    %v4103 = vunpack.c.l.b16 %v4038
    %v4104 = vunpack.c.h.b16 %v4038
    %v4105 = vunpack.c.l.b16 %v4039
    %v4106 = vunpack.c.h.b16 %v4039
    %v4107 = vunpack.c.l.b16 %v4040
    %v4108 = vunpack.c.h.b16 %v4040
    %v4109 = vunpack.c.l.b16 %v4041
    %v4110 = vunpack.c.h.b16 %v4041
    %v4111 = vunpack.c.l.b16 %v4042
    %v4112 = vunpack.c.h.b16 %v4042
    %v4113 = vpack.c.b16 %v4083, %v4081
    %v4114 = vpack.c.b16 %v4084, %v4082
    %v4115 = vpack.c.b16 %v4087, %v4085
    %v4116 = vpack.c.b16 %v4088, %v4086
    %v4117 = vpack.c.b16 %v4091, %v4089
    %v4118 = vpack.c.b16 %v4092, %v4090
    %v4119 = vpack.c.b16 %v4095, %v4093
    %v4120 = vpack.c.b16 %v4096, %v4094
    %v4121 = vpack.c.b16 %v4099, %v4097
    %v4122 = vpack.c.b16 %v4100, %v4098
    %v4123 = vpack.c.b16 %v4103, %v4101
    %v4124 = vpack.c.b16 %v4104, %v4102
    %v4125 = vpack.c.b16 %v4107, %v4105
    %v4126 = vpack.c.b16 %v4108, %v4106
    %v4127 = vpack.c.b16 %v4111, %v4109
    %v4128 = vpack.c.b16 %v4112, %v4110
    %4145 = vmatprep.subr.bf16.mxu0 %v4114
    %4146 = vmatpush1.bf16.msra.mxu0 %v4113
    %4147 = vmatprep.subr.bf16.mxu0 %v4116
    %4148 = vmatpush1.bf16.msra.mxu0 %v4115
    %4149 = vmatprep.subr.bf16.mxu0 %v4118
    %4150 = vmatpush1.bf16.msra.mxu0 %v4117
    %4151 = vmatprep.subr.bf16.mxu0 %v4120
    %4152 = vmatpush1.bf16.msra.mxu0 %v4119
    %4153 = vmatprep.subr.bf16.mxu0 %v4122
    %4154 = vmatpush1.bf16.msra.mxu0 %v4121
    %4155 = vmatprep.subr.bf16.mxu0 %v4124
    %4156 = vmatpush1.bf16.msra.mxu0 %v4123
    %4157 = vmatprep.subr.bf16.mxu0 %v4126
    %4158 = vmatpush1.bf16.msra.mxu0 %v4125
    %4159 = vmatprep.subr.bf16.mxu0 %v4128
    %4160 = vmatpush1.bf16.msra.mxu0 %v4127
    %4161 = vmatprep.subr.bf16.mxu0 0
    %4162 = vmatpush1.bf16.msra.mxu0 0
    %4163 = vmatprep.subr.bf16.mxu0 0
    %4164 = vmatpush1.bf16.msra.mxu0 0
    %4165 = vmatprep.subr.bf16.mxu0 0
    %4166 = vmatpush1.bf16.msra.mxu0 0
    %4167 = vmatprep.subr.bf16.mxu0 0
    %4168 = vmatpush1.bf16.msra.mxu0 0
    %4169 = vmatprep.subr.bf16.mxu0 0
    %4170 = vmatpush1.bf16.msra.mxu0 0
    %4171 = vmatprep.subr.bf16.mxu0 0
    %4172 = vmatpush1.bf16.msra.mxu0 0
    %4173 = vmatprep.subr.bf16.mxu0 0
    %4174 = vmatpush1.bf16.msra.mxu0 0
    %4175 = vmatprep.subr.bf16.mxu0 0
    %4176 = vmatpush1.bf16.msra.mxu0 0
    %4177 = vmatprep.mubr.bf16.mxu0 0
    %4178 = vmatmul.mubr.bf16.gmra.mrb[0].mxu0 %v4025
    %v4179 = vpop.f32.mrb[0].mxu0
    %v4180 = vadd.f32 %v4060, %v4179
    %v4181 = vpop.f32.mrb[0].mxu0
    %v4182 = vadd.f32 %v4064, %v4181
    %v4183 = vpop.f32.mrb[0].mxu0
    %v4184 = vadd.f32 %v4060, %v4183
    %v4185 = vpop.f32.mrb[0].mxu0
    %v4186 = vadd.f32 %v4064, %v4185
    %4187 = vdwg.mxu0
    %v4188 = vmul.f32 %v4180, %v4180
    %v4189 = vmul.f32 %v4182, %v4182
    %v4190 = vmul.f32 %v4184, %v4184
    %v4191 = vmul.f32 %v4186, %v4186
    %v4192 = vmul.f32 %v4180, %v4188
    %v4193 = vmul.f32 %v4182, %v4189
    %v4194 = vmul.f32 %v4184, %v4190
    %v4195 = vmul.f32 %v4186, %v4191
    %v4196 = vmul.f32 %v4192, 0.044715
    %v4197 = vmul.f32 %v4193, 0.044715
    %v4198 = vmul.f32 %v4194, 0.044715
    %v4199 = vmul.f32 %v4195, 0.044715
    %v4200 = vadd.f32 %v4180, %v4196
    %v4201 = vadd.f32 %v4182, %v4197
    %v4202 = vadd.f32 %v4184, %v4198
    %v4203 = vadd.f32 %v4186, %v4199
    %v4204 = vmul.f32 %v4200, 0.7978846
    %v4205 = vmul.f32 %v4201, 0.7978846
    %v4206 = vmul.f32 %v4202, 0.7978846
    %v4207 = vmul.f32 %v4203, 0.7978846
    %v4208 = vtanh.pop %v4204
    %v4209 = vtanh.pop %v4205
    %v4210 = vtanh.pop %v4206
    %v4211 = vtanh.pop %v4207
    %v4212 = vadd.f32 %v4208, 1.0
    %v4213 = vadd.f32 %v4209, 1.0
    %v4214 = vadd.f32 %v4210, 1.0
    %v4215 = vadd.f32 %v4211, 1.0
    %v4216 = vmul.f32 %v4212, 0.5
    %v4217 = vmul.f32 %v4213, 0.5
    %v4218 = vmul.f32 %v4214, 0.5
    %v4219 = vmul.f32 %v4215, 0.5
    %v4220 = vmul.f32 %v4180, %v4216
    %v4221 = vmul.f32 %v4182, %v4217
    %v4222 = vmul.f32 %v4184, %v4218
    %v4223 = vmul.f32 %v4186, %v4219
    %v4224 = vpack.c.bf16 %v4222, %v4220
    %v4225 = vpack.c.bf16 %v4223, %v4221
    %v4226 = vld [vmem:[%s4026 + $0x8] sm:$0xff]
    %v4227 = vld [vmem:[%s4026 + $0x18] sm:$0xff]
    %v4228 = vld [vmem:[%s4026 + $0x28] sm:$0xff]
    %v4229 = vld [vmem:[%s4026 + $0x38] sm:$0xff]
    %v4230 = vld [vmem:[%s4026 + $0x48] sm:$0xff]
    %v4231 = vld [vmem:[%s4026 + $0x58] sm:$0xff]
    %v4232 = vld [vmem:[%s4026 + $0x68] sm:$0xff]
    %v4233 = vld [vmem:[%s4026 + $0x78] sm:$0xff]
    %v4234 = vld [vmem:[%s4026 + $0x88] sm:$0xff]
    %v4235 = vld [vmem:[%s4026 + $0x98] sm:$0xff]
    %v4236 = vld [vmem:[%s4026 + $0xa8] sm:$0xff]
    %v4237 = vld [vmem:[%s4026 + $0xb8] sm:$0xff]
    %v4238 = vld [vmem:[%s4026 + $0xc8] sm:$0xff]
    %v4239 = vld [vmem:[%s4026 + $0xd8] sm:$0xff]
    %v4240 = vld [vmem:[%s4026 + $0xe8] sm:$0xff]
    %v4241 = vld [vmem:[%s4026 + $0xf8] sm:$0xff]
    %v4242 = vld [vmem:[%s4043 + $0x2] sm:$0x3]
    %v4243 = vunpack.c.l.bf16 %v4242
    %v4245 = vlaneseq
    %v4246 = vshrl.u32 %v4245, 7
    %v4247 = vsub.s32 0, %v4246
    %v4248 = vrot.slane %v4243, %v4247
    %v4249 = vlaneseq
    %v4250 = vshrl.u32 %v4249, 7
    %v4251 = vsub.s32 2, %v4250
    %v4252 = vrot.slane %v4243, %v4251
    %v4255 = vlaneseq
    %v4256 = vshrl.u32 %v4255, 7
    %v4257 = vsub.s32 0, %v4256
    %v4258 = vrot.slane %v4248, %v4257
    %v4259 = vlaneseq
    %v4260 = vshrl.u32 %v4259, 7
    %v4261 = vsub.s32 0, %v4260
    %v4262 = vrot.slane %v4252, %v4261
    %v4279 = vunpack.c.l.b16 %v4226
    %v4280 = vunpack.c.h.b16 %v4226
    %v4281 = vunpack.c.l.b16 %v4227
    %v4282 = vunpack.c.h.b16 %v4227
    %v4283 = vunpack.c.l.b16 %v4228
    %v4284 = vunpack.c.h.b16 %v4228
    %v4285 = vunpack.c.l.b16 %v4229
    %v4286 = vunpack.c.h.b16 %v4229
    %v4287 = vunpack.c.l.b16 %v4230
    %v4288 = vunpack.c.h.b16 %v4230
    %v4289 = vunpack.c.l.b16 %v4231
    %v4290 = vunpack.c.h.b16 %v4231
    %v4291 = vunpack.c.l.b16 %v4232
    %v4292 = vunpack.c.h.b16 %v4232
    %v4293 = vunpack.c.l.b16 %v4233
    %v4294 = vunpack.c.h.b16 %v4233
    %v4295 = vunpack.c.l.b16 %v4234
    %v4296 = vunpack.c.h.b16 %v4234
    %v4297 = vunpack.c.l.b16 %v4235
    %v4298 = vunpack.c.h.b16 %v4235
    %v4299 = vunpack.c.l.b16 %v4236
    %v4300 = vunpack.c.h.b16 %v4236
    %v4301 = vunpack.c.l.b16 %v4237
    %v4302 = vunpack.c.h.b16 %v4237
    %v4303 = vunpack.c.l.b16 %v4238
    %v4304 = vunpack.c.h.b16 %v4238
    %v4305 = vunpack.c.l.b16 %v4239
    %v4306 = vunpack.c.h.b16 %v4239
    %v4307 = vunpack.c.l.b16 %v4240
    %v4308 = vunpack.c.h.b16 %v4240
    %v4309 = vunpack.c.l.b16 %v4241
    %v4310 = vunpack.c.h.b16 %v4241
    %v4311 = vpack.c.b16 %v4281, %v4279
    %v4312 = vpack.c.b16 %v4282, %v4280
    %v4313 = vpack.c.b16 %v4285, %v4283
    %v4314 = vpack.c.b16 %v4286, %v4284
    %v4315 = vpack.c.b16 %v4289, %v4287
    %v4316 = vpack.c.b16 %v4290, %v4288
    %v4317 = vpack.c.b16 %v4293, %v4291
    %v4318 = vpack.c.b16 %v4294, %v4292
    %v4319 = vpack.c.b16 %v4297, %v4295
    %v4320 = vpack.c.b16 %v4298, %v4296
    %v4321 = vpack.c.b16 %v4301, %v4299
    %v4322 = vpack.c.b16 %v4302, %v4300
    %v4323 = vpack.c.b16 %v4305, %v4303
    %v4324 = vpack.c.b16 %v4306, %v4304
    %v4325 = vpack.c.b16 %v4309, %v4307
    %v4326 = vpack.c.b16 %v4310, %v4308
    %4343 = vmatprep.subr.bf16.mxu0 %v4312
    %4344 = vmatpush1.bf16.msra.mxu0 %v4311
    %4345 = vmatprep.subr.bf16.mxu0 %v4314
    %4346 = vmatpush1.bf16.msra.mxu0 %v4313
    %4347 = vmatprep.subr.bf16.mxu0 %v4316
    %4348 = vmatpush1.bf16.msra.mxu0 %v4315
    %4349 = vmatprep.subr.bf16.mxu0 %v4318
    %4350 = vmatpush1.bf16.msra.mxu0 %v4317
    %4351 = vmatprep.subr.bf16.mxu0 %v4320
    %4352 = vmatpush1.bf16.msra.mxu0 %v4319
    %4353 = vmatprep.subr.bf16.mxu0 %v4322
    %4354 = vmatpush1.bf16.msra.mxu0 %v4321
    %4355 = vmatprep.subr.bf16.mxu0 %v4324
    %4356 = vmatpush1.bf16.msra.mxu0 %v4323
    %4357 = vmatprep.subr.bf16.mxu0 %v4326
    %4358 = vmatpush1.bf16.msra.mxu0 %v4325
    %4359 = vmatprep.subr.bf16.mxu0 0
    %4360 = vmatpush1.bf16.msra.mxu0 0
    %4361 = vmatprep.subr.bf16.mxu0 0
    %4362 = vmatpush1.bf16.msra.mxu0 0
    %4363 = vmatprep.subr.bf16.mxu0 0
    %4364 = vmatpush1.bf16.msra.mxu0 0
    %4365 = vmatprep.subr.bf16.mxu0 0
    %4366 = vmatpush1.bf16.msra.mxu0 0
    %4367 = vmatprep.subr.bf16.mxu0 0
    %4368 = vmatpush1.bf16.msra.mxu0 0
    %4369 = vmatprep.subr.bf16.mxu0 0
    %4370 = vmatpush1.bf16.msra.mxu0 0
    %4371 = vmatprep.subr.bf16.mxu0 0
    %4372 = vmatpush1.bf16.msra.mxu0 0
    %4373 = vmatprep.subr.bf16.mxu0 0
    %4374 = vmatpush1.bf16.msra.mxu0 0
    %4375 = vmatprep.mubr.bf16.mxu0 0
    %4376 = vmatmul.mubr.bf16.gmra.mrb[0].mxu0 %v4025
    %v4377 = vpop.f32.mrb[0].mxu0
    %v4378 = vadd.f32 %v4258, %v4377
    %v4379 = vpop.f32.mrb[0].mxu0
    %v4380 = vadd.f32 %v4262, %v4379
    %v4381 = vpop.f32.mrb[0].mxu0
    %v4382 = vadd.f32 %v4258, %v4381
    %v4383 = vpop.f32.mrb[0].mxu0
    %v4384 = vadd.f32 %v4262, %v4383
    %4385 = vdwg.mxu0
    %v4386 = vmul.f32 %v4378, %v4378
    %v4387 = vmul.f32 %v4380, %v4380
    %v4388 = vmul.f32 %v4382, %v4382
    %v4389 = vmul.f32 %v4384, %v4384
    %v4390 = vmul.f32 %v4378, %v4386
    %v4391 = vmul.f32 %v4380, %v4387
    %v4392 = vmul.f32 %v4382, %v4388
    %v4393 = vmul.f32 %v4384, %v4389
    %v4394 = vmul.f32 %v4390, 0.044715
    %v4395 = vmul.f32 %v4391, 0.044715
    %v4396 = vmul.f32 %v4392, 0.044715
    %v4397 = vmul.f32 %v4393, 0.044715
    %v4398 = vadd.f32 %v4378, %v4394
    %v4399 = vadd.f32 %v4380, %v4395
    %v4400 = vadd.f32 %v4382, %v4396
    %v4401 = vadd.f32 %v4384, %v4397
    %v4402 = vmul.f32 %v4398, 0.7978846
    %v4403 = vmul.f32 %v4399, 0.7978846
    %v4404 = vmul.f32 %v4400, 0.7978846
    %v4405 = vmul.f32 %v4401, 0.7978846
    %v4406 = vtanh.pop %v4402
    %v4407 = vtanh.pop %v4403
    %v4408 = vtanh.pop %v4404
    %v4409 = vtanh.pop %v4405
    %v4410 = vadd.f32 %v4406, 1.0
    %v4411 = vadd.f32 %v4407, 1.0
    %v4412 = vadd.f32 %v4408, 1.0
    %v4413 = vadd.f32 %v4409, 1.0
    %v4414 = vmul.f32 %v4410, 0.5
    %v4415 = vmul.f32 %v4411, 0.5
    %v4416 = vmul.f32 %v4412, 0.5
    %v4417 = vmul.f32 %v4413, 0.5
    %v4418 = vmul.f32 %v4378, %v4414
    %v4419 = vmul.f32 %v4380, %v4415
    %v4420 = vmul.f32 %v4382, %v4416
    %v4421 = vmul.f32 %v4384, %v4417
    %v4422 = vpack.c.bf16 %v4420, %v4418
    %v4423 = vpack.c.bf16 %v4421, %v4419
    %s4424 = scalar_lea.vmem [#allocation5], 1280
    %v4425 = vld [vmem:[%s4424] sm:$0xf]
    %v4426 = vld [vmem:[%s4424 + $0x4] sm:$0xf]
    %v4427 = vld [vmem:[%s4424 + $0x8] sm:$0xf]
    %v4428 = vld [vmem:[%s4424 + $0xc] sm:$0xf]
    %v4429 = vld [vmem:[%s4424 + $0x10] sm:$0xf]
    %v4430 = vld [vmem:[%s4424 + $0x14] sm:$0xf]
    %v4431 = vld [vmem:[%s4424 + $0x18] sm:$0xf]
    %v4432 = vld [vmem:[%s4424 + $0x1c] sm:$0xf]
    %v4433 = vld [vmem:[%s4424 + $0x20] sm:$0xf]
    %v4434 = vld [vmem:[%s4424 + $0x24] sm:$0xf]
    %v4435 = vld [vmem:[%s4424 + $0x28] sm:$0xf]
    %v4436 = vld [vmem:[%s4424 + $0x2c] sm:$0xf]
    %v4437 = vld [vmem:[%s4424 + $0x30] sm:$0xf]
    %v4438 = vld [vmem:[%s4424 + $0x34] sm:$0xf]
    %v4439 = vld [vmem:[%s4424 + $0x38] sm:$0xf]
    %v4440 = vld [vmem:[%s4424 + $0x3c] sm:$0xf]
    %v4441 = vld [vmem:[%s4424 + $0x40] sm:$0xf]
    %v4442 = vld [vmem:[%s4424 + $0x44] sm:$0xf]
    %v4443 = vld [vmem:[%s4424 + $0x48] sm:$0xf]
    %v4444 = vld [vmem:[%s4424 + $0x4c] sm:$0xf]
    %v4445 = vld [vmem:[%s4424 + $0x50] sm:$0xf]
    %v4446 = vld [vmem:[%s4424 + $0x54] sm:$0xf]
    %v4447 = vld [vmem:[%s4424 + $0x58] sm:$0xf]
    %v4448 = vld [vmem:[%s4424 + $0x5c] sm:$0xf]
    %v4449 = vld [vmem:[%s4424 + $0x60] sm:$0xf]
    %v4450 = vld [vmem:[%s4424 + $0x64] sm:$0xf]
    %v4451 = vld [vmem:[%s4424 + $0x68] sm:$0xf]
    %v4452 = vld [vmem:[%s4424 + $0x6c] sm:$0xf]
    %v4453 = vld [vmem:[%s4424 + $0x70] sm:$0xf]
    %v4454 = vld [vmem:[%s4424 + $0x74] sm:$0xf]
    %v4455 = vld [vmem:[%s4424 + $0x78] sm:$0xf]
    %v4456 = vld [vmem:[%s4424 + $0x7c] sm:$0xf]
    %v4457 = vld [vmem:[%s4424 + $0x80] sm:$0xf]
    %v4458 = vld [vmem:[%s4424 + $0x84] sm:$0xf]
    %v4459 = vld [vmem:[%s4424 + $0x88] sm:$0xf]
    %v4460 = vld [vmem:[%s4424 + $0x8c] sm:$0xf]
    %v4461 = vld [vmem:[%s4424 + $0x90] sm:$0xf]
    %v4462 = vld [vmem:[%s4424 + $0x94] sm:$0xf]
    %v4463 = vld [vmem:[%s4424 + $0x98] sm:$0xf]
    %v4464 = vld [vmem:[%s4424 + $0x9c] sm:$0xf]
    %v4465 = vld [vmem:[%s4424 + $0xa0] sm:$0xf]
    %v4466 = vld [vmem:[%s4424 + $0xa4] sm:$0xf]
    %v4467 = vld [vmem:[%s4424 + $0xa8] sm:$0xf]
    %v4468 = vld [vmem:[%s4424 + $0xac] sm:$0xf]
    %v4469 = vld [vmem:[%s4424 + $0xb0] sm:$0xf]
    %v4470 = vld [vmem:[%s4424 + $0xb4] sm:$0xf]
    %v4471 = vld [vmem:[%s4424 + $0xb8] sm:$0xf]
    %v4472 = vld [vmem:[%s4424 + $0xbc] sm:$0xf]
    %v4473 = vld [vmem:[%s4424 + $0xc0] sm:$0xf]
    %v4474 = vld [vmem:[%s4424 + $0xc4] sm:$0xf]
    %v4475 = vld [vmem:[%s4424 + $0xc8] sm:$0xf]
    %v4476 = vld [vmem:[%s4424 + $0xcc] sm:$0xf]
    %v4477 = vld [vmem:[%s4424 + $0xd0] sm:$0xf]
    %v4478 = vld [vmem:[%s4424 + $0xd4] sm:$0xf]
    %v4479 = vld [vmem:[%s4424 + $0xd8] sm:$0xf]
    %v4480 = vld [vmem:[%s4424 + $0xdc] sm:$0xf]
    %v4481 = vld [vmem:[%s4424 + $0xe0] sm:$0xf]
    %v4482 = vld [vmem:[%s4424 + $0xe4] sm:$0xf]
    %v4483 = vld [vmem:[%s4424 + $0xe8] sm:$0xf]
    %v4484 = vld [vmem:[%s4424 + $0xec] sm:$0xf]
    %v4485 = vld [vmem:[%s4424 + $0xf0] sm:$0xf]
    %v4486 = vld [vmem:[%s4424 + $0xf4] sm:$0xf]
    %v4487 = vld [vmem:[%s4424 + $0xf8] sm:$0xf]
    %v4488 = vld [vmem:[%s4424 + $0xfc] sm:$0xf]
    %s4489 = scalar_lea.vmem %s4, 5
    %v4490 = vld [vmem:[%s4489] sm:$0x1]
    %v4491 = vunpack.c.l.bf16 %v4490
    %v4492 = vlaneseq
    %v4493 = vshrl.u32 %v4492, 7
    %v4494 = vsub.s32 0, %v4493
    %v4495 = vrot.slane %v4491, %v4494
    %v4560 = vunpack.c.l.b16 %v4425
    %v4561 = vunpack.c.l.b16 %v4426
    %v4562 = vunpack.c.l.b16 %v4427
    %v4563 = vunpack.c.l.b16 %v4428
    %v4564 = vunpack.c.l.b16 %v4429
    %v4565 = vunpack.c.l.b16 %v4430
    %v4566 = vunpack.c.l.b16 %v4431
    %v4567 = vunpack.c.l.b16 %v4432
    %v4568 = vunpack.c.l.b16 %v4433
    %v4569 = vunpack.c.l.b16 %v4434
    %v4570 = vunpack.c.l.b16 %v4435
    %v4571 = vunpack.c.l.b16 %v4436
    %v4572 = vunpack.c.l.b16 %v4437
    %v4573 = vunpack.c.l.b16 %v4438
    %v4574 = vunpack.c.l.b16 %v4439
    %v4575 = vunpack.c.l.b16 %v4440
    %v4576 = vunpack.c.l.b16 %v4441
    %v4577 = vunpack.c.l.b16 %v4442
    %v4578 = vunpack.c.l.b16 %v4443
    %v4579 = vunpack.c.l.b16 %v4444
    %v4580 = vunpack.c.l.b16 %v4445
    %v4581 = vunpack.c.l.b16 %v4446
    %v4582 = vunpack.c.l.b16 %v4447
    %v4583 = vunpack.c.l.b16 %v4448
    %v4584 = vunpack.c.l.b16 %v4449
    %v4585 = vunpack.c.l.b16 %v4450
    %v4586 = vunpack.c.l.b16 %v4451
    %v4587 = vunpack.c.l.b16 %v4452
    %v4588 = vunpack.c.l.b16 %v4453
    %v4589 = vunpack.c.l.b16 %v4454
    %v4590 = vunpack.c.l.b16 %v4455
    %v4591 = vunpack.c.l.b16 %v4456
    %v4592 = vunpack.c.l.b16 %v4457
    %v4593 = vunpack.c.l.b16 %v4458
    %v4594 = vunpack.c.l.b16 %v4459
    %v4595 = vunpack.c.l.b16 %v4460
    %v4596 = vunpack.c.l.b16 %v4461
    %v4597 = vunpack.c.l.b16 %v4462
    %v4598 = vunpack.c.l.b16 %v4463
    %v4599 = vunpack.c.l.b16 %v4464
    %v4600 = vunpack.c.l.b16 %v4465
    %v4601 = vunpack.c.l.b16 %v4466
    %v4602 = vunpack.c.l.b16 %v4467
    %v4603 = vunpack.c.l.b16 %v4468
    %v4604 = vunpack.c.l.b16 %v4469
    %v4605 = vunpack.c.l.b16 %v4470
    %v4606 = vunpack.c.l.b16 %v4471
    %v4607 = vunpack.c.l.b16 %v4472
    %v4608 = vunpack.c.l.b16 %v4473
    %v4609 = vunpack.c.l.b16 %v4474
    %v4610 = vunpack.c.l.b16 %v4475
    %v4611 = vunpack.c.l.b16 %v4476
    %v4612 = vunpack.c.l.b16 %v4477
    %v4613 = vunpack.c.l.b16 %v4478
    %v4614 = vunpack.c.l.b16 %v4479
    %v4615 = vunpack.c.l.b16 %v4480
    %v4616 = vunpack.c.l.b16 %v4481
    %v4617 = vunpack.c.l.b16 %v4482
    %v4618 = vunpack.c.l.b16 %v4483
    %v4619 = vunpack.c.l.b16 %v4484
    %v4620 = vunpack.c.l.b16 %v4485
    %v4621 = vunpack.c.l.b16 %v4486
    %v4622 = vunpack.c.l.b16 %v4487
    %v4623 = vunpack.c.l.b16 %v4488
    %v4624 = vpack.c.b16 %v4561, %v4560
    %v4625 = vpack.c.b16 %v4563, %v4562
    %v4626 = vpack.c.b16 %v4565, %v4564
    %v4627 = vpack.c.b16 %v4567, %v4566
    %v4628 = vpack.c.b16 %v4569, %v4568
    %v4629 = vpack.c.b16 %v4571, %v4570
    %v4630 = vpack.c.b16 %v4573, %v4572
    %v4631 = vpack.c.b16 %v4575, %v4574
    %v4632 = vpack.c.b16 %v4577, %v4576
    %v4633 = vpack.c.b16 %v4579, %v4578
    %v4634 = vpack.c.b16 %v4581, %v4580
    %v4635 = vpack.c.b16 %v4583, %v4582
    %v4636 = vpack.c.b16 %v4585, %v4584
    %v4637 = vpack.c.b16 %v4587, %v4586
    %v4638 = vpack.c.b16 %v4589, %v4588
    %v4639 = vpack.c.b16 %v4591, %v4590
    %v4640 = vpack.c.b16 %v4593, %v4592
    %v4641 = vpack.c.b16 %v4595, %v4594
    %v4642 = vpack.c.b16 %v4597, %v4596
    %v4643 = vpack.c.b16 %v4599, %v4598
    %v4644 = vpack.c.b16 %v4601, %v4600
    %v4645 = vpack.c.b16 %v4603, %v4602
    %v4646 = vpack.c.b16 %v4605, %v4604
    %v4647 = vpack.c.b16 %v4607, %v4606
    %v4648 = vpack.c.b16 %v4609, %v4608
    %v4649 = vpack.c.b16 %v4611, %v4610
    %v4650 = vpack.c.b16 %v4613, %v4612
    %v4651 = vpack.c.b16 %v4615, %v4614
    %v4652 = vpack.c.b16 %v4617, %v4616
    %v4653 = vpack.c.b16 %v4619, %v4618
    %v4654 = vpack.c.b16 %v4621, %v4620
    %v4655 = vpack.c.b16 %v4623, %v4622
    %4688 = vmatprep.subr.bf16.mxu0 0
    %4689 = vmatpush1.bf16.msra.mxu0 %v4624
    %4690 = vmatprep.subr.bf16.mxu0 0
    %4691 = vmatpush1.bf16.msra.mxu0 %v4625
    %4692 = vmatprep.subr.bf16.mxu0 0
    %4693 = vmatpush1.bf16.msra.mxu0 %v4626
    %4694 = vmatprep.subr.bf16.mxu0 0
    %4695 = vmatpush1.bf16.msra.mxu0 %v4627
    %4696 = vmatprep.subr.bf16.mxu0 0
    %4697 = vmatpush1.bf16.msra.mxu0 %v4628
    %4698 = vmatprep.subr.bf16.mxu0 0
    %4699 = vmatpush1.bf16.msra.mxu0 %v4629
    %4700 = vmatprep.subr.bf16.mxu0 0
    %4701 = vmatpush1.bf16.msra.mxu0 %v4630
    %4702 = vmatprep.subr.bf16.mxu0 0
    %4703 = vmatpush1.bf16.msra.mxu0 %v4631
    %4704 = vmatprep.subr.bf16.mxu0 0
    %4705 = vmatpush1.bf16.msra.mxu0 %v4632
    %4706 = vmatprep.subr.bf16.mxu0 0
    %4707 = vmatpush1.bf16.msra.mxu0 %v4633
    %4708 = vmatprep.subr.bf16.mxu0 0
    %4709 = vmatpush1.bf16.msra.mxu0 %v4634
    %4710 = vmatprep.subr.bf16.mxu0 0
    %4711 = vmatpush1.bf16.msra.mxu0 %v4635
    %4712 = vmatprep.subr.bf16.mxu0 0
    %4713 = vmatpush1.bf16.msra.mxu0 %v4636
    %4714 = vmatprep.subr.bf16.mxu0 0
    %4715 = vmatpush1.bf16.msra.mxu0 %v4637
    %4716 = vmatprep.subr.bf16.mxu0 0
    %4717 = vmatpush1.bf16.msra.mxu0 %v4638
    %4718 = vmatprep.subr.bf16.mxu0 0
    %4719 = vmatpush1.bf16.msra.mxu0 %v4639
    %4720 = vmatprep.mubr.bf16.mxu0 %v4225
    %4721 = vmatmul.mubr.bf16.gmra.mrb[0].mxu0 %v4224
    %v4722 = vpop.f32.mrb[0].mxu0
    %v4723 = vadd.f32 %v4495, %v4722
    %v4724 = vpop.f32.mrb[0].mxu0
    %v4725 = vpop.f32.mrb[0].mxu0
    %v4726 = vadd.f32 %v4495, %v4725
    %v4727 = vpop.f32.mrb[0].mxu0
    %4728 = vdwg.mxu0
    %4729 = vmatprep.subr.bf16.mxu0 0
    %4730 = vmatpush1.bf16.msra.mxu0 %v4640
    %4731 = vmatprep.subr.bf16.mxu0 0
    %4732 = vmatpush1.bf16.msra.mxu0 %v4641
    %4733 = vmatprep.subr.bf16.mxu0 0
    %4734 = vmatpush1.bf16.msra.mxu0 %v4642
    %4735 = vmatprep.subr.bf16.mxu0 0
    %4736 = vmatpush1.bf16.msra.mxu0 %v4643
    %4737 = vmatprep.subr.bf16.mxu0 0
    %4738 = vmatpush1.bf16.msra.mxu0 %v4644
    %4739 = vmatprep.subr.bf16.mxu0 0
    %4740 = vmatpush1.bf16.msra.mxu0 %v4645
    %4741 = vmatprep.subr.bf16.mxu0 0
    %4742 = vmatpush1.bf16.msra.mxu0 %v4646
    %4743 = vmatprep.subr.bf16.mxu0 0
    %4744 = vmatpush1.bf16.msra.mxu0 %v4647
    %4745 = vmatprep.subr.bf16.mxu0 0
    %4746 = vmatpush1.bf16.msra.mxu0 %v4648
    %4747 = vmatprep.subr.bf16.mxu0 0
    %4748 = vmatpush1.bf16.msra.mxu0 %v4649
    %4749 = vmatprep.subr.bf16.mxu0 0
    %4750 = vmatpush1.bf16.msra.mxu0 %v4650
    %4751 = vmatprep.subr.bf16.mxu0 0
    %4752 = vmatpush1.bf16.msra.mxu0 %v4651
    %4753 = vmatprep.subr.bf16.mxu0 0
    %4754 = vmatpush1.bf16.msra.mxu0 %v4652
    %4755 = vmatprep.subr.bf16.mxu0 0
    %4756 = vmatpush1.bf16.msra.mxu0 %v4653
    %4757 = vmatprep.subr.bf16.mxu0 0
    %4758 = vmatpush1.bf16.msra.mxu0 %v4654
    %4759 = vmatprep.subr.bf16.mxu0 0
    %4760 = vmatpush1.bf16.msra.mxu0 %v4655
    %4761 = vmatprep.mubr.bf16.mxu0 %v4423
    %4762 = vmatmul.mubr.bf16.gmra.mrb[0].mxu0 %v4422
    %v4763 = vpop.f32.mrb[0].mxu0
    %v4764 = vadd.f32 %v4723, %v4763
    %v4765 = vpop.f32.mrb[0].mxu0
    %v4766 = vpop.f32.mrb[0].mxu0
    %v4767 = vadd.f32 %v4726, %v4766
    %v4768 = vpop.f32.mrb[0].mxu0
    %4769 = vdwg.mxu0
    %v4770 = vadd.f32 %v4764, %v4023
    %v4771 = vadd.f32 %v4767, %v4024
    %v4772 = vpack.c.bf16 %v4771, %v4770
    %v4774 = vunpack.c.l.b16 %v4772
    %v4775 = vunpack.c.h.b16 %v4772
    %v4776 = vpack.c.b16 %v4774, %v4774
    %v4777 = vpack.c.b16 %v4775, %v4775
    %4780 = vst [vmem:[#allocation7] sm:$0xf] %v4776
    %4781 = vst [vmem:[#allocation7 + $0x4] sm:$0xf] %v4777
    // Predicated region
    $region38: #{masoa_net.1} parent=1 // pred_check
      _
    $region39: #{masoa_net.1} parent=1 // pred_check_branch
      %4783 = sbr.rel (0) target = $region41
    $region40: #{masoa_net.1} parent=1 // pred_region
      %s4785 = ssub.s32 128, 128
      %4786 = vsyncadd [#allocation4], %s4785
      %s4787 = sshll.u32 [#allocation7], 4
      %s4788 = int_to_ptr.vmem [resolvable:$true] %s4787
      %4793 = dma.vmem_to_hbm [thread:$0]  %s4788, 128, %s7, [#allocation4], 64, 64, 4
    $region41: #{masoa_net.1} parent=1 // pred_fallthru
      _
    // Predicated region
    $region42: #{masoa_net.1} parent=1 // pred_check
      _
    $region43: #{masoa_net.1} parent=1 // pred_check_branch
      %4795 = sbr.rel (0) target = $region45
    $region44: #{masoa_net.1} parent=1 // pred_region
      %4796 = dma.done [#allocation4], 128
    $region45: #{masoa_net.1} parent=1 // pred_fallthru
      _
    %4797 = vsyncpa [#allocation3], 1
    %4798 = vsyncpa [#allocation6], 1
    %4799 = vsyncpa [#allocation4], 1

</llo_original>
